<compile_context>
chip_gen: v5e
topology: v5e:2x2
jax: 0.10.0
libtpu: 0.0.40
codegen_flags: <defaults>
</compile_context>

<pallas_src>
import functools

import jax
import jax.numpy as jnp
from jax.experimental import pallas as pl
from jax.experimental.pallas import tpu as pltpu


_CP = 128                       # conv channel padding -> lane-dense (128) stores
_WP = 8                         # left pad of the W (sublane) axis -> aligned writes
_VMEM_LIMIT = 32 * 1024 * 1024  # safe on v5e/v6e (128 MiB) and v7x (64 MiB physical)


# ---------------------------------------------------------------------------
# Kernel 1: fused FC stack.  h = prelu(h @ W_i + b_i) for every layer, with the
# activation resident across layers (no HBM round trips, one launch).
# For very wide FC layers the per-layer weights would be streamed with
# pltpu.emit_pipeline instead of whole-array VMEM residency.
# ---------------------------------------------------------------------------
def _fused_fc_prelu_kernel(x_ref, alpha_ref, *refs, num_layers):
    out_ref = refs[-1]
    h = x_ref[...]                                        # (B, K0) f32
    for i in range(num_layers):
        w_ref = refs[2 * i]                               # (K_i, N_i) bf16
        b_ref = refs[2 * i + 1]                           # (1, N_i) f32
        y = jnp.dot(h.astype(jnp.bfloat16), w_ref[...],
                    preferred_element_type=jnp.float32)   # MXU, f32 accumulate
        y = y + b_ref[...]
        a = alpha_ref[i]                                  # PReLU slope (SMEM scalar)
        h = jnp.where(y > 0, y, a * y)                    # f32 epilogue (v5e-friendly)
    out_ref[...] = h.astype(out_ref.dtype)


def fused_fc_stack(x, fc_params):
    """x: (B, K0) f32; fc_params: list of (w (K,N), b (N,), alpha (1,))."""
    B = x.shape[0]
    num_layers = len(fc_params)
    alphas = jnp.concatenate(
        [jnp.reshape(a, (1,)) for (_, _, a) in fc_params]).astype(jnp.float32)
    args = [x.astype(jnp.float32), alphas]
    in_specs = [pl.BlockSpec(memory_space=pltpu.MemorySpace.VMEM),
                pl.BlockSpec(memory_space=pltpu.MemorySpace.SMEM)]
    flops = 0
    bytes_accessed = x.size * 4
    for (w, b, _) in fc_params:
        K, N = w.shape
        args.append(w.astype(jnp.bfloat16))               # weights as bf16
        args.append(b.reshape(1, N).astype(jnp.float32))
        in_specs += [pl.BlockSpec(memory_space=pltpu.MemorySpace.VMEM),
                     pl.BlockSpec(memory_space=pltpu.MemorySpace.VMEM)]
        flops += 2 * B * K * N
        bytes_accessed += K * N * 2 + N * 4
    n_out = fc_params[-1][0].shape[1]
    bytes_accessed += B * n_out * 4
    kernel = functools.partial(_fused_fc_prelu_kernel, num_layers=num_layers)
    return pl.pallas_call(
        kernel,
        out_shape=jax.ShapeDtypeStruct((B, n_out), jnp.float32),
        in_specs=in_specs,
        out_specs=pl.BlockSpec(memory_space=pltpu.MemorySpace.VMEM),
        compiler_params=pltpu.CompilerParams(vmem_limit_bytes=_VMEM_LIMIT),
        cost_estimate=pl.CostEstimate(flops=flops, transcendentals=0,
                                      bytes_accessed=bytes_accessed),
    )(*args)


# ---------------------------------------------------------------------------
# Kernel 2: fused conv stack.  Each layer: 3x3 "same" conv + ReLU, NHWC with
# channels zero-padded to _CP=128.  Spatially padded activation lives in a
# VMEM ping-pong scratch; each conv = 9 accumulating bf16 tap matmuls over
# shifted value slices of that buffer (no HBM-materialized im2col).
# ---------------------------------------------------------------------------
def _fused_conv_relu_kernel(x_ref, w_ref, b_ref, o_ref, buf_a, buf_b,
                            *, num_layers, B, H, W):
    bufs = (buf_a, buf_b)
    buf_a[...] = jnp.zeros_like(buf_a)                    # zero halo ring once
    buf_b[...] = jnp.zeros_like(buf_b)
    # Interior: rows [1, H], cols [_WP, _WP+W) -> sublane-aligned store (offset 8).
    buf_a[:, 1:H + 1, _WP:_WP + W, :] = x_ref[...]
    for layer in range(num_layers):
        xv = bufs[layer % 2][...]                         # (B, H+2, WT, CP) f32
        # Bias folded into the accumulator init (saves a full-tile add).
        acc = jnp.broadcast_to(b_ref[layer], (B * H * W, _CP))
        for kh in range(3):
            for kw in range(3):
                tap = xv[:, kh:kh + H, _WP - 1 + kw:_WP - 1 + kw + W, :]
                tap2d = tap.reshape(B * H * W, _CP).astype(jnp.bfloat16)
                acc = acc + jnp.dot(tap2d, w_ref[layer, 3 * kh + kw],
                                    preferred_element_type=jnp.float32)
        y = jnp.maximum(acc, 0.0).reshape(B, H, W, _CP)   # ReLU (f32 epilogue)
        if layer + 1 < num_layers:
            bufs[(layer + 1) % 2][:, 1:H + 1, _WP:_WP + W, :] = y
        else:
            o_ref[...] = y                                # lane-dense (last dim 128)


def fused_conv_stack(x_nhwc, conv_params):
    """x_nhwc: (B, H, W, Cin) f32; conv_params: list of (w (Cout,Cin,3,3), b (Cout,))."""
    B, H, W, c0 = x_nhwc.shape
    num_layers = len(conv_params)
    xp = jnp.pad(x_nhwc, ((0, 0), (0, 0), (0, 0), (0, _CP - c0)))
    w_list, b_list = [], []
    for (w, b) in conv_params:
        cout, cin = w.shape[0], w.shape[1]
        # tap-major (kh,kw), per-tap (cin, cout) -- matches torch Conv2d semantics.
        w9 = jnp.transpose(w, (2, 3, 1, 0)).reshape(9, cin, cout)
        w_list.append(jnp.pad(w9, ((0, 0), (0, _CP - cin), (0, _CP - cout))
                              ).astype(jnp.bfloat16))
        b_list.append(jnp.pad(b, (0, _CP - cout)).astype(jnp.float32))
    w_stack = jnp.stack(w_list)                           # (L, 9, CP, CP) bf16
    b_stack = jnp.stack(b_list).reshape(num_layers, 1, _CP)
    wt = _WP + W + 8                                      # padded sublane width
    kernel = functools.partial(_fused_conv_relu_kernel,
                               num_layers=num_layers, B=B, H=H, W=W)
    flops = 2 * num_layers * 9 * (B * H * W) * _CP * _CP
    bytes_accessed = (xp.size * 4 + w_stack.size * 2 + b_stack.size * 4
                      + B * H * W * _CP * 4)
    return pl.pallas_call(
        kernel,
        out_shape=jax.ShapeDtypeStruct((B, H, W, _CP), jnp.float32),
        in_specs=[pl.BlockSpec(memory_space=pltpu.MemorySpace.VMEM)] * 3,
        out_specs=pl.BlockSpec(memory_space=pltpu.MemorySpace.VMEM),
        scratch_shapes=[pltpu.VMEM((B, H + 2, wt, _CP), jnp.float32),
                        pltpu.VMEM((B, H + 2, wt, _CP), jnp.float32)],
        compiler_params=pltpu.CompilerParams(vmem_limit_bytes=_VMEM_LIMIT),
        cost_estimate=pl.CostEstimate(flops=flops, transcendentals=0,
                                      bytes_accessed=bytes_accessed),
    )(xp, w_stack, b_stack)


# ---------------------------------------------------------------------------
# Kernel 3: grid-tiled matmul + bias (decoder).  bf16 inputs, f32 VMEM
# accumulator, pl.when init/finalize, parallel/parallel/arbitrary semantics.
# ---------------------------------------------------------------------------
def _tiled_matmul_bias_kernel(x_ref, w_ref, b_ref, o_ref, acc_ref):
    @pl.when(pl.program_id(2) == 0)
    def _():
        acc_ref[...] = jnp.zeros_like(acc_ref)
    acc_ref[...] += jnp.dot(x_ref[...], w_ref[...],
                            preferred_element_type=jnp.float32)
    @pl.when(pl.program_id(2) == pl.num_programs(2) - 1)
    def _():
        o_ref[...] = (acc_ref[...] + b_ref[...]).astype(o_ref.dtype)


def _pick_tile(dim, candidates):
    for c in candidates:
        if dim % c == 0:
            return c
    return dim                                            # full dim fallback


def tiled_matmul_bias(x, w, b):
    """x: (M, K), w: (K, N), b: (N,) -> (M, N) f32 = x @ w + b."""
    M, K = x.shape
    K2, N = w.shape
    assert K == K2
    tm = _pick_tile(M, (256, 128, 8))
    tn = _pick_tile(N, (512, 256, 128))                   # 256-aligned on v6e/v7x
    tk = _pick_tile(K, (256, 128))
    xb = x.astype(jnp.bfloat16)
    wb = w.astype(jnp.bfloat16)
    b2 = b.reshape(1, N).astype(jnp.float32)
    grid = (M // tm, N // tn, K // tk)
    flops = 2 * M * N * K
    bytes_accessed = M * K * 2 + K * N * 2 + N * 4 + M * N * 4
    return pl.pallas_call(
        _tiled_matmul_bias_kernel,
        out_shape=jax.ShapeDtypeStruct((M, N), jnp.float32),
        grid_spec=pltpu.PrefetchScalarGridSpec(
            num_scalar_prefetch=0,
            grid=grid,
            in_specs=[pl.BlockSpec((tm, tk), lambda i, j, k: (i, k)),
                      pl.BlockSpec((tk, tn), lambda i, j, k: (k, j)),
                      pl.BlockSpec((1, tn), lambda i, j, k: (0, j))],
            out_specs=pl.BlockSpec((tm, tn), lambda i, j, k: (i, j)),
            scratch_shapes=[pltpu.VMEM((tm, tn), jnp.float32)]),
        compiler_params=pltpu.CompilerParams(
            dimension_semantics=("parallel", "parallel", "arbitrary"),
            vmem_limit_bytes=_VMEM_LIMIT),
        cost_estimate=pl.CostEstimate(flops=flops, transcendentals=0,
                                      bytes_accessed=bytes_accessed),
    )(xb, wb, b2)


# ---------------------------------------------------------------------------
# Full forward pass (mirrors DecoderArchNet.forward with return_intermediate)
# ---------------------------------------------------------------------------
def decoder_arch_net_forward(x, params, *, image_size, channel_num, channel_size):
    B = x.shape[0]
    h = x.reshape(B, -1)                                       # x.view(B, -1)
    h = fused_fc_stack(h, params["fc"])                        # Linear+PReLU stack
    h = h.reshape(B, channel_num, channel_size, channel_size)  # NCHW (torch view)
    h = jnp.transpose(h, (0, 2, 3, 1))                         # -> NHWC once
    h = fused_conv_stack(h, params["conv"])                    # (B, H, W, 128)
    c_last = params["conv"][-1][0].shape[0]
    intermediate = jnp.transpose(h[..., :c_last], (0, 3, 1, 2))   # back to NCHW
    # decoder_net (synthetic frozen linear decoder) over NCHW-order flatten
    flat = intermediate.reshape(B, -1)
    wd, bd = params["decoder"]
    out = tiled_matmul_bias(flat, wd, bd)
    return out.reshape(B, image_size, image_size), intermediate


# ---------------------------------------------------------------------------
# Deterministic parameter initialization (PyTorch-style fan-in uniform bounds)
# ---------------------------------------------------------------------------
def init_params(key, image_size, fc_layers, conv_layers, channel_num, channel_size):
    params = {"fc": [], "conv": []}
    in_size = image_size ** 2
    for out_size in fc_layers:
        key, k1, k2 = jax.random.split(key, 3)
        bound = 1.0 / (in_size ** 0.5)
        w = jax.random.uniform(k1, (in_size, out_size), jnp.float32, -bound, bound)
        b = jax.random.uniform(k2, (out_size,), jnp.float32, -bound, bound)
        alpha = jnp.array([0.25], jnp.float32)                 # nn.PReLU() default
        params["fc"].append((w, b, alpha))
        in_size = out_size

    cin = channel_num
    for cout in conv_layers:
        key, k1, k2 = jax.random.split(key, 3)
        bound = 1.0 / ((cin * 9) ** 0.5)
        w = jax.random.uniform(k1, (cout, cin, 3, 3), jnp.float32, -bound, bound)
        b = jax.random.uniform(k2, (cout,), jnp.float32, -bound, bound)
        params["conv"].append((w, b))
        cin = cout

    dec_in = cin * channel_size * channel_size
    dec_out = image_size ** 2
    key, k1, k2 = jax.random.split(key, 3)
    bound = 1.0 / (dec_in ** 0.5)
    wd = jax.random.uniform(k1, (dec_in, dec_out), jnp.float32, -bound, bound)
    bd = jax.random.uniform(k2, (dec_out,), jnp.float32, -bound, bound)
    params["decoder"] = (wd, bd)
    return params


if __name__ == "__main__":
    image_size = 16
    channel_num = 4            # encoder_net.ch_num
    channel_size = 8           # encoder_net.ch_size
    fc_layers = [128, channel_num * channel_size * channel_size]   # last fc -> (C,H,W)
    conv_layers = [8, 8]
    batch = 2

    key = jax.random.PRNGKey(0)
    kp, kx = jax.random.split(key)
    params = init_params(kp, image_size, fc_layers, conv_layers,
                         channel_num, channel_size)
    x = jax.random.normal(kx, (batch, 1, image_size, image_size), jnp.float32)

    fwd = jax.jit(functools.partial(decoder_arch_net_forward,
                                    image_size=image_size,
                                    channel_num=channel_num,
                                    channel_size=channel_size))
    out, intermediate = fwd(x, params)
    out = jax.block_until_ready(out)
    intermediate = jax.block_until_ready(intermediate)

    assert out.shape == (batch, image_size, image_size)
    assert intermediate.shape == (batch, conv_layers[-1], channel_size, channel_size)
    assert bool(jnp.all(jnp.isfinite(out)))
    assert bool(jnp.all(jnp.isfinite(intermediate)))
    print("KERNEL_OK")
</pallas_src>

<mosaic_0001>
module attributes {stable_mosaic.version = 11 : i64} {
  func.func @_fused_fc_prelu_kernel(%arg0: memref<2x256xf32, #tpu.memory_space<vmem>>, %arg1: memref<2xf32, #tpu.memory_space<smem>>, %arg2: memref<256x128xbf16, #tpu.memory_space<vmem>>, %arg3: memref<1x128xf32, #tpu.memory_space<vmem>>, %arg4: memref<128x256xbf16, #tpu.memory_space<vmem>>, %arg5: memref<1x256xf32, #tpu.memory_space<vmem>>, %arg6: memref<2x256xf32, #tpu.memory_space<vmem>>) attributes {dimension_semantics = [], scalar_prefetch = 0 : i64, scratch_operands = 0 : i64, tpu.core_type = #tpu.core_type<tc>} {
    %c0 = arith.constant 0 : index
    %c0_0 = arith.constant 0 : index
    %0 = vector.load %arg0[%c0, %c0_0] : memref<2x256xf32, #tpu.memory_space<vmem>>, vector<2x256xf32>
    %1 = arith.truncf %0 : vector<2x256xf32> to vector<2x256xbf16>
    %c0_1 = arith.constant 0 : index
    %c0_2 = arith.constant 0 : index
    %2 = vector.load %arg2[%c0_1, %c0_2] : memref<256x128xbf16, #tpu.memory_space<vmem>>, vector<256x128xbf16>
    %cst = arith.constant dense<0.000000e+00> : vector<2x128xf32>
    %3 = tpu.matmul %1, %2, %cst {dimension_numbers = #tpu.dot_dimension_numbers<[1], [0], [0], [1], [0, 0, 1, 1], [], []>} : vector<2x256xbf16>, vector<256x128xbf16>, vector<2x128xf32> -> vector<2x128xf32>
    %c0_3 = arith.constant 0 : index
    %c0_4 = arith.constant 0 : index
    %4 = vector.load %arg3[%c0_3, %c0_4] : memref<1x128xf32, #tpu.memory_space<vmem>>, vector<1x128xf32>
    %5 = vector.broadcast %4 : vector<1x128xf32> to vector<2x128xf32>
    %6 = arith.addf %3, %5 : vector<2x128xf32>
    %c0_5 = arith.constant 0 : index
    %7 = memref.load %arg1[%c0_5] : memref<2xf32, #tpu.memory_space<smem>>
    %cst_6 = arith.constant 0.000000e+00 : f32
    %8 = vector.broadcast %cst_6 : f32 to vector<2x128xf32>
    %9 = arith.cmpf ogt, %6, %8 : vector<2x128xf32>
    %10 = vector.broadcast %7 : f32 to vector<2x128xf32>
    %11 = arith.mulf %10, %6 : vector<2x128xf32>
    %12 = arith.select %9, %6, %11 : vector<2x128xi1>, vector<2x128xf32>
    %13 = arith.truncf %12 : vector<2x128xf32> to vector<2x128xbf16>
    %c0_7 = arith.constant 0 : index
    %c0_8 = arith.constant 0 : index
    %14 = vector.load %arg4[%c0_7, %c0_8] : memref<128x256xbf16, #tpu.memory_space<vmem>>, vector<128x256xbf16>
    %cst_9 = arith.constant dense<0.000000e+00> : vector<2x256xf32>
    %15 = tpu.matmul %13, %14, %cst_9 {dimension_numbers = #tpu.dot_dimension_numbers<[1], [0], [0], [1], [0, 0, 1, 1], [], []>} : vector<2x128xbf16>, vector<128x256xbf16>, vector<2x256xf32> -> vector<2x256xf32>
    %c0_10 = arith.constant 0 : index
    %c0_11 = arith.constant 0 : index
    %16 = vector.load %arg5[%c0_10, %c0_11] : memref<1x256xf32, #tpu.memory_space<vmem>>, vector<1x256xf32>
    %17 = vector.broadcast %16 : vector<1x256xf32> to vector<2x256xf32>
    %18 = arith.addf %15, %17 : vector<2x256xf32>
    %c1 = arith.constant 1 : index
    %19 = memref.load %arg1[%c1] : memref<2xf32, #tpu.memory_space<smem>>
    %cst_12 = arith.constant 0.000000e+00 : f32
    %20 = vector.broadcast %cst_12 : f32 to vector<2x256xf32>
    %21 = arith.cmpf ogt, %18, %20 : vector<2x256xf32>
    %22 = vector.broadcast %19 : f32 to vector<2x256xf32>
    %23 = arith.mulf %22, %18 : vector<2x256xf32>
    %24 = arith.select %21, %18, %23 : vector<2x256xi1>, vector<2x256xf32>
    %c0_13 = arith.constant 0 : index
    %c0_14 = arith.constant 0 : index
    %25 = vector.load %arg6[%c0_13, %c0_14] : memref<2x256xf32, #tpu.memory_space<vmem>>, vector<2x256xf32>
    tpu.vector_store %arg6[%c0_13, %c0_14], %24 {strides = array<i32>} : memref<2x256xf32, #tpu.memory_space<vmem>>, vector<2x256xf32>,
    return
  }
}

module attributes {stable_mosaic.version = 11 : i64} {
  func.func @_fused_conv_relu_kernel(%arg0: memref<2x8x8x128xf32, #tpu.memory_space<vmem>>, %arg1: memref<2x9x128x128xbf16, #tpu.memory_space<vmem>>, %arg2: memref<2x1x128xf32, #tpu.memory_space<vmem>>, %arg3: memref<2x8x8x128xf32, #tpu.memory_space<vmem>>, %arg4: memref<2x10x24x128xf32, #tpu.memory_space<vmem>>, %arg5: memref<2x10x24x128xf32, #tpu.memory_space<vmem>>) attributes {dimension_semantics = [], scalar_prefetch = 0 : i64, scratch_operands = 2 : i64, tpu.core_type = #tpu.core_type<tc>} {
    %cst = arith.constant 0.000000e+00 : f32
    %0 = vector.broadcast %cst : f32 to vector<2x10x24x128xf32>
    %c0 = arith.constant 0 : index
    %c0_0 = arith.constant 0 : index
    %c0_1 = arith.constant 0 : index
    %c0_2 = arith.constant 0 : index
    %1 = vector.load %arg4[%c0, %c0_0, %c0_1, %c0_2] : memref<2x10x24x128xf32, #tpu.memory_space<vmem>>, vector<2x10x24x128xf32>
    tpu.vector_store %arg4[%c0, %c0_0, %c0_1, %c0_2], %0 {strides = array<i32>} : memref<2x10x24x128xf32, #tpu.memory_space<vmem>>, vector<2x10x24x128xf32>,
    %cst_3 = arith.constant 0.000000e+00 : f32
    %2 = vector.broadcast %cst_3 : f32 to vector<2x10x24x128xf32>
    %c0_4 = arith.constant 0 : index
    %c0_5 = arith.constant 0 : index
    %c0_6 = arith.constant 0 : index
    %c0_7 = arith.constant 0 : index
    %3 = vector.load %arg5[%c0_4, %c0_5, %c0_6, %c0_7] : memref<2x10x24x128xf32, #tpu.memory_space<vmem>>, vector<2x10x24x128xf32>
    tpu.vector_store %arg5[%c0_4, %c0_5, %c0_6, %c0_7], %2 {strides = array<i32>} : memref<2x10x24x128xf32, #tpu.memory_space<vmem>>, vector<2x10x24x128xf32>,
    %c0_8 = arith.constant 0 : index
    %c0_9 = arith.constant 0 : index
    %c0_10 = arith.constant 0 : index
    %c0_11 = arith.constant 0 : index
    %4 = vector.load %arg0[%c0_8, %c0_9, %c0_10, %c0_11] : memref<2x8x8x128xf32, #tpu.memory_space<vmem>>, vector<2x8x8x128xf32>
    %c0_12 = arith.constant 0 : index
    %c1 = arith.constant 1 : index
    %c8 = arith.constant 8 : index
    %c0_13 = arith.constant 0 : index
    %5 = vector.load %arg4[%c0_12, %c1, %c8, %c0_13] : memref<2x10x24x128xf32, #tpu.memory_space<vmem>>, vector<2x8x8x128xf32>
    tpu.vector_store %arg4[%c0_12, %c1, %c8, %c0_13], %4 {strides = array<i32>} : memref<2x10x24x128xf32, #tpu.memory_space<vmem>>, vector<2x8x8x128xf32>,
    %c0_14 = arith.constant 0 : index
    %c0_15 = arith.constant 0 : index
    %c0_16 = arith.constant 0 : index
    %c0_17 = arith.constant 0 : index
    %6 = vector.load %arg4[%c0_14, %c0_15, %c0_16, %c0_17] : memref<2x10x24x128xf32, #tpu.memory_space<vmem>>, vector<2x10x24x128xf32>
    %c0_18 = arith.constant 0 : index
    %c0_19 = arith.constant 0 : index
    %c0_20 = arith.constant 0 : index
    %7 = vector.load %arg2[%c0_18, %c0_19, %c0_20] : memref<2x1x128xf32, #tpu.memory_space<vmem>>, vector<1x1x128xf32>
    %8 = vector.shape_cast %7 : vector<1x1x128xf32> to vector<1x128xf32>
    %9 = vector.shape_cast %8 : vector<1x128xf32> to vector<1x128xf32>
    %10 = vector.broadcast %9 : vector<1x128xf32> to vector<128x128xf32>
    %11 = vector.extract_strided_slice %6 {offsets = [0, 0, 7, 0], sizes = [2, 8, 8, 128], strides = [1, 1, 1, 1]} : vector<2x10x24x128xf32> to vector<2x8x8x128xf32>
    %12 = vector.shape_cast %11 : vector<2x8x8x128xf32> to vector<128x128xf32>
    %13 = arith.truncf %12 : vector<128x128xf32> to vector<128x128xbf16>
    %c0_21 = arith.constant 0 : index
    %c0_22 = arith.constant 0 : index
    %c0_23 = arith.constant 0 : index
    %c0_24 = arith.constant 0 : index
    %14 = vector.load %arg1[%c0_21, %c0_22, %c0_23, %c0_24] : memref<2x9x128x128xbf16, #tpu.memory_space<vmem>>, vector<1x1x128x128xbf16>
    %15 = vector.shape_cast %14 : vector<1x1x128x128xbf16> to vector<128x128xbf16>
    %cst_25 = arith.constant dense<0.000000e+00> : vector<128x128xf32>
    %16 = tpu.matmul %13, %15, %cst_25 {dimension_numbers = #tpu.dot_dimension_numbers<[1], [0], [0], [1], [0, 0, 1, 1], [], []>} : vector<128x128xbf16>, vector<128x128xbf16>, vector<128x128xf32> -> vector<128x128xf32>
    %17 = arith.addf %10, %16 : vector<128x128xf32>
    %18 = vector.extract_strided_slice %6 {offsets = [0, 0, 8, 0], sizes = [2, 8, 8, 128], strides = [1, 1, 1, 1]} : vector<2x10x24x128xf32> to vector<2x8x8x128xf32>
    %19 = vector.shape_cast %18 : vector<2x8x8x128xf32> to vector<128x128xf32>
    %20 = arith.truncf %19 : vector<128x128xf32> to vector<128x128xbf16>
    %c0_26 = arith.constant 0 : index
    %c1_27 = arith.constant 1 : index
    %c0_28 = arith.constant 0 : index
    %c0_29 = arith.constant 0 : index
    %21 = vector.load %arg1[%c0_26, %c1_27, %c0_28, %c0_29] : memref<2x9x128x128xbf16, #tpu.memory_space<vmem>>, vector<1x1x128x128xbf16>
    %22 = vector.shape_cast %21 : vector<1x1x128x128xbf16> to vector<128x128xbf16>
    %cst_30 = arith.constant dense<0.000000e+00> : vector<128x128xf32>
    %23 = tpu.matmul %20, %22, %cst_30 {dimension_numbers = #tpu.dot_dimension_numbers<[1], [0], [0], [1], [0, 0, 1, 1], [], []>} : vector<128x128xbf16>, vector<128x128xbf16>, vector<128x128xf32> -> vector<128x128xf32>
    %24 = arith.addf %17, %23 : vector<128x128xf32>
    %25 = vector.extract_strided_slice %6 {offsets = [0, 0, 9, 0], sizes = [2, 8, 8, 128], strides = [1, 1, 1, 1]} : vector<2x10x24x128xf32> to vector<2x8x8x128xf32>
    %26 = vector.shape_cast %25 : vector<2x8x8x128xf32> to vector<128x128xf32>
    %27 = arith.truncf %26 : vector<128x128xf32> to vector<128x128xbf16>
    %c0_31 = arith.constant 0 : index
    %c2 = arith.constant 2 : index
    %c0_32 = arith.constant 0 : index
    %c0_33 = arith.constant 0 : index
    %28 = vector.load %arg1[%c0_31, %c2, %c0_32, %c0_33] : memref<2x9x128x128xbf16, #tpu.memory_space<vmem>>, vector<1x1x128x128xbf16>
    %29 = vector.shape_cast %28 : vector<1x1x128x128xbf16> to vector<128x128xbf16>
    %cst_34 = arith.constant dense<0.000000e+00> : vector<128x128xf32>
    %30 = tpu.matmul %27, %29, %cst_34 {dimension_numbers = #tpu.dot_dimension_numbers<[1], [0], [0], [1], [0, 0, 1, 1], [], []>} : vector<128x128xbf16>, vector<128x128xbf16>, vector<128x128xf32> -> vector<128x128xf32>
    %31 = arith.addf %24, %30 : vector<128x128xf32>
    %32 = vector.extract_strided_slice %6 {offsets = [0, 1, 7, 0], sizes = [2, 8, 8, 128], strides = [1, 1, 1, 1]} : vector<2x10x24x128xf32> to vector<2x8x8x128xf32>
    %33 = vector.shape_cast %32 : vector<2x8x8x128xf32> to vector<128x128xf32>
    %34 = arith.truncf %33 : vector<128x128xf32> to vector<128x128xbf16>
    %c0_35 = arith.constant 0 : index
    %c3 = arith.constant 3 : index
    %c0_36 = arith.constant 0 : index
    %c0_37 = arith.constant 0 : index
    %35 = vector.load %arg1[%c0_35, %c3, %c0_36, %c0_37] : memref<2x9x128x128xbf16, #tpu.memory_space<vmem>>, vector<1x1x128x128xbf16>
    %36 = vector.shape_cast %35 : vector<1x1x128x128xbf16> to vector<128x128xbf16>
    %cst_38 = arith.constant dense<0.000000e+00> : vector<128x128xf32>
    %37 = tpu.matmul %34, %36, %cst_38 {dimension_numbers = #tpu.dot_dimension_numbers<[1], [0], [0], [1], [0, 0, 1, 1], [], []>} : vector<128x128xbf16>, vector<128x128xbf16>, vector<128x128xf32> -> vector<128x128xf32>
    %38 = arith.addf %31, %37 : vector<128x128xf32>
    %39 = vector.extract_strided_slice %6 {offsets = [0, 1, 8, 0], sizes = [2, 8, 8, 128], strides = [1, 1, 1, 1]} : vector<2x10x24x128xf32> to vector<2x8x8x128xf32>
    %40 = vector.shape_cast %39 : vector<2x8x8x128xf32> to vector<128x128xf32>
    %41 = arith.truncf %40 : vector<128x128xf32> to vector<128x128xbf16>
    %c0_39 = arith.constant 0 : index
    %c4 = arith.constant 4 : index
    %c0_40 = arith.constant 0 : index
    %c0_41 = arith.constant 0 : index
    %42 = vector.load %arg1[%c0_39, %c4, %c0_40, %c0_41] : memref<2x9x128x128xbf16, #tpu.memory_space<vmem>>, vector<1x1x128x128xbf16>
    %43 = vector.shape_cast %42 : vector<1x1x128x128xbf16> to vector<128x128xbf16>
    %cst_42 = arith.constant dense<0.000000e+00> : vector<128x128xf32>
    %44 = tpu.matmul %41, %43, %cst_42 {dimension_numbers = #tpu.dot_dimension_numbers<[1], [0], [0], [1], [0, 0, 1, 1], [], []>} : vector<128x128xbf16>, vector<128x128xbf16>, vector<128x128xf32> -> vector<128x128xf32>
    %45 = arith.addf %38, %44 : vector<128x128xf32>
    %46 = vector.extract_strided_slice %6 {offsets = [0, 1, 9, 0], sizes = [2, 8, 8, 128], strides = [1, 1, 1, 1]} : vector<2x10x24x128xf32> to vector<2x8x8x128xf32>
    %47 = vector.shape_cast %46 : vector<2x8x8x128xf32> to vector<128x128xf32>
    %48 = arith.truncf %47 : vector<128x128xf32> to vector<128x128xbf16>
    %c0_43 = arith.constant 0 : index
    %c5 = arith.constant 5 : index
    %c0_44 = arith.constant 0 : index
    %c0_45 = arith.constant 0 : index
    %49 = vector.load %arg1[%c0_43, %c5, %c0_44, %c0_45] : memref<2x9x128x128xbf16, #tpu.memory_space<vmem>>, vector<1x1x128x128xbf16>
    %50 = vector.shape_cast %49 : vector<1x1x128x128xbf16> to vector<128x128xbf16>
    %cst_46 = arith.constant dense<0.000000e+00> : vector<128x128xf32>
    %51 = tpu.matmul %48, %50, %cst_46 {dimension_numbers = #tpu.dot_dimension_numbers<[1], [0], [0], [1], [0, 0, 1, 1], [], []>} : vector<128x128xbf16>, vector<128x128xbf16>, vector<128x128xf32> -> vector<128x128xf32>
    %52 = arith.addf %45, %51 : vector<128x128xf32>
    %53 = vector.extract_strided_slice %6 {offsets = [0, 2, 7, 0], sizes = [2, 8, 8, 128], strides = [1, 1, 1, 1]} : vector<2x10x24x128xf32> to vector<2x8x8x128xf32>
    %54 = vector.shape_cast %53 : vector<2x8x8x128xf32> to vector<128x128xf32>
    %55 = arith.truncf %54 : vector<128x128xf32> to vector<128x128xbf16>
    %c0_47 = arith.constant 0 : index
    %c6 = arith.constant 6 : index
    %c0_48 = arith.constant 0 : index
    %c0_49 = arith.constant 0 : index
    %56 = vector.load %arg1[%c0_47, %c6, %c0_48, %c0_49] : memref<2x9x128x128xbf16, #tpu.memory_space<vmem>>, vector<1x1x128x128xbf16>
    %57 = vector.shape_cast %56 : vector<1x1x128x128xbf16> to vector<128x128xbf16>
    %cst_50 = arith.constant dense<0.000000e+00> : vector<128x128xf32>
    %58 = tpu.matmul %55, %57, %cst_50 {dimension_numbers = #tpu.dot_dimension_numbers<[1], [0], [0], [1], [0, 0, 1, 1], [], []>} : vector<128x128xbf16>, vector<128x128xbf16>, vector<128x128xf32> -> vector<128x128xf32>
    %59 = arith.addf %52, %58 : vector<128x128xf32>
    %60 = vector.extract_strided_slice %6 {offsets = [0, 2, 8, 0], sizes = [2, 8, 8, 128], strides = [1, 1, 1, 1]} : vector<2x10x24x128xf32> to vector<2x8x8x128xf32>
    %61 = vector.shape_cast %60 : vector<2x8x8x128xf32> to vector<128x128xf32>
    %62 = arith.truncf %61 : vector<128x128xf32> to vector<128x128xbf16>
    %c0_51 = arith.constant 0 : index
    %c7 = arith.constant 7 : index
    %c0_52 = arith.constant 0 : index
    %c0_53 = arith.constant 0 : index
    %63 = vector.load %arg1[%c0_51, %c7, %c0_52, %c0_53] : memref<2x9x128x128xbf16, #tpu.memory_space<vmem>>, vector<1x1x128x128xbf16>
    %64 = vector.shape_cast %63 : vector<1x1x128x128xbf16> to vector<128x128xbf16>
    %cst_54 = arith.constant dense<0.000000e+00> : vector<128x128xf32>
    %65 = tpu.matmul %62, %64, %cst_54 {dimension_numbers = #tpu.dot_dimension_numbers<[1], [0], [0], [1], [0, 0, 1, 1], [], []>} : vector<128x128xbf16>, vector<128x128xbf16>, vector<128x128xf32> -> vector<128x128xf32>
    %66 = arith.addf %59, %65 : vector<128x128xf32>
    %67 = vector.extract_strided_slice %6 {offsets = [0, 2, 9, 0], sizes = [2, 8, 8, 128], strides = [1, 1, 1, 1]} : vector<2x10x24x128xf32> to vector<2x8x8x128xf32>
    %68 = vector.shape_cast %67 : vector<2x8x8x128xf32> to vector<128x128xf32>
    %69 = arith.truncf %68 : vector<128x128xf32> to vector<128x128xbf16>
    %c0_55 = arith.constant 0 : index
    %c8_56 = arith.constant 8 : index
    %c0_57 = arith.constant 0 : index
    %c0_58 = arith.constant 0 : index
    %70 = vector.load %arg1[%c0_55, %c8_56, %c0_57, %c0_58] : memref<2x9x128x128xbf16, #tpu.memory_space<vmem>>, vector<1x1x128x128xbf16>
    %71 = vector.shape_cast %70 : vector<1x1x128x128xbf16> to vector<128x128xbf16>
    %cst_59 = arith.constant dense<0.000000e+00> : vector<128x128xf32>
    %72 = tpu.matmul %69, %71, %cst_59 {dimension_numbers = #tpu.dot_dimension_numbers<[1], [0], [0], [1], [0, 0, 1, 1], [], []>} : vector<128x128xbf16>, vector<128x128xbf16>, vector<128x128xf32> -> vector<128x128xf32>
    %73 = arith.addf %66, %72 : vector<128x128xf32>
    %cst_60 = arith.constant 0.000000e+00 : f32
    %74 = vector.broadcast %cst_60 : f32 to vector<128x128xf32>
    %75 = arith.maximumf %73, %74 : vector<128x128xf32>
    %76 = vector.shape_cast %75 : vector<128x128xf32> to vector<2x8x8x128xf32>
    %c0_61 = arith.constant 0 : index
    %c1_62 = arith.constant 1 : index
    %c8_63 = arith.constant 8 : index
    %c0_64 = arith.constant 0 : index
    %77 = vector.load %arg5[%c0_61, %c1_62, %c8_63, %c0_64] : memref<2x10x24x128xf32, #tpu.memory_space<vmem>>, vector<2x8x8x128xf32>
    tpu.vector_store %arg5[%c0_61, %c1_62, %c8_63, %c0_64], %76 {strides = array<i32>} : memref<2x10x24x128xf32, #tpu.memory_space<vmem>>, vector<2x8x8x128xf32>,
    %c0_65 = arith.constant 0 : index
    %c0_66 = arith.constant 0 : index
    %c0_67 = arith.constant 0 : index
    %c0_68 = arith.constant 0 : index
    %78 = vector.load %arg5[%c0_65, %c0_66, %c0_67, %c0_68] : memref<2x10x24x128xf32, #tpu.memory_space<vmem>>, vector<2x10x24x128xf32>
    %c1_69 = arith.constant 1 : index
    %c0_70 = arith.constant 0 : index
    %c0_71 = arith.constant 0 : index
    %79 = vector.load %arg2[%c1_69, %c0_70, %c0_71] : memref<2x1x128xf32, #tpu.memory_space<vmem>>, vector<1x1x128xf32>
    %80 = vector.shape_cast %79 : vector<1x1x128xf32> to vector<1x128xf32>
    %81 = vector.shape_cast %80 : vector<1x128xf32> to vector<1x128xf32>
    %82 = vector.broadcast %81 : vector<1x128xf32> to vector<128x128xf32>
    %83 = vector.extract_strided_slice %78 {offsets = [0, 0, 7, 0], sizes = [2, 8, 8, 128], strides = [1, 1, 1, 1]} : vector<2x10x24x128xf32> to vector<2x8x8x128xf32>
    %84 = vector.shape_cast %83 : vector<2x8x8x128xf32> to vector<128x128xf32>
    %85 = arith.truncf %84 : vector<128x128xf32> to vector<128x128xbf16>
    %c1_72 = arith.constant 1 : index
    %c0_73 = arith.constant 0 : index
    %c0_74 = arith.constant 0 : index
    %c0_75 = arith.constant 0 : index
    %86 = vector.load %arg1[%c1_72, %c0_73, %c0_74, %c0_75] : memref<2x9x128x128xbf16, #tpu.memory_space<vmem>>, vector<1x1x128x128xbf16>
    %87 = vector.shape_cast %86 : vector<1x1x128x128xbf16> to vector<128x128xbf16>
    %cst_76 = arith.constant dense<0.000000e+00> : vector<128x128xf32>
    %88 = tpu.matmul %85, %87, %cst_76 {dimension_numbers = #tpu.dot_dimension_numbers<[1], [0], [0], [1], [0, 0, 1, 1], [], []>} : vector<128x128xbf16>, vector<128x128xbf16>, vector<128x128xf32> -> vector<128x128xf32>
    %89 = arith.addf %82, %88 : vector<128x128xf32>
    %90 = vector.extract_strided_slice %78 {offsets = [0, 0, 8, 0], sizes = [2, 8, 8, 128], strides = [1, 1, 1, 1]} : vector<2x10x24x128xf32> to vector<2x8x8x128xf32>
    %91 = vector.shape_cast %90 : vector<2x8x8x128xf32> to vector<128x128xf32>
    %92 = arith.truncf %91 : vector<128x128xf32> to vector<128x128xbf16>
    %c1_77 = arith.constant 1 : index
    %c1_78 = arith.constant 1 : index
    %c0_79 = arith.constant 0 : index
    %c0_80 = arith.constant 0 : index
    %93 = vector.load %arg1[%c1_77, %c1_78, %c0_79, %c0_80] : memref<2x9x128x128xbf16, #tpu.memory_space<vmem>>, vector<1x1x128x128xbf16>
    %94 = vector.shape_cast %93 : vector<1x1x128x128xbf16> to vector<128x128xbf16>
    %cst_81 = arith.constant dense<0.000000e+00> : vector<128x128xf32>
    %95 = tpu.matmul %92, %94, %cst_81 {dimension_numbers = #tpu.dot_dimension_numbers<[1], [0], [0], [1], [0, 0, 1, 1], [], []>} : vector<128x128xbf16>, vector<128x128xbf16>, vector<128x128xf32> -> vector<128x128xf32>
    %96 = arith.addf %89, %95 : vector<128x128xf32>
    %97 = vector.extract_strided_slice %78 {offsets = [0, 0, 9, 0], sizes = [2, 8, 8, 128], strides = [1, 1, 1, 1]} : vector<2x10x24x128xf32> to vector<2x8x8x128xf32>
    %98 = vector.shape_cast %97 : vector<2x8x8x128xf32> to vector<128x128xf32>
    %99 = arith.truncf %98 : vector<128x128xf32> to vector<128x128xbf16>
    %c1_82 = arith.constant 1 : index
    %c2_83 = arith.constant 2 : index
    %c0_84 = arith.constant 0 : index
    %c0_85 = arith.constant 0 : index
    %100 = vector.load %arg1[%c1_82, %c2_83, %c0_84, %c0_85] : memref<2x9x128x128xbf16, #tpu.memory_space<vmem>>, vector<1x1x128x128xbf16>
    %101 = vector.shape_cast %100 : vector<1x1x128x128xbf16> to vector<128x128xbf16>
    %cst_86 = arith.constant dense<0.000000e+00> : vector<128x128xf32>
    %102 = tpu.matmul %99, %101, %cst_86 {dimension_numbers = #tpu.dot_dimension_numbers<[1], [0], [0], [1], [0, 0, 1, 1], [], []>} : vector<128x128xbf16>, vector<128x128xbf16>, vector<128x128xf32> -> vector<128x128xf32>
    %103 = arith.addf %96, %102 : vector<128x128xf32>
    %104 = vector.extract_strided_slice %78 {offsets = [0, 1, 7, 0], sizes = [2, 8, 8, 128], strides = [1, 1, 1, 1]} : vector<2x10x24x128xf32> to vector<2x8x8x128xf32>
    %105 = vector.shape_cast %104 : vector<2x8x8x128xf32> to vector<128x128xf32>
    %106 = arith.truncf %105 : vector<128x128xf32> to vector<128x128xbf16>
    %c1_87 = arith.constant 1 : index
    %c3_88 = arith.constant 3 : index
    %c0_89 = arith.constant 0 : index
    %c0_90 = arith.constant 0 : index
    %107 = vector.load %arg1[%c1_87, %c3_88, %c0_89, %c0_90] : memref<2x9x128x128xbf16, #tpu.memory_space<vmem>>, vector<1x1x128x128xbf16>
    %108 = vector.shape_cast %107 : vector<1x1x128x128xbf16> to vector<128x128xbf16>
    %cst_91 = arith.constant dense<0.000000e+00> : vector<128x128xf32>
    %109 = tpu.matmul %106, %108, %cst_91 {dimension_numbers = #tpu.dot_dimension_numbers<[1], [0], [0], [1], [0, 0, 1, 1], [], []>} : vector<128x128xbf16>, vector<128x128xbf16>, vector<128x128xf32> -> vector<128x128xf32>
    %110 = arith.addf %103, %109 : vector<128x128xf32>
    %111 = vector.extract_strided_slice %78 {offsets = [0, 1, 8, 0], sizes = [2, 8, 8, 128], strides = [1, 1, 1, 1]} : vector<2x10x24x128xf32> to vector<2x8x8x128xf32>
    %112 = vector.shape_cast %111 : vector<2x8x8x128xf32> to vector<128x128xf32>
    %113 = arith.truncf %112 : vector<128x128xf32> to vector<128x128xbf16>
    %c1_92 = arith.constant 1 : index
    %c4_93 = arith.constant 4 : index
    %c0_94 = arith.constant 0 : index
    %c0_95 = arith.constant 0 : index
    %114 = vector.load %arg1[%c1_92, %c4_93, %c0_94, %c0_95] : memref<2x9x128x128xbf16, #tpu.memory_space<vmem>>, vector<1x1x128x128xbf16>
    %115 = vector.shape_cast %114 : vector<1x1x128x128xbf16> to vector<128x128xbf16>
    %cst_96 = arith.constant dense<0.000000e+00> : vector<128x128xf32>
    %116 = tpu.matmul %113, %115, %cst_96 {dimension_numbers = #tpu.dot_dimension_numbers<[1], [0], [0], [1], [0, 0, 1, 1], [], []>} : vector<128x128xbf16>, vector<128x128xbf16>, vector<128x128xf32> -> vector<128x128xf32>
    %117 = arith.addf %110, %116 : vector<128x128xf32>
    %118 = vector.extract_strided_slice %78 {offsets = [0, 1, 9, 0], sizes = [2, 8, 8, 128], strides = [1, 1, 1, 1]} : vector<2x10x24x128xf32> to vector<2x8x8x128xf32>
    %119 = vector.shape_cast %118 : vector<2x8x8x128xf32> to vector<128x128xf32>
    %120 = arith.truncf %119 : vector<128x128xf32> to vector<128x128xbf16>
    %c1_97 = arith.constant 1 : index
    %c5_98 = arith.constant 5 : index
    %c0_99 = arith.constant 0 : index
    %c0_100 = arith.constant 0 : index
    %121 = vector.load %arg1[%c1_97, %c5_98, %c0_99, %c0_100] : memref<2x9x128x128xbf16, #tpu.memory_space<vmem>>, vector<1x1x128x128xbf16>
    %122 = vector.shape_cast %121 : vector<1x1x128x128xbf16> to vector<128x128xbf16>
    %cst_101 = arith.constant dense<0.000000e+00> : vector<128x128xf32>
    %123 = tpu.matmul %120, %122, %cst_101 {dimension_numbers = #tpu.dot_dimension_numbers<[1], [0], [0], [1], [0, 0, 1, 1], [], []>} : vector<128x128xbf16>, vector<128x128xbf16>, vector<128x128xf32> -> vector<128x128xf32>
    %124 = arith.addf %117, %123 : vector<128x128xf32>
    %125 = vector.extract_strided_slice %78 {offsets = [0, 2, 7, 0], sizes = [2, 8, 8, 128], strides = [1, 1, 1, 1]} : vector<2x10x24x128xf32> to vector<2x8x8x128xf32>
    %126 = vector.shape_cast %125 : vector<2x8x8x128xf32> to vector<128x128xf32>
    %127 = arith.truncf %126 : vector<128x128xf32> to vector<128x128xbf16>
    %c1_102 = arith.constant 1 : index
    %c6_103 = arith.constant 6 : index
    %c0_104 = arith.constant 0 : index
    %c0_105 = arith.constant 0 : index
    %128 = vector.load %arg1[%c1_102, %c6_103, %c0_104, %c0_105] : memref<2x9x128x128xbf16, #tpu.memory_space<vmem>>, vector<1x1x128x128xbf16>
    %129 = vector.shape_cast %128 : vector<1x1x128x128xbf16> to vector<128x128xbf16>
    %cst_106 = arith.constant dense<0.000000e+00> : vector<128x128xf32>
    %130 = tpu.matmul %127, %129, %cst_106 {dimension_numbers = #tpu.dot_dimension_numbers<[1], [0], [0], [1], [0, 0, 1, 1], [], []>} : vector<128x128xbf16>, vector<128x128xbf16>, vector<128x128xf32> -> vector<128x128xf32>
    %131 = arith.addf %124, %130 : vector<128x128xf32>
    %132 = vector.extract_strided_slice %78 {offsets = [0, 2, 8, 0], sizes = [2, 8, 8, 128], strides = [1, 1, 1, 1]} : vector<2x10x24x128xf32> to vector<2x8x8x128xf32>
    %133 = vector.shape_cast %132 : vector<2x8x8x128xf32> to vector<128x128xf32>
    %134 = arith.truncf %133 : vector<128x128xf32> to vector<128x128xbf16>
    %c1_107 = arith.constant 1 : index
    %c7_108 = arith.constant 7 : index
    %c0_109 = arith.constant 0 : index
    %c0_110 = arith.constant 0 : index
    %135 = vector.load %arg1[%c1_107, %c7_108, %c0_109, %c0_110] : memref<2x9x128x128xbf16, #tpu.memory_space<vmem>>, vector<1x1x128x128xbf16>
    %136 = vector.shape_cast %135 : vector<1x1x128x128xbf16> to vector<128x128xbf16>
    %cst_111 = arith.constant dense<0.000000e+00> : vector<128x128xf32>
    %137 = tpu.matmul %134, %136, %cst_111 {dimension_numbers = #tpu.dot_dimension_numbers<[1], [0], [0], [1], [0, 0, 1, 1], [], []>} : vector<128x128xbf16>, vector<128x128xbf16>, vector<128x128xf32> -> vector<128x128xf32>
    %138 = arith.addf %131, %137 : vector<128x128xf32>
    %139 = vector.extract_strided_slice %78 {offsets = [0, 2, 9, 0], sizes = [2, 8, 8, 128], strides = [1, 1, 1, 1]} : vector<2x10x24x128xf32> to vector<2x8x8x128xf32>
    %140 = vector.shape_cast %139 : vector<2x8x8x128xf32> to vector<128x128xf32>
    %141 = arith.truncf %140 : vector<128x128xf32> to vector<128x128xbf16>
    %c1_112 = arith.constant 1 : index
    %c8_113 = arith.constant 8 : index
    %c0_114 = arith.constant 0 : index
    %c0_115 = arith.constant 0 : index
    %142 = vector.load %arg1[%c1_112, %c8_113, %c0_114, %c0_115] : memref<2x9x128x128xbf16, #tpu.memory_space<vmem>>, vector<1x1x128x128xbf16>
    %143 = vector.shape_cast %142 : vector<1x1x128x128xbf16> to vector<128x128xbf16>
    %cst_116 = arith.constant dense<0.000000e+00> : vector<128x128xf32>
    %144 = tpu.matmul %141, %143, %cst_116 {dimension_numbers = #tpu.dot_dimension_numbers<[1], [0], [0], [1], [0, 0, 1, 1], [], []>} : vector<128x128xbf16>, vector<128x128xbf16>, vector<128x128xf32> -> vector<128x128xf32>
    %145 = arith.addf %138, %144 : vector<128x128xf32>
    %cst_117 = arith.constant 0.000000e+00 : f32
    %146 = vector.broadcast %cst_117 : f32 to vector<128x128xf32>
    %147 = arith.maximumf %145, %146 : vector<128x128xf32>
    %148 = vector.shape_cast %147 : vector<128x128xf32> to vector<2x8x8x128xf32>
    %c0_118 = arith.constant 0 : index
    %c0_119 = arith.constant 0 : index
    %c0_120 = arith.constant 0 : index
    %c0_121 = arith.constant 0 : index
    %149 = vector.load %arg3[%c0_118, %c0_119, %c0_120, %c0_121] : memref<2x8x8x128xf32, #tpu.memory_space<vmem>>, vector<2x8x8x128xf32>
    tpu.vector_store %arg3[%c0_118, %c0_119, %c0_120, %c0_121], %148 {strides = array<i32>} : memref<2x8x8x128xf32, #tpu.memory_space<vmem>>, vector<2x8x8x128xf32>,
    return
  }
}

module attributes {stable_mosaic.version = 11 : i64} {
  func.func @_tiled_matmul_bias_kernel(%arg0: i32, %arg1: i32, %arg2: i32, %arg3: memref<2x256xbf16, #tpu.memory_space<vmem>>, %arg4: memref<256x256xbf16, #tpu.memory_space<vmem>>, %arg5: memref<1x256xf32, #tpu.memory_space<vmem>>, %arg6: memref<2x256xf32, #tpu.memory_space<vmem>>, %arg7: memref<2x256xf32, #tpu.memory_space<vmem>>) attributes {dimension_semantics = [#tpu.dimension_semantics<parallel>, #tpu.dimension_semantics<parallel>, #tpu.dimension_semantics<arbitrary>], iteration_bounds = array<i64: 1, 1, 2>, scalar_prefetch = 0 : i64, scratch_operands = 1 : i64, tpu.core_type = #tpu.core_type<tc>, window_params = [{transform_indices = @transform_0, window_bounds = array<i64: 2, 256>}, {transform_indices = @transform_1, window_bounds = array<i64: 256, 256>}, {transform_indices = @transform_2, window_bounds = array<i64: 1, 256>}, {transform_indices = @transform_3, window_bounds = array<i64: 2, 256>}]} {
    %c0_i32 = arith.constant 0 : i32
    %0 = arith.cmpi eq, %arg2, %c0_i32 : i32
    %1 = arith.extui %0 : i1 to i32
    %c0_i32_0 = arith.constant 0 : i32
    %2 = arith.cmpi ne, %1, %c0_i32_0 : i32
    scf.if %2 {
      %cst_9 = arith.constant 0.000000e+00 : f32
      %12 = vector.broadcast %cst_9 : f32 to vector<2x256xf32>
      %c0_10 = arith.constant 0 : index
      %c0_11 = arith.constant 0 : index
      %13 = vector.load %arg7[%c0_10, %c0_11] : memref<2x256xf32, #tpu.memory_space<vmem>>, vector<2x256xf32>
      tpu.vector_store %arg7[%c0_10, %c0_11], %12 {strides = array<i32>} : memref<2x256xf32, #tpu.memory_space<vmem>>, vector<2x256xf32>,
    } else {
    }
    %c0 = arith.constant 0 : index
    %c0_1 = arith.constant 0 : index
    %3 = vector.load %arg7[%c0, %c0_1] : memref<2x256xf32, #tpu.memory_space<vmem>>, vector<2x256xf32>
    %c0_2 = arith.constant 0 : index
    %c0_3 = arith.constant 0 : index
    %4 = vector.load %arg3[%c0_2, %c0_3] : memref<2x256xbf16, #tpu.memory_space<vmem>>, vector<2x256xbf16>
    %c0_4 = arith.constant 0 : index
    %c0_5 = arith.constant 0 : index
    %5 = vector.load %arg4[%c0_4, %c0_5] : memref<256x256xbf16, #tpu.memory_space<vmem>>, vector<256x256xbf16>
    %cst = arith.constant dense<0.000000e+00> : vector<2x256xf32>
    %6 = tpu.matmul %4, %5, %cst {dimension_numbers = #tpu.dot_dimension_numbers<[1], [0], [0], [1], [0, 0, 1, 1], [], []>} : vector<2x256xbf16>, vector<256x256xbf16>, vector<2x256xf32> -> vector<2x256xf32>
    %7 = arith.addf %3, %6 : vector<2x256xf32>
    %c0_6 = arith.constant 0 : index
    %c0_7 = arith.constant 0 : index
    %8 = vector.load %arg7[%c0_6, %c0_7] : memref<2x256xf32, #tpu.memory_space<vmem>>, vector<2x256xf32>
    tpu.vector_store %arg7[%c0_6, %c0_7], %7 {strides = array<i32>} : memref<2x256xf32, #tpu.memory_space<vmem>>, vector<2x256xf32>,
    %c1_i32 = arith.constant 1 : i32
    %9 = arith.cmpi eq, %arg2, %c1_i32 : i32
    %10 = arith.extui %9 : i1 to i32
    %c0_i32_8 = arith.constant 0 : i32
    %11 = arith.cmpi ne, %10, %c0_i32_8 : i32
    scf.if %11 {
      %c0_9 = arith.constant 0 : index
      %c0_10 = arith.constant 0 : index
      %12 = vector.load %arg7[%c0_9, %c0_10] : memref<2x256xf32, #tpu.memory_space<vmem>>, vector<2x256xf32>
      %c0_11 = arith.constant 0 : index
      %c0_12 = arith.constant 0 : index
      %13 = vector.load %arg5[%c0_11, %c0_12] : memref<1x256xf32, #tpu.memory_space<vmem>>, vector<1x256xf32>
      %14 = vector.broadcast %13 : vector<1x256xf32> to vector<2x256xf32>
      %15 = arith.addf %12, %14 : vector<2x256xf32>
      %c0_13 = arith.constant 0 : index
      %c0_14 = arith.constant 0 : index
      %16 = vector.load %arg6[%c0_13, %c0_14] : memref<2x256xf32, #tpu.memory_space<vmem>>, vector<2x256xf32>
      tpu.vector_store %arg6[%c0_13, %c0_14], %15 {strides = array<i32>} : memref<2x256xf32, #tpu.memory_space<vmem>>, vector<2x256xf32>,
    } else {
    }
    return
  }
  func.func @transform_0(%arg0: i32, %arg1: i32, %arg2: i32) -> (i32, i32) {
    %c0_i32 = arith.constant 0 : i32
    return %arg0, %arg2 : i32, i32
  }
  func.func @transform_1(%arg0: i32, %arg1: i32, %arg2: i32) -> (i32, i32) {
    %c0_i32 = arith.constant 0 : i32
    return %arg2, %arg1 : i32, i32
  }
  func.func @transform_2(%arg0: i32, %arg1: i32, %arg2: i32) -> (i32, i32) {
    %c0_i32 = arith.constant 0 : i32
    %c0_i32_0 = arith.constant 0 : i32
    return %c0_i32, %arg1 : i32, i32
  }
  func.func @transform_3(%arg0: i32, %arg1: i32, %arg2: i32) -> (i32, i32) {
    %c0_i32 = arith.constant 0 : i32
    return %arg0, %arg1 : i32, i32
  }
}

</mosaic_0001>

<llo_original>
// kernel: decoder_arch_net_forward.3
$region0: #{decoder_arch_net_forward.3}
  #allocation0 [shape = 'u32[]', space=smem, size = 0x4, offset = 0x4, fixed_abs, tag = 'smem constant byte address 0x4 - core index']
  #allocation1 [shape = 'u32[72,128]{1,0:T(1,128)}', space=vmem, size = 0x9000, scoped, tag = 'internal scratch']
  %s0 = inlined_call_operand.vmem [shape: f32[2,256], index: 0, kind: input, shape index: {}]
  %s1 = inlined_call_operand.vmem [shape: f32[2], index: 1, kind: input, shape index: {}]
  %s2 = inlined_call_operand.vmem [shape: bf16[256,128], index: 2, kind: input, shape index: {}]
  %s3 = inlined_call_operand.vmem [shape: f32[1,128], index: 3, kind: input, shape index: {}]
  %s4 = inlined_call_operand.vmem [shape: bf16[128,256], index: 4, kind: input, shape index: {}]
  %s5 = inlined_call_operand.vmem [shape: f32[1,256], index: 5, kind: input, shape index: {}]
  %s6 = inlined_call_operand.vmem [shape: f32[2,256], index: 6, kind: output, shape index: {}]
  %s7 = sld [smem:[#allocation0]]
  $region38: #{decoder_arch_net_forward.3} parent=0
    _
  %s9 = ssub.s32 1, %s7
  %s10 = scalar_select 0, %s9, %s7
  $region1: #{decoder_arch_net_forward.3} parent=0
    #allocation2 [shape = 'u8[512]{0}', space=smem, size = 0x200, scoped, tag = 'input window, operand 1, single buffered']
    #allocation3 [shape = 's32[1]{0}', space=sflag, size = 0x4, scoped, tag = 'scoped memory for decoder_arch_net_forward.3']
    %11 = vsyncpa [#allocation3], 0
    // Predicated region
    $region2: #{decoder_arch_net_forward.3} parent=1 // pred_check
      _
    $region3: #{decoder_arch_net_forward.3} parent=1 // pred_check_branch
      %13 = sbr.rel (0) target = $region5
    $region4: #{decoder_arch_net_forward.3} parent=1 // pred_region
      _
    $region5: #{decoder_arch_net_forward.3} parent=1 // pred_fallthru
      _
    // Predicated region
    $region6: #{decoder_arch_net_forward.3} parent=1 // pred_check
      _
    $region7: #{decoder_arch_net_forward.3} parent=1 // pred_check_branch
      %15 = sbr.rel (0) target = $region9
    $region8: #{decoder_arch_net_forward.3} parent=1 // pred_region
      %17 = vsyncadd [#allocation3], 0
      %s19 = sshll.u32 %s1, 4
      %s20 = int_to_ptr.vmem [resolvable:$true] %s19
      %22 = dma.vmem_to_smem %s20, 16, [#allocation2], [#allocation3]
    $region9: #{decoder_arch_net_forward.3} parent=1 // pred_fallthru
      _
    // Predicated region
    $region10: #{decoder_arch_net_forward.3} parent=1 // pred_check
      _
    $region11: #{decoder_arch_net_forward.3} parent=1 // pred_check_branch
      %24 = sbr.rel (0) target = $region13
    $region12: #{decoder_arch_net_forward.3} parent=1 // pred_region
      _
    $region13: #{decoder_arch_net_forward.3} parent=1 // pred_fallthru
      _
    // Predicated region
    $region14: #{decoder_arch_net_forward.3} parent=1 // pred_check
      _
    $region15: #{decoder_arch_net_forward.3} parent=1 // pred_check_branch
      %26 = sbr.rel (0) target = $region17
    $region16: #{decoder_arch_net_forward.3} parent=1 // pred_region
      _
    $region17: #{decoder_arch_net_forward.3} parent=1 // pred_fallthru
      _
    // Predicated region
    $region18: #{decoder_arch_net_forward.3} parent=1 // pred_check
      _
    $region19: #{decoder_arch_net_forward.3} parent=1 // pred_check_branch
      %28 = sbr.rel (0) target = $region21
    $region20: #{decoder_arch_net_forward.3} parent=1 // pred_region
      _
    $region21: #{decoder_arch_net_forward.3} parent=1 // pred_fallthru
      _
    // Predicated region
    $region22: #{decoder_arch_net_forward.3} parent=1 // pred_check
      _
    $region23: #{decoder_arch_net_forward.3} parent=1 // pred_check_branch
      %30 = sbr.rel (0) target = $region25
    $region24: #{decoder_arch_net_forward.3} parent=1 // pred_region
      _
    $region25: #{decoder_arch_net_forward.3} parent=1 // pred_fallthru
      _
    // Predicated region
    $region26: #{decoder_arch_net_forward.3} parent=1 // pred_check
      _
    $region27: #{decoder_arch_net_forward.3} parent=1 // pred_check_branch
      %32 = sbr.rel (0) target = $region29
    $region28: #{decoder_arch_net_forward.3} parent=1 // pred_region
      %34 = dma.done [#allocation3], 16
    $region29: #{decoder_arch_net_forward.3} parent=1 // pred_fallthru
      _
    %35 = sfence
    %v36 = vld [vmem:[%s0] sm:$0xf]
    %38 = vst [vmem:[#allocation1] ss:$4 sm:$0xff] %v36
    %v39 = vld.sshfl [vmem:[#allocation1] sm:$0xff pattern:$0x73625140]
    %v40 = vld.sshfl [vmem:[#allocation1 + $0x8] sm:$0xff pattern:$0x73625140]
    %v43 = vpack.c.bf16 %v39, %v39
    %v44 = vpack.c.bf16 %v40, %v40
    %v45 = vld [vmem:[%s2] sm:$0xf]
    %v46 = vld [vmem:[%s2 + $0x4] sm:$0xf]
    %v47 = vld [vmem:[%s2 + $0x8] sm:$0xf]
    %v48 = vld [vmem:[%s2 + $0xc] sm:$0xf]
    %v49 = vld [vmem:[%s2 + $0x10] sm:$0xf]
    %v50 = vld [vmem:[%s2 + $0x14] sm:$0xf]
    %v51 = vld [vmem:[%s2 + $0x18] sm:$0xf]
    %v52 = vld [vmem:[%s2 + $0x1c] sm:$0xf]
    %v53 = vld [vmem:[%s2 + $0x20] sm:$0xf]
    %v54 = vld [vmem:[%s2 + $0x24] sm:$0xf]
    %v55 = vld [vmem:[%s2 + $0x28] sm:$0xf]
    %v56 = vld [vmem:[%s2 + $0x2c] sm:$0xf]
    %v57 = vld [vmem:[%s2 + $0x30] sm:$0xf]
    %v58 = vld [vmem:[%s2 + $0x34] sm:$0xf]
    %v59 = vld [vmem:[%s2 + $0x38] sm:$0xf]
    %v60 = vld [vmem:[%s2 + $0x3c] sm:$0xf]
    %v61 = vld [vmem:[%s2 + $0x40] sm:$0xf]
    %v62 = vld [vmem:[%s2 + $0x44] sm:$0xf]
    %v63 = vld [vmem:[%s2 + $0x48] sm:$0xf]
    %v64 = vld [vmem:[%s2 + $0x4c] sm:$0xf]
    %v65 = vld [vmem:[%s2 + $0x50] sm:$0xf]
    %v66 = vld [vmem:[%s2 + $0x54] sm:$0xf]
    %v67 = vld [vmem:[%s2 + $0x58] sm:$0xf]
    %v68 = vld [vmem:[%s2 + $0x5c] sm:$0xf]
    %v69 = vld [vmem:[%s2 + $0x60] sm:$0xf]
    %v70 = vld [vmem:[%s2 + $0x64] sm:$0xf]
    %v71 = vld [vmem:[%s2 + $0x68] sm:$0xf]
    %v72 = vld [vmem:[%s2 + $0x6c] sm:$0xf]
    %v73 = vld [vmem:[%s2 + $0x70] sm:$0xf]
    %v74 = vld [vmem:[%s2 + $0x74] sm:$0xf]
    %v75 = vld [vmem:[%s2 + $0x78] sm:$0xf]
    %v76 = vld [vmem:[%s2 + $0x7c] sm:$0xf]
    %v77 = vld [vmem:[%s3] sm:$0x1]
    %v79 = vperm.slane %v77, 0
    %v113 = vunpack.c.l.b16 %v45
    %v114 = vunpack.c.l.b16 %v46
    %v115 = vunpack.c.l.b16 %v47
    %v116 = vunpack.c.l.b16 %v48
    %v117 = vunpack.c.l.b16 %v49
    %v118 = vunpack.c.l.b16 %v50
    %v119 = vunpack.c.l.b16 %v51
    %v120 = vunpack.c.l.b16 %v52
    %v121 = vunpack.c.l.b16 %v53
    %v122 = vunpack.c.l.b16 %v54
    %v123 = vunpack.c.l.b16 %v55
    %v124 = vunpack.c.l.b16 %v56
    %v125 = vunpack.c.l.b16 %v57
    %v126 = vunpack.c.l.b16 %v58
    %v127 = vunpack.c.l.b16 %v59
    %v128 = vunpack.c.l.b16 %v60
    %v129 = vunpack.c.l.b16 %v61
    %v130 = vunpack.c.l.b16 %v62
    %v131 = vunpack.c.l.b16 %v63
    %v132 = vunpack.c.l.b16 %v64
    %v133 = vunpack.c.l.b16 %v65
    %v134 = vunpack.c.l.b16 %v66
    %v135 = vunpack.c.l.b16 %v67
    %v136 = vunpack.c.l.b16 %v68
    %v137 = vunpack.c.l.b16 %v69
    %v138 = vunpack.c.l.b16 %v70
    %v139 = vunpack.c.l.b16 %v71
    %v140 = vunpack.c.l.b16 %v72
    %v141 = vunpack.c.l.b16 %v73
    %v142 = vunpack.c.l.b16 %v74
    %v143 = vunpack.c.l.b16 %v75
    %v144 = vunpack.c.l.b16 %v76
    %v145 = vpack.c.b16 %v114, %v113
    %v146 = vpack.c.b16 %v116, %v115
    %v147 = vpack.c.b16 %v118, %v117
    %v148 = vpack.c.b16 %v120, %v119
    %v149 = vpack.c.b16 %v122, %v121
    %v150 = vpack.c.b16 %v124, %v123
    %v151 = vpack.c.b16 %v126, %v125
    %v152 = vpack.c.b16 %v128, %v127
    %v153 = vpack.c.b16 %v130, %v129
    %v154 = vpack.c.b16 %v132, %v131
    %v155 = vpack.c.b16 %v134, %v133
    %v156 = vpack.c.b16 %v136, %v135
    %v157 = vpack.c.b16 %v138, %v137
    %v158 = vpack.c.b16 %v140, %v139
    %v159 = vpack.c.b16 %v142, %v141
    %v160 = vpack.c.b16 %v144, %v143
    %177 = vmatpush.bf16.msra.mxu0 %v152
    %178 = vmatpush.bf16.msra.mxu0 %v151
    %179 = vmatpush.bf16.msra.mxu0 %v150
    %180 = vmatpush.bf16.msra.mxu0 %v149
    %181 = vmatpush.bf16.msra.mxu0 %v148
    %182 = vmatpush.bf16.msra.mxu0 %v147
    %183 = vmatpush.bf16.msra.mxu0 %v146
    %184 = vmatpush.bf16.msra.mxu0 %v145
    %185 = vmatmul.bf16.gmra.mxu0 %v43
    %v186 = vpop.f32.mrf.mxu0
    %v187 = vadd.f32 %v79, %v186
    %v188 = vpop.f32.mrf.mxu0
    %189 = vdwg.mxu0
    %190 = vmatpush.bf16.msra.mxu0 %v160
    %191 = vmatpush.bf16.msra.mxu0 %v159
    %192 = vmatpush.bf16.msra.mxu0 %v158
    %193 = vmatpush.bf16.msra.mxu0 %v157
    %194 = vmatpush.bf16.msra.mxu0 %v156
    %195 = vmatpush.bf16.msra.mxu0 %v155
    %196 = vmatpush.bf16.msra.mxu0 %v154
    %197 = vmatpush.bf16.msra.mxu0 %v153
    %198 = vmatmul.bf16.gmra.mxu0 %v44
    %v199 = vpop.f32.mrf.mxu0
    %v200 = vadd.f32 %v187, %v199
    %v201 = vpop.f32.mrf.mxu0
    %202 = vdwg.mxu0
    %s203 = sld [smem:[#allocation2]]
    %vm204 = vcmp.gt.f32.partialorder %v200, 0.0
    %v205 = vstv %s203
    %v206 = vmul.f32 %v205, %v200
    %v207 = vsel %vm204, %v200, %v206
    %v208 = vpack.c.bf16 %v207, %v207
    %v209 = vld [vmem:[%s4] sm:$0xff]
    %v210 = vld [vmem:[%s4 + $0x8] sm:$0xff]
    %v211 = vld [vmem:[%s4 + $0x10] sm:$0xff]
    %v212 = vld [vmem:[%s4 + $0x18] sm:$0xff]
    %v213 = vld [vmem:[%s4 + $0x20] sm:$0xff]
    %v214 = vld [vmem:[%s4 + $0x28] sm:$0xff]
    %v215 = vld [vmem:[%s4 + $0x30] sm:$0xff]
    %v216 = vld [vmem:[%s4 + $0x38] sm:$0xff]
    %v217 = vld [vmem:[%s4 + $0x40] sm:$0xff]
    %v218 = vld [vmem:[%s4 + $0x48] sm:$0xff]
    %v219 = vld [vmem:[%s4 + $0x50] sm:$0xff]
    %v220 = vld [vmem:[%s4 + $0x58] sm:$0xff]
    %v221 = vld [vmem:[%s4 + $0x60] sm:$0xff]
    %v222 = vld [vmem:[%s4 + $0x68] sm:$0xff]
    %v223 = vld [vmem:[%s4 + $0x70] sm:$0xff]
    %v224 = vld [vmem:[%s4 + $0x78] sm:$0xff]
    %v225 = vld [vmem:[%s5] sm:$0x3]
    %v227 = vperm.slane %v225, 0
    %v228 = vperm.slane %v225, 1
    %v247 = vunpack.c.l.b16 %v209
    %v248 = vunpack.c.h.b16 %v209
    %v249 = vunpack.c.l.b16 %v210
    %v250 = vunpack.c.h.b16 %v210
    %v251 = vunpack.c.l.b16 %v211
    %v252 = vunpack.c.h.b16 %v211
    %v253 = vunpack.c.l.b16 %v212
    %v254 = vunpack.c.h.b16 %v212
    %v255 = vunpack.c.l.b16 %v213
    %v256 = vunpack.c.h.b16 %v213
    %v257 = vunpack.c.l.b16 %v214
    %v258 = vunpack.c.h.b16 %v214
    %v259 = vunpack.c.l.b16 %v215
    %v260 = vunpack.c.h.b16 %v215
    %v261 = vunpack.c.l.b16 %v216
    %v262 = vunpack.c.h.b16 %v216
    %v263 = vunpack.c.l.b16 %v217
    %v264 = vunpack.c.h.b16 %v217
    %v265 = vunpack.c.l.b16 %v218
    %v266 = vunpack.c.h.b16 %v218
    %v267 = vunpack.c.l.b16 %v219
    %v268 = vunpack.c.h.b16 %v219
    %v269 = vunpack.c.l.b16 %v220
    %v270 = vunpack.c.h.b16 %v220
    %v271 = vunpack.c.l.b16 %v221
    %v272 = vunpack.c.h.b16 %v221
    %v273 = vunpack.c.l.b16 %v222
    %v274 = vunpack.c.h.b16 %v222
    %v275 = vunpack.c.l.b16 %v223
    %v276 = vunpack.c.h.b16 %v223
    %v277 = vunpack.c.l.b16 %v224
    %v278 = vunpack.c.h.b16 %v224
    %v279 = vpack.c.b16 %v249, %v247
    %v280 = vpack.c.b16 %v250, %v248
    %v281 = vpack.c.b16 %v253, %v251
    %v282 = vpack.c.b16 %v254, %v252
    %v283 = vpack.c.b16 %v257, %v255
    %v284 = vpack.c.b16 %v258, %v256
    %v285 = vpack.c.b16 %v261, %v259
    %v286 = vpack.c.b16 %v262, %v260
    %v287 = vpack.c.b16 %v265, %v263
    %v288 = vpack.c.b16 %v266, %v264
    %v289 = vpack.c.b16 %v269, %v267
    %v290 = vpack.c.b16 %v270, %v268
    %v291 = vpack.c.b16 %v273, %v271
    %v292 = vpack.c.b16 %v274, %v272
    %v293 = vpack.c.b16 %v277, %v275
    %v294 = vpack.c.b16 %v278, %v276
    %311 = vmatpush.bf16.msra.mxu0 %v293
    %312 = vmatpush.bf16.msra.mxu0 %v291
    %313 = vmatpush.bf16.msra.mxu0 %v289
    %314 = vmatpush.bf16.msra.mxu0 %v287
    %315 = vmatpush.bf16.msra.mxu0 %v285
    %316 = vmatpush.bf16.msra.mxu0 %v283
    %317 = vmatpush.bf16.msra.mxu0 %v281
    %318 = vmatpush.bf16.msra.mxu0 %v279
    %319 = vmatmul.bf16.gmra.mxu0 %v208
    %v320 = vpop.f32.mrf.mxu0
    %v321 = vadd.f32 %v227, %v320
    %v322 = vpop.f32.mrf.mxu0
    %323 = vdwg.mxu0
    %324 = vmatpush.bf16.msra.mxu0 %v294
    %325 = vmatpush.bf16.msra.mxu0 %v292
    %326 = vmatpush.bf16.msra.mxu0 %v290
    %327 = vmatpush.bf16.msra.mxu0 %v288
    %328 = vmatpush.bf16.msra.mxu0 %v286
    %329 = vmatpush.bf16.msra.mxu0 %v284
    %330 = vmatpush.bf16.msra.mxu0 %v282
    %331 = vmatpush.bf16.msra.mxu0 %v280
    %332 = vmatmul.bf16.gmra.mxu0 %v208
    %v333 = vpop.f32.mrf.mxu0
    %v334 = vadd.f32 %v228, %v333
    %v335 = vpop.f32.mrf.mxu0
    %336 = vdwg.mxu0
    %s337 = sld [smem:[#allocation2 + $0x1]]
    %vm338 = vcmp.gt.f32.partialorder %v321, 0.0
    %vm339 = vcmp.gt.f32.partialorder %v334, 0.0
    %v340 = vstv %s337
    %v341 = vmul.f32 %v340, %v321
    %v342 = vmul.f32 %v340, %v334
    %v343 = vsel %vm338, %v321, %v341
    %v344 = vsel %vm339, %v334, %v342
    %v347 = vrot.slane %v344, 6
    %vm348 = vcmask 1041408
    %v349 = vsel %vm348, %v343, %v347
    %351 = vst [vmem:[%s6] sm:$0xf] %v349
    // Predicated region
    $region30: #{decoder_arch_net_forward.3} parent=1 // pred_check
      _
    $region31: #{decoder_arch_net_forward.3} parent=1 // pred_check_branch
      %353 = sbr.rel (0) target = $region33
    $region32: #{decoder_arch_net_forward.3} parent=1 // pred_region
      _
    $region33: #{decoder_arch_net_forward.3} parent=1 // pred_fallthru
      _
    // Predicated region
    $region34: #{decoder_arch_net_forward.3} parent=1 // pred_check
      _
    $region35: #{decoder_arch_net_forward.3} parent=1 // pred_check_branch
      %355 = sbr.rel (0) target = $region37
    $region36: #{decoder_arch_net_forward.3} parent=1 // pred_region
      _
    $region37: #{decoder_arch_net_forward.3} parent=1 // pred_fallthru
      _
    %356 = vsyncpa [#allocation3], 1

// kernel: decoder_arch_net_forward.5
$region0: #{decoder_arch_net_forward.5}
  #allocation0 [shape = 'u32[]', space=smem, size = 0x4, offset = 0x4, fixed_abs, tag = 'smem constant byte address 0x4 - core index']
  #allocation1 [shape = 'u32[72,128]{1,0:T(1,128)}', space=vmem, size = 0x9000, scoped, tag = 'internal scratch']
  #allocation2 [shape = 'f32[2,256]{1,0:T(2,128)}', space=vmem, size = 0x800, scoped, tag = 'scratch operand']
  %s0 = inlined_call_operand.vmem [shape: bf16[2,512], index: 0, kind: input, shape index: {}]
  %s1 = inlined_call_operand.vmem [shape: bf16[512,256], index: 1, kind: input, shape index: {}]
  %s2 = inlined_call_operand.vmem [shape: f32[1,256], index: 2, kind: input, shape index: {}]
  %s3 = inlined_call_operand.vmem [shape: f32[2,256], index: 3, kind: output, shape index: {}]
  %s4 = sld [smem:[#allocation0]]
  $region53: #{decoder_arch_net_forward.5} parent=0
    _
  %s6 = ssub.s32 1, %s4
  %s7 = scalar_select 0, %s6, %s4
  loop: start=0, step=1, limit=4
  $region2: #{decoder_arch_net_forward.5} parent=0 // loop_pre_header
    _
  $region3: #{decoder_arch_net_forward.5} parent=0 // loop_header
    %s9 = sphi 0, %s13
    %p10 = scmp.ge.s32.totalorder %s9, 4
    %s16 = sphi 0, %s35
    %s17 = sphi 0, %s31
    %s18 = sphi 0, %s27
    %s19 = sphi 0, %s16
    %s20 = sphi 0, %s17
    %s21 = sphi 0, %s18
    %s22 = sphi 0, %s19
    %s23 = sphi 0, %s20
    %s24 = sphi 0, %s21
    %s40 = sphi 0, %s42
    %s43 = sphi 0, %s40
    %s44 = sphi 0, %s43
    %s60 = sphi 0, %s44
    %s68 = sphi 0, %s70
    %s71 = sphi 0, %s68
    %s72 = sphi 0, %s71
    %s88 = sphi 0, %s72
    %s94 = sphi 0, %s96
    %s97 = sphi 0, %s94
    %s98 = sphi 0, %s97
    %s114 = sphi 0, %s98
    %s122 = sphi 0, %s124
    %s125 = sphi 0, %s122
    %s126 = sphi 0, %s125
    %s142 = sphi 0, %s126
  $region4: #{decoder_arch_net_forward.5} parent=0 // loop_header_branch
    %12 = sbr.rel (%p10) target = $region8
  $region5: #{decoder_arch_net_forward.5} parent=0 // loop_body
    %s14 = ssub.s32 %s9, 1
    %s15 = ssub.s32 %s9, 2
    %s25 = sadd.s32 1, %s18
    %p26 = scmp.ge.s32.totalorder %s25, 2
    %s27 = scalar_select %p26, 0, %s25
    %s28 = sadd.s32 1, %s17
    %s29 = scalar_select %p26, %s28, %s17
    %p30 = scmp.ge.s32.totalorder %s29, 1
    %s31 = scalar_select %p30, 0, %s29
    %s32 = sadd.s32 1, %s16
    %s33 = scalar_select %p30, %s32, %s16
    %p34 = scmp.ge.s32.totalorder %s33, 1
    %s35 = scalar_select %p34, 0, %s33
    %s36 = ssub.s32 %s16, %s35
    %s37 = ssub.s32 %s18, %s27
    %s38 = sor.u32 %s36, %s37
    %p39 = scmp.eq.s32.totalorder %s38, 0
    %s41 = sadd.s32 %s40, 1
    %s42 = scalar_select %p39, %s40, %s41
    %p45 = pneg %p39
    %p46 = scmp.eq.s32.totalorder %s9, 1
    %p47 = por %p45, %p46
    %p48 = scmp.ne.s32.totalorder %s40, %s43
    %p49 = scmp.eq.s32.totalorder %s9, 0
    %p50 = por %p48, %p49
    %p51 = scmp.ne.s32.totalorder %s40, %s43
    %p52 = scmp.eq.s32.totalorder %s14, 1
    %p53 = por %p51, %p52
    %p54 = scmp.ne.s32.totalorder %s43, %s44
    %p55 = scmp.eq.s32.totalorder %s14, 0
    %p56 = por %p54, %p55
    %p57 = scmp.ne.s32.totalorder %s43, %s44
    %p58 = scmp.eq.s32.totalorder %s15, 1
    %p59 = por %p57, %p58
    %p61 = scmp.ne.s32.totalorder %s44, %s60
    %p62 = scmp.eq.s32.totalorder %s15, 0
    %p63 = por %p61, %p62
    %s64 = ssub.s32 %s18, %s27
    %s65 = ssub.s32 %s17, %s31
    %s66 = sor.u32 %s64, %s65
    %p67 = scmp.eq.s32.totalorder %s66, 0
    %s69 = sadd.s32 %s68, 1
    %s70 = scalar_select %p67, %s68, %s69
    %p73 = pneg %p67
    %p74 = scmp.eq.s32.totalorder %s9, 1
    %p75 = por %p73, %p74
    %p76 = scmp.ne.s32.totalorder %s68, %s71
    %p77 = scmp.eq.s32.totalorder %s9, 0
    %p78 = por %p76, %p77
    %p79 = scmp.ne.s32.totalorder %s68, %s71
    %p80 = scmp.eq.s32.totalorder %s14, 1
    %p81 = por %p79, %p80
    %p82 = scmp.ne.s32.totalorder %s71, %s72
    %p83 = scmp.eq.s32.totalorder %s14, 0
    %p84 = por %p82, %p83
    %p85 = scmp.ne.s32.totalorder %s71, %s72
    %p86 = scmp.eq.s32.totalorder %s15, 1
    %p87 = por %p85, %p86
    %p89 = scmp.ne.s32.totalorder %s72, %s88
    %p90 = scmp.eq.s32.totalorder %s15, 0
    %p91 = por %p89, %p90
    %s92 = ssub.s32 %s17, %s31
    %p93 = scmp.eq.s32.totalorder %s92, 0
    %s95 = sadd.s32 %s94, 1
    %s96 = scalar_select %p93, %s94, %s95
    %p99 = pneg %p93
    %p100 = scmp.eq.s32.totalorder %s9, 1
    %p101 = por %p99, %p100
    %p102 = scmp.ne.s32.totalorder %s94, %s97
    %p103 = scmp.eq.s32.totalorder %s9, 0
    %p104 = por %p102, %p103
    %p105 = scmp.ne.s32.totalorder %s94, %s97
    %p106 = scmp.eq.s32.totalorder %s14, 1
    %p107 = por %p105, %p106
    %p108 = scmp.ne.s32.totalorder %s97, %s98
    %p109 = scmp.eq.s32.totalorder %s14, 0
    %p110 = por %p108, %p109
    %p111 = scmp.ne.s32.totalorder %s97, %s98
    %p112 = scmp.eq.s32.totalorder %s15, 1
    %p113 = por %p111, %p112
    %p115 = scmp.ne.s32.totalorder %s98, %s114
    %p116 = scmp.eq.s32.totalorder %s15, 0
    %p117 = por %p115, %p116
    %s118 = ssub.s32 %s16, %s35
    %s119 = ssub.s32 %s17, %s31
    %s120 = sor.u32 %s118, %s119
    %p121 = scmp.eq.s32.totalorder %s120, 0
    %s123 = sadd.s32 %s122, 1
    %s124 = scalar_select %p121, %s122, %s123
    %p127 = pneg %p121
    %p128 = scmp.eq.s32.totalorder %s9, 1
    %p129 = por %p127, %p128
    %p130 = scmp.ne.s32.totalorder %s122, %s125
    %p131 = scmp.eq.s32.totalorder %s9, 0
    %p132 = por %p130, %p131
    %p133 = scmp.ne.s32.totalorder %s122, %s125
    %p134 = scmp.eq.s32.totalorder %s14, 1
    %p135 = por %p133, %p134
    %p136 = scmp.ne.s32.totalorder %s125, %s126
    %p137 = scmp.eq.s32.totalorder %s14, 0
    %p138 = por %p136, %p137
    %p139 = scmp.ne.s32.totalorder %s125, %s126
    %p140 = scmp.eq.s32.totalorder %s15, 1
    %p141 = por %p139, %p140
    %p143 = scmp.ne.s32.totalorder %s126, %s142
    %p144 = scmp.eq.s32.totalorder %s15, 0
    %p145 = por %p143, %p144
    %p146 = scmp.le.s32.totalorder 1, %s9
    %p147 = scmp.lt.s32.totalorder %s9, 3
    %p148 = pnand %p146, %p147
    %p149 = pneg %p148
    // Predicated region
    $region9: #{decoder_arch_net_forward.5} parent=5 // pred_check
      _
    $region10: #{decoder_arch_net_forward.5} parent=5 // pred_check_branch
      %151 = sbr.rel (%p148) target = $region12
    $region11: #{decoder_arch_net_forward.5} parent=5 // pred_region
      %s152 = ssub.s32 %s9, 1
      // Predicated region
      $region13: #{decoder_arch_net_forward.5} parent=11 // pred_check
        %p153 = pneg %p110
      $region14: #{decoder_arch_net_forward.5} parent=11 // pred_check_branch
        %155 = sbr.rel (%p153) target = $region16
      $region15: #{decoder_arch_net_forward.5} parent=11 // pred_region
        %s156 = smul.u32 2, %s20
        %p157 = scmp.lt.s32.totalorder %s156, 1
        %s158 = scalar_select %p157, %s156, 1
        %s159 = scalar_lea.vmem %s2, %s158
        %s160 = smul.u32 2, %s20
      $region16: #{decoder_arch_net_forward.5} parent=11 // pred_fallthru
        _
    $region12: #{decoder_arch_net_forward.5} parent=5 // pred_fallthru
      _
    %p161 = scmp.lt.s32.totalorder %s9, 2
    // Predicated region
    $region17: #{decoder_arch_net_forward.5} parent=5 // pred_check
      %p162 = pneg %p161
    $region18: #{decoder_arch_net_forward.5} parent=5 // pred_check_branch
      %164 = sbr.rel (%p162) target = $region20
    $region19: #{decoder_arch_net_forward.5} parent=5 // pred_region
      // Predicated region
      $region21: #{decoder_arch_net_forward.5} parent=19 // pred_check
        %p165 = pneg %p50
      $region22: #{decoder_arch_net_forward.5} parent=19 // pred_check_branch
        %167 = sbr.rel (%p165) target = $region24
      $region23: #{decoder_arch_net_forward.5} parent=19 // pred_region
        %s168 = smul.u32 2, %s18
        %p169 = scmp.lt.s32.totalorder %s16, 0
        %s170 = scalar_select %p169, %s16, 0
        %p171 = scmp.lt.s32.totalorder %s168, 3
        %s172 = scalar_select %p171, %s168, 3
        %s173 = smul.addr %s170, 4
        %s174 = sadd.s32 %s172, %s173
        %s175 = scalar_lea.vmem %s0, %s174
        %s176 = smul.u32 2, %s18
      $region24: #{decoder_arch_net_forward.5} parent=19 // pred_fallthru
        _
      // Predicated region
      $region25: #{decoder_arch_net_forward.5} parent=19 // pred_check
        %p177 = pneg %p78
      $region26: #{decoder_arch_net_forward.5} parent=19 // pred_check_branch
        %179 = sbr.rel (%p177) target = $region28
      $region27: #{decoder_arch_net_forward.5} parent=19 // pred_region
        %s180 = smul.u32 32, %s18
        %s181 = smul.u32 2, %s17
        %p182 = scmp.lt.s32.totalorder %s180, 63
        %s183 = scalar_select %p182, %s180, 63
        %p184 = scmp.lt.s32.totalorder %s181, 1
        %s185 = scalar_select %p184, %s181, 1
        %s186 = smul.addr %s183, 2
        %s187 = sadd.s32 %s185, %s186
        %s188 = smul.addr %s187, 4
        %s189 = scalar_lea.vmem %s1, %s188
        %s190 = smul.u32 32, %s18
        %s191 = smul.u32 2, %s17
      $region28: #{decoder_arch_net_forward.5} parent=19 // pred_fallthru
        _
    $region20: #{decoder_arch_net_forward.5} parent=5 // pred_fallthru
      _
    %p192 = scmp.le.s32.totalorder 1, %s9
    %p193 = scmp.lt.s32.totalorder %s9, 3
    %p194 = pnand %p192, %p193
    %p195 = pneg %p194
    // Predicated region
    $region29: #{decoder_arch_net_forward.5} parent=5 // pred_check
      _
    $region30: #{decoder_arch_net_forward.5} parent=5 // pred_check_branch
      %197 = sbr.rel (%p194) target = $region32
    $region31: #{decoder_arch_net_forward.5} parent=5 // pred_region
      %s198 = ssub.s32 %s9, 1
      %s199 = smul.u32 2, %s21
      %p200 = scmp.lt.s32.totalorder %s19, 0
      %s201 = scalar_select %p200, %s19, 0
      %p202 = scmp.lt.s32.totalorder %s199, 3
      %s203 = scalar_select %p202, %s199, 3
      %s204 = smul.addr %s201, 4
      %s205 = sadd.s32 %s203, %s204
      %s206 = scalar_lea.vmem %s0, %s205
      %p207 = pneg %p56
      %p208 = pneg %p53
      %s209 = smul.u32 32, %s21
      %s210 = smul.u32 2, %s20
      %p211 = scmp.lt.s32.totalorder %s209, 63
      %s212 = scalar_select %p211, %s209, 63
      %p213 = scmp.lt.s32.totalorder %s210, 1
      %s214 = scalar_select %p213, %s210, 1
      %s215 = smul.addr %s212, 2
      %s216 = sadd.s32 %s214, %s215
      %s217 = smul.addr %s216, 4
      %s218 = scalar_lea.vmem %s1, %s217
      %p219 = pneg %p84
      %p220 = pneg %p81
      %s221 = smul.u32 2, %s20
      %p222 = scmp.lt.s32.totalorder %s221, 1
      %s223 = scalar_select %p222, %s221, 1
      %s224 = scalar_lea.vmem %s2, %s223
      %p225 = pneg %p110
      %p226 = pneg %p107
      %p227 = pneg %p138
      %p228 = pneg %p135
      %s229 = smul.u32 2, %s20
      %p230 = scmp.lt.s32.totalorder %s19, 0
      %s231 = scalar_select %p230, %s19, 0
      %p232 = scmp.lt.s32.totalorder %s229, 1
      %s233 = scalar_select %p232, %s229, 1
      %s234 = smul.addr %s231, 2
      %s235 = sadd.s32 %s233, %s234
      %s236 = smul.addr %s235, 2
      %s237 = scalar_lea.vmem %s3, %s236
      %s238 = smul.u32 2, %s21
      %p239 = scmp.lt.s32.totalorder %s19, 0
      %s240 = scalar_select %p239, %s19, 0
      %p241 = scmp.lt.s32.totalorder %s238, 3
      %s242 = scalar_select %p241, %s238, 3
      %s243 = smul.addr %s240, 4
      %s244 = sadd.s32 %s242, %s243
      %s245 = scalar_lea.vmem %s0, %s244
      %s246 = smul.u32 2, %s21
      %s247 = smul.u32 32, %s21
      %s248 = smul.u32 2, %s20
      %p249 = scmp.lt.s32.totalorder %s247, 63
      %s250 = scalar_select %p249, %s247, 63
      %p251 = scmp.lt.s32.totalorder %s248, 1
      %s252 = scalar_select %p251, %s248, 1
      %s253 = smul.addr %s250, 2
      %s254 = sadd.s32 %s252, %s253
      %s255 = smul.addr %s254, 4
      %s256 = scalar_lea.vmem %s1, %s255
      %s257 = smul.u32 32, %s21
      %s258 = smul.u32 2, %s20
      %s259 = smul.u32 2, %s20
      %p260 = scmp.lt.s32.totalorder %s259, 1
      %s261 = scalar_select %p260, %s259, 1
      %s262 = scalar_lea.vmem %s2, %s261
      %s263 = smul.u32 2, %s20
      %s264 = smul.u32 2, %s20
      %p265 = scmp.lt.s32.totalorder %s19, 0
      %s266 = scalar_select %p265, %s19, 0
      %p267 = scmp.lt.s32.totalorder %s264, 1
      %s268 = scalar_select %p267, %s264, 1
      %s269 = smul.addr %s266, 2
      %s270 = sadd.s32 %s268, %s269
      %s271 = smul.addr %s270, 2
      %s272 = scalar_lea.vmem %s3, %s271
      %s273 = smul.u32 2, %s20
      %p274 = scmp.eq.s32.totalorder %s21, 0
      // Predicated region
      $region33: #{decoder_arch_net_forward.5} parent=31 // pred_check
        %p275 = pneg %p274
      $region34: #{decoder_arch_net_forward.5} parent=31 // pred_check_branch
        %277 = sbr.rel (%p275) target = $region36
      $region35: #{decoder_arch_net_forward.5} parent=31 // pred_region
        %278 = vst [vmem:[#allocation2] sm:$0xf] 0.0
      $region36: #{decoder_arch_net_forward.5} parent=31 // pred_fallthru
        _
      %v279 = vld [vmem:[#allocation2] sm:$0xf]
      %v280 = vld [vmem:[%s245] sm:$0x3]
      %v281 = vld [vmem:[%s256] sm:$0xff]
      %v282 = vld [vmem:[%s256 + $0x8] sm:$0xff]
      %v283 = vld [vmem:[%s256 + $0x10] sm:$0xff]
      %v284 = vld [vmem:[%s256 + $0x18] sm:$0xff]
      %v285 = vld [vmem:[%s256 + $0x20] sm:$0xff]
      %v286 = vld [vmem:[%s256 + $0x28] sm:$0xff]
      %v287 = vld [vmem:[%s256 + $0x30] sm:$0xff]
      %v288 = vld [vmem:[%s256 + $0x38] sm:$0xff]
      %v289 = vld [vmem:[%s256 + $0x40] sm:$0xff]
      %v290 = vld [vmem:[%s256 + $0x48] sm:$0xff]
      %v291 = vld [vmem:[%s256 + $0x50] sm:$0xff]
      %v292 = vld [vmem:[%s256 + $0x58] sm:$0xff]
      %v293 = vld [vmem:[%s256 + $0x60] sm:$0xff]
      %v294 = vld [vmem:[%s256 + $0x68] sm:$0xff]
      %v295 = vld [vmem:[%s256 + $0x70] sm:$0xff]
      %v296 = vld [vmem:[%s256 + $0x78] sm:$0xff]
      %v297 = vld [vmem:[%s256 + $0x80] sm:$0xff]
      %v298 = vld [vmem:[%s256 + $0x88] sm:$0xff]
      %v299 = vld [vmem:[%s256 + $0x90] sm:$0xff]
      %v300 = vld [vmem:[%s256 + $0x98] sm:$0xff]
      %v301 = vld [vmem:[%s256 + $0xa0] sm:$0xff]
      %v302 = vld [vmem:[%s256 + $0xa8] sm:$0xff]
      %v303 = vld [vmem:[%s256 + $0xb0] sm:$0xff]
      %v304 = vld [vmem:[%s256 + $0xb8] sm:$0xff]
      %v305 = vld [vmem:[%s256 + $0xc0] sm:$0xff]
      %v306 = vld [vmem:[%s256 + $0xc8] sm:$0xff]
      %v307 = vld [vmem:[%s256 + $0xd0] sm:$0xff]
      %v308 = vld [vmem:[%s256 + $0xd8] sm:$0xff]
      %v309 = vld [vmem:[%s256 + $0xe0] sm:$0xff]
      %v310 = vld [vmem:[%s256 + $0xe8] sm:$0xff]
      %v311 = vld [vmem:[%s256 + $0xf0] sm:$0xff]
      %v312 = vld [vmem:[%s256 + $0xf8] sm:$0xff]
      %314 = vst [vmem:[#allocation1] ss:$9 sm:$0xff] %v280
      %v315 = vld [vmem:[#allocation1] sm:$0xff]
      %v316 = vld [vmem:[#allocation1 + $0x9] sm:$0xff]
      %v351 = vunpack.c.l.b16 %v281
      %v352 = vunpack.c.h.b16 %v281
      %v353 = vunpack.c.l.b16 %v282
      %v354 = vunpack.c.h.b16 %v282
      %v355 = vunpack.c.l.b16 %v283
      %v356 = vunpack.c.h.b16 %v283
      %v357 = vunpack.c.l.b16 %v284
      %v358 = vunpack.c.h.b16 %v284
      %v359 = vunpack.c.l.b16 %v285
      %v360 = vunpack.c.h.b16 %v285
      %v361 = vunpack.c.l.b16 %v286
      %v362 = vunpack.c.h.b16 %v286
      %v363 = vunpack.c.l.b16 %v287
      %v364 = vunpack.c.h.b16 %v287
      %v365 = vunpack.c.l.b16 %v288
      %v366 = vunpack.c.h.b16 %v288
      %v367 = vunpack.c.l.b16 %v289
      %v368 = vunpack.c.h.b16 %v289
      %v369 = vunpack.c.l.b16 %v290
      %v370 = vunpack.c.h.b16 %v290
      %v371 = vunpack.c.l.b16 %v291
      %v372 = vunpack.c.h.b16 %v291
      %v373 = vunpack.c.l.b16 %v292
      %v374 = vunpack.c.h.b16 %v292
      %v375 = vunpack.c.l.b16 %v293
      %v376 = vunpack.c.h.b16 %v293
      %v377 = vunpack.c.l.b16 %v294
      %v378 = vunpack.c.h.b16 %v294
      %v379 = vunpack.c.l.b16 %v295
      %v380 = vunpack.c.h.b16 %v295
      %v381 = vunpack.c.l.b16 %v296
      %v382 = vunpack.c.h.b16 %v296
      %v383 = vunpack.c.l.b16 %v297
      %v384 = vunpack.c.h.b16 %v297
      %v385 = vunpack.c.l.b16 %v298
      %v386 = vunpack.c.h.b16 %v298
      %v387 = vunpack.c.l.b16 %v299
      %v388 = vunpack.c.h.b16 %v299
      %v389 = vunpack.c.l.b16 %v300
      %v390 = vunpack.c.h.b16 %v300
      %v391 = vunpack.c.l.b16 %v301
      %v392 = vunpack.c.h.b16 %v301
      %v393 = vunpack.c.l.b16 %v302
      %v394 = vunpack.c.h.b16 %v302
      %v395 = vunpack.c.l.b16 %v303
      %v396 = vunpack.c.h.b16 %v303
      %v397 = vunpack.c.l.b16 %v304
      %v398 = vunpack.c.h.b16 %v304
      %v399 = vunpack.c.l.b16 %v305
      %v400 = vunpack.c.h.b16 %v305
      %v401 = vunpack.c.l.b16 %v306
      %v402 = vunpack.c.h.b16 %v306
      %v403 = vunpack.c.l.b16 %v307
      %v404 = vunpack.c.h.b16 %v307
      %v405 = vunpack.c.l.b16 %v308
      %v406 = vunpack.c.h.b16 %v308
      %v407 = vunpack.c.l.b16 %v309
      %v408 = vunpack.c.h.b16 %v309
      %v409 = vunpack.c.l.b16 %v310
      %v410 = vunpack.c.h.b16 %v310
      %v411 = vunpack.c.l.b16 %v311
      %v412 = vunpack.c.h.b16 %v311
      %v413 = vunpack.c.l.b16 %v312
      %v414 = vunpack.c.h.b16 %v312
      %v415 = vpack.c.b16 %v353, %v351
      %v416 = vpack.c.b16 %v354, %v352
      %v417 = vpack.c.b16 %v357, %v355
      %v418 = vpack.c.b16 %v358, %v356
      %v419 = vpack.c.b16 %v361, %v359
      %v420 = vpack.c.b16 %v362, %v360
      %v421 = vpack.c.b16 %v365, %v363
      %v422 = vpack.c.b16 %v366, %v364
      %v423 = vpack.c.b16 %v369, %v367
      %v424 = vpack.c.b16 %v370, %v368
      %v425 = vpack.c.b16 %v373, %v371
      %v426 = vpack.c.b16 %v374, %v372
      %v427 = vpack.c.b16 %v377, %v375
      %v428 = vpack.c.b16 %v378, %v376
      %v429 = vpack.c.b16 %v381, %v379
      %v430 = vpack.c.b16 %v382, %v380
      %v431 = vpack.c.b16 %v385, %v383
      %v432 = vpack.c.b16 %v386, %v384
      %v433 = vpack.c.b16 %v389, %v387
      %v434 = vpack.c.b16 %v390, %v388
      %v435 = vpack.c.b16 %v393, %v391
      %v436 = vpack.c.b16 %v394, %v392
      %v437 = vpack.c.b16 %v397, %v395
      %v438 = vpack.c.b16 %v398, %v396
      %v439 = vpack.c.b16 %v401, %v399
      %v440 = vpack.c.b16 %v402, %v400
      %v441 = vpack.c.b16 %v405, %v403
      %v442 = vpack.c.b16 %v406, %v404
      %v443 = vpack.c.b16 %v409, %v407
      %v444 = vpack.c.b16 %v410, %v408
      %v445 = vpack.c.b16 %v413, %v411
      %v446 = vpack.c.b16 %v414, %v412
      %479 = vmatpush.bf16.msra.mxu0 %v429
      %480 = vmatpush.bf16.msra.mxu0 %v427
      %481 = vmatpush.bf16.msra.mxu0 %v425
      %482 = vmatpush.bf16.msra.mxu0 %v423
      %483 = vmatpush.bf16.msra.mxu0 %v421
      %484 = vmatpush.bf16.msra.mxu0 %v419
      %485 = vmatpush.bf16.msra.mxu0 %v417
      %486 = vmatpush.bf16.msra.mxu0 %v415
      %487 = vmatmul.bf16.gmra.mxu0 %v315
      %v488 = vpop.f32.mrf.mxu0
      %v489 = vadd.f32 0.0, %v488
      %v490 = vpop.f32.mrf.mxu0
      %491 = vdwg.mxu0
      %492 = vmatpush.bf16.msra.mxu0 %v445
      %493 = vmatpush.bf16.msra.mxu0 %v443
      %494 = vmatpush.bf16.msra.mxu0 %v441
      %495 = vmatpush.bf16.msra.mxu0 %v439
      %496 = vmatpush.bf16.msra.mxu0 %v437
      %497 = vmatpush.bf16.msra.mxu0 %v435
      %498 = vmatpush.bf16.msra.mxu0 %v433
      %499 = vmatpush.bf16.msra.mxu0 %v431
      %500 = vmatmul.bf16.gmra.mxu0 %v316
      %v501 = vpop.f32.mrf.mxu0
      %v502 = vadd.f32 %v489, %v501
      %v503 = vpop.f32.mrf.mxu0
      %504 = vdwg.mxu0
      %505 = vmatpush.bf16.msra.mxu0 %v430
      %506 = vmatpush.bf16.msra.mxu0 %v428
      %507 = vmatpush.bf16.msra.mxu0 %v426
      %508 = vmatpush.bf16.msra.mxu0 %v424
      %509 = vmatpush.bf16.msra.mxu0 %v422
      %510 = vmatpush.bf16.msra.mxu0 %v420
      %511 = vmatpush.bf16.msra.mxu0 %v418
      %512 = vmatpush.bf16.msra.mxu0 %v416
      %513 = vmatmul.bf16.gmra.mxu0 %v315
      %v514 = vpop.f32.mrf.mxu0
      %v515 = vadd.f32 0.0, %v514
      %v516 = vpop.f32.mrf.mxu0
      %517 = vdwg.mxu0
      %518 = vmatpush.bf16.msra.mxu0 %v446
      %519 = vmatpush.bf16.msra.mxu0 %v444
      %520 = vmatpush.bf16.msra.mxu0 %v442
      %521 = vmatpush.bf16.msra.mxu0 %v440
      %522 = vmatpush.bf16.msra.mxu0 %v438
      %523 = vmatpush.bf16.msra.mxu0 %v436
      %524 = vmatpush.bf16.msra.mxu0 %v434
      %525 = vmatpush.bf16.msra.mxu0 %v432
      %526 = vmatmul.bf16.gmra.mxu0 %v316
      %v527 = vpop.f32.mrf.mxu0
      %v528 = vadd.f32 %v515, %v527
      %v529 = vpop.f32.mrf.mxu0
      %530 = vdwg.mxu0
      %v533 = vrot.slane %v528, 6
      %vm534 = vcmask 1041408
      %v535 = vsel %vm534, %v502, %v533
      %v537 = vadd.f32 %v279, %v535
      %538 = vst [vmem:[#allocation2] sm:$0xf] %v537
      %p539 = scmp.eq.s32.totalorder %s21, 1
      // Predicated region
      $region37: #{decoder_arch_net_forward.5} parent=31 // pred_check
        %p540 = pneg %p539
      $region38: #{decoder_arch_net_forward.5} parent=31 // pred_check_branch
        %542 = sbr.rel (%p540) target = $region40
      $region39: #{decoder_arch_net_forward.5} parent=31 // pred_region
        %v543 = vld [vmem:[#allocation2] sm:$0xf]
        %v544 = vld [vmem:[%s262] sm:$0x3]
        %v546 = vperm.slane %v544, 0
        %v547 = vperm.slane %v544, 1
        %v548 = vrot.slane %v547, 6
        %v549 = vsel %vm534, %v546, %v548
        %v551 = vadd.f32 %v543, %v549
        %552 = vst [vmem:[%s272] sm:$0xf] %v551
      $region40: #{decoder_arch_net_forward.5} parent=31 // pred_fallthru
        _
      %s553 = smul.u32 2, %s20
      %p554 = scmp.lt.s32.totalorder %s19, 0
      %s555 = scalar_select %p554, %s19, 0
      %p556 = scmp.lt.s32.totalorder %s553, 1
      %s557 = scalar_select %p556, %s553, 1
      %s558 = smul.addr %s555, 2
      %s559 = sadd.s32 %s557, %s558
      %s560 = smul.addr %s559, 2
      %s561 = scalar_lea.vmem %s3, %s560
      // Predicated region
      $region41: #{decoder_arch_net_forward.5} parent=31 // pred_check
        %p562 = pneg %p135
      $region42: #{decoder_arch_net_forward.5} parent=31 // pred_check_branch
        %564 = sbr.rel (%p562) target = $region44
      $region43: #{decoder_arch_net_forward.5} parent=31 // pred_region
        %s565 = smul.u32 2, %s20
      $region44: #{decoder_arch_net_forward.5} parent=31 // pred_fallthru
        _
      // Predicated region
      $region45: #{decoder_arch_net_forward.5} parent=31 // pred_check
        %p566 = pneg %p135
      $region46: #{decoder_arch_net_forward.5} parent=31 // pred_check_branch
        %568 = sbr.rel (%p566) target = $region48
      $region47: #{decoder_arch_net_forward.5} parent=31 // pred_region
        %s569 = smul.u32 2, %s20
        %p570 = scmp.lt.s32.totalorder %s19, 0
        %s571 = scalar_select %p570, %s19, 0
        %p572 = scmp.lt.s32.totalorder %s569, 1
        %s573 = scalar_select %p572, %s569, 1
        %s574 = smul.addr %s571, 2
        %s575 = sadd.s32 %s573, %s574
        %s576 = smul.addr %s575, 2
        %s577 = scalar_lea.vmem %s3, %s576
      $region48: #{decoder_arch_net_forward.5} parent=31 // pred_fallthru
        _
    $region32: #{decoder_arch_net_forward.5} parent=5 // pred_fallthru
      _
    %p578 = scmp.le.s32.totalorder 2, %s9
    // Predicated region
    $region49: #{decoder_arch_net_forward.5} parent=5 // pred_check
      %p579 = pneg %p578
    $region50: #{decoder_arch_net_forward.5} parent=5 // pred_check_branch
      %581 = sbr.rel (%p579) target = $region52
    $region51: #{decoder_arch_net_forward.5} parent=5 // pred_region
      %s582 = ssub.s32 %s9, 2
    $region52: #{decoder_arch_net_forward.5} parent=5 // pred_fallthru
      _
  $region6: #{decoder_arch_net_forward.5} parent=0 // loop_footer
    %s13 = sadd.s32 1, %s9
  $region7: #{decoder_arch_net_forward.5} parent=0 // loop_footer_branch
    %8 = sbr.rel target = $region3
  $region8: #{decoder_arch_net_forward.5} parent=0 // loop_exit
    _

// kernel: decoder_arch_net_forward.4
$region0: #{decoder_arch_net_forward.4}
  #allocation0 [shape = 'u32[]', space=smem, size = 0x4, offset = 0x4, fixed_abs, tag = 'smem constant byte address 0x4 - core index']
  #allocation1 [shape = 'u32[72,128]{1,0:T(1,128)}', space=vmem, size = 0x9000, scoped, tag = 'internal scratch']
  #allocation2 [shape = 'f32[2,10,24,128]{3,2,1,0:T(8,128)}', space=vmem, size = 0x3c000, scoped, tag = 'scratch operand']
  #allocation3 [shape = 'f32[2,10,24,128]{3,2,1,0:T(8,128)}', space=vmem, size = 0x3c000, scoped, tag = 'scratch operand']
  %s0 = inlined_call_operand.vmem [shape: f32[2,8,8,128], index: 0, kind: input, shape index: {}]
  %s1 = inlined_call_operand.vmem [shape: bf16[2,9,128,128], index: 1, kind: input, shape index: {}]
  %s2 = inlined_call_operand.vmem [shape: f32[2,1,128], index: 2, kind: input, shape index: {}]
  %s3 = inlined_call_operand.vmem [shape: f32[2,8,8,128], index: 3, kind: output, shape index: {}]
  %s4 = sld [smem:[#allocation0]]
  $region22: #{decoder_arch_net_forward.4} parent=0
    _
  %s6 = ssub.s32 1, %s4
  %s7 = scalar_select 0, %s6, %s4
  // Predicated region
  $region2: #{decoder_arch_net_forward.4} parent=0 // pred_check
    _
  $region3: #{decoder_arch_net_forward.4} parent=0 // pred_check_branch
    %9 = sbr.rel (0) target = $region5
  $region4: #{decoder_arch_net_forward.4} parent=0 // pred_region
    _
  $region5: #{decoder_arch_net_forward.4} parent=0 // pred_fallthru
    _
  // Predicated region
  $region6: #{decoder_arch_net_forward.4} parent=0 // pred_check
    _
  $region7: #{decoder_arch_net_forward.4} parent=0 // pred_check_branch
    %11 = sbr.rel (0) target = $region9
  $region8: #{decoder_arch_net_forward.4} parent=0 // pred_region
    _
  $region9: #{decoder_arch_net_forward.4} parent=0 // pred_fallthru
    _
  // Predicated region
  $region10: #{decoder_arch_net_forward.4} parent=0 // pred_check
    _
  $region11: #{decoder_arch_net_forward.4} parent=0 // pred_check_branch
    %13 = sbr.rel (0) target = $region13
  $region12: #{decoder_arch_net_forward.4} parent=0 // pred_region
    _
  $region13: #{decoder_arch_net_forward.4} parent=0 // pred_fallthru
    _
  %14 = vst [vmem:[#allocation2] sm:$0xff] 0.0
  %15 = vst [vmem:[#allocation2 + $0x8] sm:$0xff] 0.0
  %16 = vst [vmem:[#allocation2 + $0x10] sm:$0xff] 0.0
  %17 = vst [vmem:[#allocation2 + $0x18] sm:$0xff] 0.0
  %18 = vst [vmem:[#allocation2 + $0x20] sm:$0xff] 0.0
  %19 = vst [vmem:[#allocation2 + $0x28] sm:$0xff] 0.0
  %20 = vst [vmem:[#allocation2 + $0x30] sm:$0xff] 0.0
  %21 = vst [vmem:[#allocation2 + $0x38] sm:$0xff] 0.0
  %22 = vst [vmem:[#allocation2 + $0x40] sm:$0xff] 0.0
  %23 = vst [vmem:[#allocation2 + $0x48] sm:$0xff] 0.0
  %24 = vst [vmem:[#allocation2 + $0x50] sm:$0xff] 0.0
  %25 = vst [vmem:[#allocation2 + $0x58] sm:$0xff] 0.0
  %26 = vst [vmem:[#allocation2 + $0x60] sm:$0xff] 0.0
  %27 = vst [vmem:[#allocation2 + $0x68] sm:$0xff] 0.0
  %28 = vst [vmem:[#allocation2 + $0x70] sm:$0xff] 0.0
  %29 = vst [vmem:[#allocation2 + $0x78] sm:$0xff] 0.0
  %30 = vst [vmem:[#allocation2 + $0x80] sm:$0xff] 0.0
  %31 = vst [vmem:[#allocation2 + $0x88] sm:$0xff] 0.0
  %32 = vst [vmem:[#allocation2 + $0x90] sm:$0xff] 0.0
  %33 = vst [vmem:[#allocation2 + $0x98] sm:$0xff] 0.0
  %34 = vst [vmem:[#allocation2 + $0xa0] sm:$0xff] 0.0
  %35 = vst [vmem:[#allocation2 + $0xa8] sm:$0xff] 0.0
  %36 = vst [vmem:[#allocation2 + $0xb0] sm:$0xff] 0.0
  %37 = vst [vmem:[#allocation2 + $0xb8] sm:$0xff] 0.0
  %38 = vst [vmem:[#allocation2 + $0xc0] sm:$0xff] 0.0
  %39 = vst [vmem:[#allocation2 + $0xc8] sm:$0xff] 0.0
  %40 = vst [vmem:[#allocation2 + $0xd0] sm:$0xff] 0.0
  %41 = vst [vmem:[#allocation2 + $0xd8] sm:$0xff] 0.0
  %42 = vst [vmem:[#allocation2 + $0xe0] sm:$0xff] 0.0
  %43 = vst [vmem:[#allocation2 + $0xe8] sm:$0xff] 0.0
  %44 = vst [vmem:[#allocation2 + $0xf0] sm:$0xff] 0.0
  %45 = vst [vmem:[#allocation2 + $0xf8] sm:$0xff] 0.0
  %46 = vst [vmem:[#allocation2 + $0x100] sm:$0xff] 0.0
  %47 = vst [vmem:[#allocation2 + $0x108] sm:$0xff] 0.0
  %48 = vst [vmem:[#allocation2 + $0x110] sm:$0xff] 0.0
  %49 = vst [vmem:[#allocation2 + $0x118] sm:$0xff] 0.0
  %50 = vst [vmem:[#allocation2 + $0x120] sm:$0xff] 0.0
  %51 = vst [vmem:[#allocation2 + $0x128] sm:$0xff] 0.0
  %52 = vst [vmem:[#allocation2 + $0x130] sm:$0xff] 0.0
  %53 = vst [vmem:[#allocation2 + $0x138] sm:$0xff] 0.0
  %54 = vst [vmem:[#allocation2 + $0x140] sm:$0xff] 0.0
  %55 = vst [vmem:[#allocation2 + $0x148] sm:$0xff] 0.0
  %56 = vst [vmem:[#allocation2 + $0x150] sm:$0xff] 0.0
  %57 = vst [vmem:[#allocation2 + $0x158] sm:$0xff] 0.0
  %58 = vst [vmem:[#allocation2 + $0x160] sm:$0xff] 0.0
  %59 = vst [vmem:[#allocation2 + $0x168] sm:$0xff] 0.0
  %60 = vst [vmem:[#allocation2 + $0x170] sm:$0xff] 0.0
  %61 = vst [vmem:[#allocation2 + $0x178] sm:$0xff] 0.0
  %62 = vst [vmem:[#allocation2 + $0x180] sm:$0xff] 0.0
  %63 = vst [vmem:[#allocation2 + $0x188] sm:$0xff] 0.0
  %64 = vst [vmem:[#allocation2 + $0x190] sm:$0xff] 0.0
  %65 = vst [vmem:[#allocation2 + $0x198] sm:$0xff] 0.0
  %66 = vst [vmem:[#allocation2 + $0x1a0] sm:$0xff] 0.0
  %67 = vst [vmem:[#allocation2 + $0x1a8] sm:$0xff] 0.0
  %68 = vst [vmem:[#allocation2 + $0x1b0] sm:$0xff] 0.0
  %69 = vst [vmem:[#allocation2 + $0x1b8] sm:$0xff] 0.0
  %70 = vst [vmem:[#allocation2 + $0x1c0] sm:$0xff] 0.0
  %71 = vst [vmem:[#allocation2 + $0x1c8] sm:$0xff] 0.0
  %72 = vst [vmem:[#allocation2 + $0x1d0] sm:$0xff] 0.0
  %73 = vst [vmem:[#allocation2 + $0x1d8] sm:$0xff] 0.0
  %74 = vst [vmem:[#allocation3] sm:$0xff] 0.0
  %75 = vst [vmem:[#allocation3 + $0x8] sm:$0xff] 0.0
  %76 = vst [vmem:[#allocation3 + $0x10] sm:$0xff] 0.0
  %77 = vst [vmem:[#allocation3 + $0x18] sm:$0xff] 0.0
  %78 = vst [vmem:[#allocation3 + $0x20] sm:$0xff] 0.0
  %79 = vst [vmem:[#allocation3 + $0x28] sm:$0xff] 0.0
  %80 = vst [vmem:[#allocation3 + $0x30] sm:$0xff] 0.0
  %81 = vst [vmem:[#allocation3 + $0x38] sm:$0xff] 0.0
  %82 = vst [vmem:[#allocation3 + $0x40] sm:$0xff] 0.0
  %83 = vst [vmem:[#allocation3 + $0x48] sm:$0xff] 0.0
  %84 = vst [vmem:[#allocation3 + $0x50] sm:$0xff] 0.0
  %85 = vst [vmem:[#allocation3 + $0x58] sm:$0xff] 0.0
  %86 = vst [vmem:[#allocation3 + $0x60] sm:$0xff] 0.0
  %87 = vst [vmem:[#allocation3 + $0x68] sm:$0xff] 0.0
  %88 = vst [vmem:[#allocation3 + $0x70] sm:$0xff] 0.0
  %89 = vst [vmem:[#allocation3 + $0x78] sm:$0xff] 0.0
  %90 = vst [vmem:[#allocation3 + $0x80] sm:$0xff] 0.0
  %91 = vst [vmem:[#allocation3 + $0x88] sm:$0xff] 0.0
  %92 = vst [vmem:[#allocation3 + $0x90] sm:$0xff] 0.0
  %93 = vst [vmem:[#allocation3 + $0x98] sm:$0xff] 0.0
  %94 = vst [vmem:[#allocation3 + $0xa0] sm:$0xff] 0.0
  %95 = vst [vmem:[#allocation3 + $0xa8] sm:$0xff] 0.0
  %96 = vst [vmem:[#allocation3 + $0xb0] sm:$0xff] 0.0
  %97 = vst [vmem:[#allocation3 + $0xb8] sm:$0xff] 0.0
  %98 = vst [vmem:[#allocation3 + $0xc0] sm:$0xff] 0.0
  %99 = vst [vmem:[#allocation3 + $0xc8] sm:$0xff] 0.0
  %100 = vst [vmem:[#allocation3 + $0xd0] sm:$0xff] 0.0
  %101 = vst [vmem:[#allocation3 + $0xd8] sm:$0xff] 0.0
  %102 = vst [vmem:[#allocation3 + $0xe0] sm:$0xff] 0.0
  %103 = vst [vmem:[#allocation3 + $0xe8] sm:$0xff] 0.0
  %104 = vst [vmem:[#allocation3 + $0xf0] sm:$0xff] 0.0
  %105 = vst [vmem:[#allocation3 + $0xf8] sm:$0xff] 0.0
  %106 = vst [vmem:[#allocation3 + $0x100] sm:$0xff] 0.0
  %107 = vst [vmem:[#allocation3 + $0x108] sm:$0xff] 0.0
  %108 = vst [vmem:[#allocation3 + $0x110] sm:$0xff] 0.0
  %109 = vst [vmem:[#allocation3 + $0x118] sm:$0xff] 0.0
  %110 = vst [vmem:[#allocation3 + $0x120] sm:$0xff] 0.0
  %111 = vst [vmem:[#allocation3 + $0x128] sm:$0xff] 0.0
  %112 = vst [vmem:[#allocation3 + $0x130] sm:$0xff] 0.0
  %113 = vst [vmem:[#allocation3 + $0x138] sm:$0xff] 0.0
  %114 = vst [vmem:[#allocation3 + $0x140] sm:$0xff] 0.0
  %115 = vst [vmem:[#allocation3 + $0x148] sm:$0xff] 0.0
  %116 = vst [vmem:[#allocation3 + $0x150] sm:$0xff] 0.0
  %117 = vst [vmem:[#allocation3 + $0x158] sm:$0xff] 0.0
  %118 = vst [vmem:[#allocation3 + $0x160] sm:$0xff] 0.0
  %119 = vst [vmem:[#allocation3 + $0x168] sm:$0xff] 0.0
  %120 = vst [vmem:[#allocation3 + $0x170] sm:$0xff] 0.0
  %121 = vst [vmem:[#allocation3 + $0x178] sm:$0xff] 0.0
  %122 = vst [vmem:[#allocation3 + $0x180] sm:$0xff] 0.0
  %123 = vst [vmem:[#allocation3 + $0x188] sm:$0xff] 0.0
  %124 = vst [vmem:[#allocation3 + $0x190] sm:$0xff] 0.0
  %125 = vst [vmem:[#allocation3 + $0x198] sm:$0xff] 0.0
  %126 = vst [vmem:[#allocation3 + $0x1a0] sm:$0xff] 0.0
  %127 = vst [vmem:[#allocation3 + $0x1a8] sm:$0xff] 0.0
  %128 = vst [vmem:[#allocation3 + $0x1b0] sm:$0xff] 0.0
  %129 = vst [vmem:[#allocation3 + $0x1b8] sm:$0xff] 0.0
  %130 = vst [vmem:[#allocation3 + $0x1c0] sm:$0xff] 0.0
  %131 = vst [vmem:[#allocation3 + $0x1c8] sm:$0xff] 0.0
  %132 = vst [vmem:[#allocation3 + $0x1d0] sm:$0xff] 0.0
  %133 = vst [vmem:[#allocation3 + $0x1d8] sm:$0xff] 0.0
  %v134 = vld [vmem:[%s0] sm:$0xff]
  %v135 = vld [vmem:[%s0 + $0x8] sm:$0xff]
  %v136 = vld [vmem:[%s0 + $0x10] sm:$0xff]
  %v137 = vld [vmem:[%s0 + $0x18] sm:$0xff]
  %v138 = vld [vmem:[%s0 + $0x20] sm:$0xff]
  %v139 = vld [vmem:[%s0 + $0x28] sm:$0xff]
  %v140 = vld [vmem:[%s0 + $0x30] sm:$0xff]
  %v141 = vld [vmem:[%s0 + $0x38] sm:$0xff]
  %v142 = vld [vmem:[%s0 + $0x40] sm:$0xff]
  %v143 = vld [vmem:[%s0 + $0x48] sm:$0xff]
  %v144 = vld [vmem:[%s0 + $0x50] sm:$0xff]
  %v145 = vld [vmem:[%s0 + $0x58] sm:$0xff]
  %v146 = vld [vmem:[%s0 + $0x60] sm:$0xff]
  %v147 = vld [vmem:[%s0 + $0x68] sm:$0xff]
  %v148 = vld [vmem:[%s0 + $0x70] sm:$0xff]
  %v149 = vld [vmem:[%s0 + $0x78] sm:$0xff]
  %s150 = scalar_lea.vmem [#allocation2], 24
  %151 = vst [vmem:[%s150 + $0x8] sm:$0xff] %v134
  %152 = vst [vmem:[%s150 + $0x20] sm:$0xff] %v135
  %153 = vst [vmem:[%s150 + $0x38] sm:$0xff] %v136
  %154 = vst [vmem:[%s150 + $0x50] sm:$0xff] %v137
  %155 = vst [vmem:[%s150 + $0x68] sm:$0xff] %v138
  %156 = vst [vmem:[%s150 + $0x80] sm:$0xff] %v139
  %157 = vst [vmem:[%s150 + $0x98] sm:$0xff] %v140
  %158 = vst [vmem:[%s150 + $0xb0] sm:$0xff] %v141
  %159 = vst [vmem:[%s150 + $0xf8] sm:$0xff] %v142
  %160 = vst [vmem:[%s150 + $0x110] sm:$0xff] %v143
  %161 = vst [vmem:[%s150 + $0x128] sm:$0xff] %v144
  %162 = vst [vmem:[%s150 + $0x140] sm:$0xff] %v145
  %163 = vst [vmem:[%s150 + $0x158] sm:$0xff] %v146
  %164 = vst [vmem:[%s150 + $0x170] sm:$0xff] %v147
  %165 = vst [vmem:[%s150 + $0x188] sm:$0xff] %v148
  %166 = vst [vmem:[%s150 + $0x1a0] sm:$0xff] %v149
  %v167 = vld [vmem:[#allocation2] sm:$0xff]
  %v168 = vld [vmem:[#allocation2 + $0x8] sm:$0xff]
  %v169 = vld [vmem:[#allocation2 + $0x10] sm:$0xff]
  %v170 = vld [vmem:[#allocation2 + $0x18] sm:$0xff]
  %v171 = vld [vmem:[#allocation2 + $0x20] sm:$0xff]
  %v172 = vld [vmem:[#allocation2 + $0x28] sm:$0xff]
  %v173 = vld [vmem:[#allocation2 + $0x30] sm:$0xff]
  %v174 = vld [vmem:[#allocation2 + $0x38] sm:$0xff]
  %v175 = vld [vmem:[#allocation2 + $0x40] sm:$0xff]
  %v176 = vld [vmem:[#allocation2 + $0x48] sm:$0xff]
  %v177 = vld [vmem:[#allocation2 + $0x50] sm:$0xff]
  %v178 = vld [vmem:[#allocation2 + $0x58] sm:$0xff]
  %v179 = vld [vmem:[#allocation2 + $0x60] sm:$0xff]
  %v180 = vld [vmem:[#allocation2 + $0x68] sm:$0xff]
  %v181 = vld [vmem:[#allocation2 + $0x70] sm:$0xff]
  %v182 = vld [vmem:[#allocation2 + $0x78] sm:$0xff]
  %v183 = vld [vmem:[#allocation2 + $0x80] sm:$0xff]
  %v184 = vld [vmem:[#allocation2 + $0x88] sm:$0xff]
  %v185 = vld [vmem:[#allocation2 + $0x90] sm:$0xff]
  %v186 = vld [vmem:[#allocation2 + $0x98] sm:$0xff]
  %v187 = vld [vmem:[#allocation2 + $0xa0] sm:$0xff]
  %v188 = vld [vmem:[#allocation2 + $0xa8] sm:$0xff]
  %v189 = vld [vmem:[#allocation2 + $0xb0] sm:$0xff]
  %v190 = vld [vmem:[#allocation2 + $0xb8] sm:$0xff]
  %v191 = vld [vmem:[#allocation2 + $0xc0] sm:$0xff]
  %v192 = vld [vmem:[#allocation2 + $0xc8] sm:$0xff]
  %v193 = vld [vmem:[#allocation2 + $0xd0] sm:$0xff]
  %v194 = vld [vmem:[#allocation2 + $0xd8] sm:$0xff]
  %v195 = vld [vmem:[#allocation2 + $0xe0] sm:$0xff]
  %v196 = vld [vmem:[#allocation2 + $0xe8] sm:$0xff]
  %v197 = vld [vmem:[#allocation2 + $0xf0] sm:$0xff]
  %v198 = vld [vmem:[#allocation2 + $0xf8] sm:$0xff]
  %v199 = vld [vmem:[#allocation2 + $0x100] sm:$0xff]
  %v200 = vld [vmem:[#allocation2 + $0x108] sm:$0xff]
  %v201 = vld [vmem:[#allocation2 + $0x110] sm:$0xff]
  %v202 = vld [vmem:[#allocation2 + $0x118] sm:$0xff]
  %v203 = vld [vmem:[#allocation2 + $0x120] sm:$0xff]
  %v204 = vld [vmem:[#allocation2 + $0x128] sm:$0xff]
  %v205 = vld [vmem:[#allocation2 + $0x130] sm:$0xff]
  %v206 = vld [vmem:[#allocation2 + $0x138] sm:$0xff]
  %v207 = vld [vmem:[#allocation2 + $0x140] sm:$0xff]
  %v208 = vld [vmem:[#allocation2 + $0x148] sm:$0xff]
  %v209 = vld [vmem:[#allocation2 + $0x150] sm:$0xff]
  %v210 = vld [vmem:[#allocation2 + $0x158] sm:$0xff]
  %v211 = vld [vmem:[#allocation2 + $0x160] sm:$0xff]
  %v212 = vld [vmem:[#allocation2 + $0x168] sm:$0xff]
  %v213 = vld [vmem:[#allocation2 + $0x170] sm:$0xff]
  %v214 = vld [vmem:[#allocation2 + $0x178] sm:$0xff]
  %v215 = vld [vmem:[#allocation2 + $0x180] sm:$0xff]
  %v216 = vld [vmem:[#allocation2 + $0x188] sm:$0xff]
  %v217 = vld [vmem:[#allocation2 + $0x190] sm:$0xff]
  %v218 = vld [vmem:[#allocation2 + $0x198] sm:$0xff]
  %v219 = vld [vmem:[#allocation2 + $0x1a0] sm:$0xff]
  %v220 = vld [vmem:[#allocation2 + $0x1a8] sm:$0xff]
  %v221 = vld [vmem:[#allocation2 + $0x1b0] sm:$0xff]
  %v222 = vld [vmem:[#allocation2 + $0x1b8] sm:$0xff]
  %v223 = vld [vmem:[#allocation2 + $0x1c0] sm:$0xff]
  %v224 = vld [vmem:[#allocation2 + $0x1c8] sm:$0xff]
  %v225 = vld [vmem:[#allocation2 + $0x1d0] sm:$0xff]
  %v226 = vld [vmem:[#allocation2 + $0x1d8] sm:$0xff]
  %v227 = vld [vmem:[%s2] sm:$0x1]
  %v229 = vperm.slane %v227, 0
  %vm263 = vcmask 1040384
  %v264 = vrot.slane %v167, 7
  %v265 = vrot.slane %v168, 7
  %v266 = vsel %vm263, %v264, %v265
  %v267 = vrot.slane %v170, 7
  %v268 = vrot.slane %v171, 7
  %v269 = vsel %vm263, %v267, %v268
  %v270 = vrot.slane %v173, 7
  %v271 = vrot.slane %v174, 7
  %v272 = vsel %vm263, %v270, %v271
  %v273 = vrot.slane %v176, 7
  %v274 = vrot.slane %v177, 7
  %v275 = vsel %vm263, %v273, %v274
  %v276 = vrot.slane %v179, 7
  %v277 = vrot.slane %v180, 7
  %v278 = vsel %vm263, %v276, %v277
  %v279 = vrot.slane %v182, 7
  %v280 = vrot.slane %v183, 7
  %v281 = vsel %vm263, %v279, %v280
  %v282 = vrot.slane %v185, 7
  %v283 = vrot.slane %v186, 7
  %v284 = vsel %vm263, %v282, %v283
  %v285 = vrot.slane %v188, 7
  %v286 = vrot.slane %v189, 7
  %v287 = vsel %vm263, %v285, %v286
  %v288 = vrot.slane %v197, 7
  %v289 = vrot.slane %v198, 7
  %v290 = vsel %vm263, %v288, %v289
  %v291 = vrot.slane %v200, 7
  %v292 = vrot.slane %v201, 7
  %v293 = vsel %vm263, %v291, %v292
  %v294 = vrot.slane %v203, 7
  %v295 = vrot.slane %v204, 7
  %v296 = vsel %vm263, %v294, %v295
  %v297 = vrot.slane %v206, 7
  %v298 = vrot.slane %v207, 7
  %v299 = vsel %vm263, %v297, %v298
  %v300 = vrot.slane %v209, 7
  %v301 = vrot.slane %v210, 7
  %v302 = vsel %vm263, %v300, %v301
  %v303 = vrot.slane %v212, 7
  %v304 = vrot.slane %v213, 7
  %v305 = vsel %vm263, %v303, %v304
  %v306 = vrot.slane %v215, 7
  %v307 = vrot.slane %v216, 7
  %v308 = vsel %vm263, %v306, %v307
  %v309 = vrot.slane %v218, 7
  %v310 = vrot.slane %v219, 7
  %v311 = vsel %vm263, %v309, %v310
  %v328 = vpack.c.bf16 %v269, %v266
  %v329 = vpack.c.bf16 %v275, %v272
  %v330 = vpack.c.bf16 %v281, %v278
  %v331 = vpack.c.bf16 %v287, %v284
  %v332 = vpack.c.bf16 %v293, %v290
  %v333 = vpack.c.bf16 %v299, %v296
  %v334 = vpack.c.bf16 %v305, %v302
  %v335 = vpack.c.bf16 %v311, %v308
  %v336 = vld [vmem:[%s1] sm:$0xf]
  %v337 = vld [vmem:[%s1 + $0x4] sm:$0xf]
  %v338 = vld [vmem:[%s1 + $0x8] sm:$0xf]
  %v339 = vld [vmem:[%s1 + $0xc] sm:$0xf]
  %v340 = vld [vmem:[%s1 + $0x10] sm:$0xf]
  %v341 = vld [vmem:[%s1 + $0x14] sm:$0xf]
  %v342 = vld [vmem:[%s1 + $0x18] sm:$0xf]
  %v343 = vld [vmem:[%s1 + $0x1c] sm:$0xf]
  %v344 = vld [vmem:[%s1 + $0x20] sm:$0xf]
  %v345 = vld [vmem:[%s1 + $0x24] sm:$0xf]
  %v346 = vld [vmem:[%s1 + $0x28] sm:$0xf]
  %v347 = vld [vmem:[%s1 + $0x2c] sm:$0xf]
  %v348 = vld [vmem:[%s1 + $0x30] sm:$0xf]
  %v349 = vld [vmem:[%s1 + $0x34] sm:$0xf]
  %v350 = vld [vmem:[%s1 + $0x38] sm:$0xf]
  %v351 = vld [vmem:[%s1 + $0x3c] sm:$0xf]
  %v368 = vunpack.c.l.b16 %v336
  %v369 = vunpack.c.l.b16 %v337
  %v370 = vunpack.c.l.b16 %v338
  %v371 = vunpack.c.l.b16 %v339
  %v372 = vunpack.c.l.b16 %v340
  %v373 = vunpack.c.l.b16 %v341
  %v374 = vunpack.c.l.b16 %v342
  %v375 = vunpack.c.l.b16 %v343
  %v376 = vunpack.c.l.b16 %v344
  %v377 = vunpack.c.l.b16 %v345
  %v378 = vunpack.c.l.b16 %v346
  %v379 = vunpack.c.l.b16 %v347
  %v380 = vunpack.c.l.b16 %v348
  %v381 = vunpack.c.l.b16 %v349
  %v382 = vunpack.c.l.b16 %v350
  %v383 = vunpack.c.l.b16 %v351
  %v384 = vpack.c.b16 %v369, %v368
  %v385 = vpack.c.b16 %v371, %v370
  %v386 = vpack.c.b16 %v373, %v372
  %v387 = vpack.c.b16 %v375, %v374
  %v388 = vpack.c.b16 %v377, %v376
  %v389 = vpack.c.b16 %v379, %v378
  %v390 = vpack.c.b16 %v381, %v380
  %v391 = vpack.c.b16 %v383, %v382
  %400 = vmatpush.bf16.msra.mxu0 %v391
  %401 = vmatpush.bf16.msra.mxu0 %v390
  %402 = vmatpush.bf16.msra.mxu0 %v389
  %403 = vmatpush.bf16.msra.mxu0 %v388
  %404 = vmatpush.bf16.msra.mxu0 %v387
  %405 = vmatpush.bf16.msra.mxu0 %v386
  %406 = vmatpush.bf16.msra.mxu0 %v385
  %407 = vmatpush.bf16.msra.mxu0 %v384
  %408 = vmatmul.bf16.gmra.mxu0 %v328
  %v409 = vpop.f32.mrf.mxu0
  %v410 = vadd.f32 0.0, %v409
  %v411 = vpop.f32.mrf.mxu0
  %v412 = vadd.f32 0.0, %v411
  %413 = vmatmul.bf16.gmra.mxu0 %v329
  %v414 = vpop.f32.mrf.mxu0
  %v415 = vadd.f32 0.0, %v414
  %v416 = vpop.f32.mrf.mxu0
  %v417 = vadd.f32 0.0, %v416
  %418 = vmatmul.bf16.gmra.mxu0 %v330
  %v419 = vpop.f32.mrf.mxu0
  %v420 = vadd.f32 0.0, %v419
  %v421 = vpop.f32.mrf.mxu0
  %v422 = vadd.f32 0.0, %v421
  %423 = vmatmul.bf16.gmra.mxu0 %v331
  %v424 = vpop.f32.mrf.mxu0
  %v425 = vadd.f32 0.0, %v424
  %v426 = vpop.f32.mrf.mxu0
  %v427 = vadd.f32 0.0, %v426
  %428 = vmatmul.bf16.gmra.mxu0 %v332
  %v429 = vpop.f32.mrf.mxu0
  %v430 = vadd.f32 0.0, %v429
  %v431 = vpop.f32.mrf.mxu0
  %v432 = vadd.f32 0.0, %v431
  %433 = vmatmul.bf16.gmra.mxu0 %v333
  %v434 = vpop.f32.mrf.mxu0
  %v435 = vadd.f32 0.0, %v434
  %v436 = vpop.f32.mrf.mxu0
  %v437 = vadd.f32 0.0, %v436
  %438 = vmatmul.bf16.gmra.mxu0 %v334
  %v439 = vpop.f32.mrf.mxu0
  %v440 = vadd.f32 0.0, %v439
  %v441 = vpop.f32.mrf.mxu0
  %v442 = vadd.f32 0.0, %v441
  %443 = vmatmul.bf16.gmra.mxu0 %v335
  %v444 = vpop.f32.mrf.mxu0
  %v445 = vadd.f32 0.0, %v444
  %v446 = vpop.f32.mrf.mxu0
  %v447 = vadd.f32 0.0, %v446
  %448 = vdwg.mxu0
  %v449 = vadd.f32 %v229, %v410
  %v450 = vadd.f32 %v229, %v412
  %v451 = vadd.f32 %v229, %v415
  %v452 = vadd.f32 %v229, %v417
  %v453 = vadd.f32 %v229, %v420
  %v454 = vadd.f32 %v229, %v422
  %v455 = vadd.f32 %v229, %v425
  %v456 = vadd.f32 %v229, %v427
  %v457 = vadd.f32 %v229, %v430
  %v458 = vadd.f32 %v229, %v432
  %v459 = vadd.f32 %v229, %v435
  %v460 = vadd.f32 %v229, %v437
  %v461 = vadd.f32 %v229, %v440
  %v462 = vadd.f32 %v229, %v442
  %v463 = vadd.f32 %v229, %v445
  %v464 = vadd.f32 %v229, %v447
  %v465 = vpack.c.bf16 %v171, %v168
  %v466 = vpack.c.bf16 %v177, %v174
  %v467 = vpack.c.bf16 %v183, %v180
  %v468 = vpack.c.bf16 %v189, %v186
  %v469 = vpack.c.bf16 %v201, %v198
  %v470 = vpack.c.bf16 %v207, %v204
  %v471 = vpack.c.bf16 %v213, %v210
  %v472 = vpack.c.bf16 %v219, %v216
  %s473 = scalar_lea.vmem %s1, 64
  %v474 = vld [vmem:[%s473] sm:$0xf]
  %v475 = vld [vmem:[%s473 + $0x4] sm:$0xf]
  %v476 = vld [vmem:[%s473 + $0x8] sm:$0xf]
  %v477 = vld [vmem:[%s473 + $0xc] sm:$0xf]
  %v478 = vld [vmem:[%s473 + $0x10] sm:$0xf]
  %v479 = vld [vmem:[%s473 + $0x14] sm:$0xf]
  %v480 = vld [vmem:[%s473 + $0x18] sm:$0xf]
  %v481 = vld [vmem:[%s473 + $0x1c] sm:$0xf]
  %v482 = vld [vmem:[%s473 + $0x20] sm:$0xf]
  %v483 = vld [vmem:[%s473 + $0x24] sm:$0xf]
  %v484 = vld [vmem:[%s473 + $0x28] sm:$0xf]
  %v485 = vld [vmem:[%s473 + $0x2c] sm:$0xf]
  %v486 = vld [vmem:[%s473 + $0x30] sm:$0xf]
  %v487 = vld [vmem:[%s473 + $0x34] sm:$0xf]
  %v488 = vld [vmem:[%s473 + $0x38] sm:$0xf]
  %v489 = vld [vmem:[%s473 + $0x3c] sm:$0xf]
  %v506 = vunpack.c.l.b16 %v474
  %v507 = vunpack.c.l.b16 %v475
  %v508 = vunpack.c.l.b16 %v476
  %v509 = vunpack.c.l.b16 %v477
  %v510 = vunpack.c.l.b16 %v478
  %v511 = vunpack.c.l.b16 %v479
  %v512 = vunpack.c.l.b16 %v480
  %v513 = vunpack.c.l.b16 %v481
  %v514 = vunpack.c.l.b16 %v482
  %v515 = vunpack.c.l.b16 %v483
  %v516 = vunpack.c.l.b16 %v484
  %v517 = vunpack.c.l.b16 %v485
  %v518 = vunpack.c.l.b16 %v486
  %v519 = vunpack.c.l.b16 %v487
  %v520 = vunpack.c.l.b16 %v488
  %v521 = vunpack.c.l.b16 %v489
  %v522 = vpack.c.b16 %v507, %v506
  %v523 = vpack.c.b16 %v509, %v508
  %v524 = vpack.c.b16 %v511, %v510
  %v525 = vpack.c.b16 %v513, %v512
  %v526 = vpack.c.b16 %v515, %v514
  %v527 = vpack.c.b16 %v517, %v516
  %v528 = vpack.c.b16 %v519, %v518
  %v529 = vpack.c.b16 %v521, %v520
  %538 = vmatpush.bf16.msra.mxu0 %v529
  %539 = vmatpush.bf16.msra.mxu0 %v528
  %540 = vmatpush.bf16.msra.mxu0 %v527
  %541 = vmatpush.bf16.msra.mxu0 %v526
  %542 = vmatpush.bf16.msra.mxu0 %v525
  %543 = vmatpush.bf16.msra.mxu0 %v524
  %544 = vmatpush.bf16.msra.mxu0 %v523
  %545 = vmatpush.bf16.msra.mxu0 %v522
  %546 = vmatmul.bf16.gmra.mxu0 %v465
  %v547 = vpop.f32.mrf.mxu0
  %v548 = vadd.f32 0.0, %v547
  %v549 = vpop.f32.mrf.mxu0
  %v550 = vadd.f32 0.0, %v549
  %551 = vmatmul.bf16.gmra.mxu0 %v466
  %v552 = vpop.f32.mrf.mxu0
  %v553 = vadd.f32 0.0, %v552
  %v554 = vpop.f32.mrf.mxu0
  %v555 = vadd.f32 0.0, %v554
  %556 = vmatmul.bf16.gmra.mxu0 %v467
  %v557 = vpop.f32.mrf.mxu0
  %v558 = vadd.f32 0.0, %v557
  %v559 = vpop.f32.mrf.mxu0
  %v560 = vadd.f32 0.0, %v559
  %561 = vmatmul.bf16.gmra.mxu0 %v468
  %v562 = vpop.f32.mrf.mxu0
  %v563 = vadd.f32 0.0, %v562
  %v564 = vpop.f32.mrf.mxu0
  %v565 = vadd.f32 0.0, %v564
  %566 = vmatmul.bf16.gmra.mxu0 %v469
  %v567 = vpop.f32.mrf.mxu0
  %v568 = vadd.f32 0.0, %v567
  %v569 = vpop.f32.mrf.mxu0
  %v570 = vadd.f32 0.0, %v569
  %571 = vmatmul.bf16.gmra.mxu0 %v470
  %v572 = vpop.f32.mrf.mxu0
  %v573 = vadd.f32 0.0, %v572
  %v574 = vpop.f32.mrf.mxu0
  %v575 = vadd.f32 0.0, %v574
  %576 = vmatmul.bf16.gmra.mxu0 %v471
  %v577 = vpop.f32.mrf.mxu0
  %v578 = vadd.f32 0.0, %v577
  %v579 = vpop.f32.mrf.mxu0
  %v580 = vadd.f32 0.0, %v579
  %581 = vmatmul.bf16.gmra.mxu0 %v472
  %v582 = vpop.f32.mrf.mxu0
  %v583 = vadd.f32 0.0, %v582
  %v584 = vpop.f32.mrf.mxu0
  %v585 = vadd.f32 0.0, %v584
  %586 = vdwg.mxu0
  %v587 = vadd.f32 %v449, %v548
  %v588 = vadd.f32 %v450, %v550
  %v589 = vadd.f32 %v451, %v553
  %v590 = vadd.f32 %v452, %v555
  %v591 = vadd.f32 %v453, %v558
  %v592 = vadd.f32 %v454, %v560
  %v593 = vadd.f32 %v455, %v563
  %v594 = vadd.f32 %v456, %v565
  %v595 = vadd.f32 %v457, %v568
  %v596 = vadd.f32 %v458, %v570
  %v597 = vadd.f32 %v459, %v573
  %v598 = vadd.f32 %v460, %v575
  %v599 = vadd.f32 %v461, %v578
  %v600 = vadd.f32 %v462, %v580
  %v601 = vadd.f32 %v463, %v583
  %v602 = vadd.f32 %v464, %v585
  %vm619 = vcmask 1046528
  %v620 = vrot.slane %v168, 1
  %v621 = vrot.slane %v169, 1
  %v622 = vsel %vm619, %v620, %v621
  %v623 = vrot.slane %v171, 1
  %v624 = vrot.slane %v172, 1
  %v625 = vsel %vm619, %v623, %v624
  %v626 = vrot.slane %v174, 1
  %v627 = vrot.slane %v175, 1
  %v628 = vsel %vm619, %v626, %v627
  %v629 = vrot.slane %v177, 1
  %v630 = vrot.slane %v178, 1
  %v631 = vsel %vm619, %v629, %v630
  %v632 = vrot.slane %v180, 1
  %v633 = vrot.slane %v181, 1
  %v634 = vsel %vm619, %v632, %v633
  %v635 = vrot.slane %v183, 1
  %v636 = vrot.slane %v184, 1
  %v637 = vsel %vm619, %v635, %v636
  %v638 = vrot.slane %v186, 1
  %v639 = vrot.slane %v187, 1
  %v640 = vsel %vm619, %v638, %v639
  %v641 = vrot.slane %v189, 1
  %v642 = vrot.slane %v190, 1
  %v643 = vsel %vm619, %v641, %v642
  %v644 = vrot.slane %v198, 1
  %v645 = vrot.slane %v199, 1
  %v646 = vsel %vm619, %v644, %v645
  %v647 = vrot.slane %v201, 1
  %v648 = vrot.slane %v202, 1
  %v649 = vsel %vm619, %v647, %v648
  %v650 = vrot.slane %v204, 1
  %v651 = vrot.slane %v205, 1
  %v652 = vsel %vm619, %v650, %v651
  %v653 = vrot.slane %v207, 1
  %v654 = vrot.slane %v208, 1
  %v655 = vsel %vm619, %v653, %v654
  %v656 = vrot.slane %v210, 1
  %v657 = vrot.slane %v211, 1
  %v658 = vsel %vm619, %v656, %v657
  %v659 = vrot.slane %v213, 1
  %v660 = vrot.slane %v214, 1
  %v661 = vsel %vm619, %v659, %v660
  %v662 = vrot.slane %v216, 1
  %v663 = vrot.slane %v217, 1
  %v664 = vsel %vm619, %v662, %v663
  %v665 = vrot.slane %v219, 1
  %v666 = vrot.slane %v220, 1
  %v667 = vsel %vm619, %v665, %v666
  %v684 = vpack.c.bf16 %v625, %v622
  %v685 = vpack.c.bf16 %v631, %v628
  %v686 = vpack.c.bf16 %v637, %v634
  %v687 = vpack.c.bf16 %v643, %v640
  %v688 = vpack.c.bf16 %v649, %v646
  %v689 = vpack.c.bf16 %v655, %v652
  %v690 = vpack.c.bf16 %v661, %v658
  %v691 = vpack.c.bf16 %v667, %v664
  %s692 = scalar_lea.vmem %s1, 128
  %v693 = vld [vmem:[%s692] sm:$0xf]
  %v694 = vld [vmem:[%s692 + $0x4] sm:$0xf]
  %v695 = vld [vmem:[%s692 + $0x8] sm:$0xf]
  %v696 = vld [vmem:[%s692 + $0xc] sm:$0xf]
  %v697 = vld [vmem:[%s692 + $0x10] sm:$0xf]
  %v698 = vld [vmem:[%s692 + $0x14] sm:$0xf]
  %v699 = vld [vmem:[%s692 + $0x18] sm:$0xf]
  %v700 = vld [vmem:[%s692 + $0x1c] sm:$0xf]
  %v701 = vld [vmem:[%s692 + $0x20] sm:$0xf]
  %v702 = vld [vmem:[%s692 + $0x24] sm:$0xf]
  %v703 = vld [vmem:[%s692 + $0x28] sm:$0xf]
  %v704 = vld [vmem:[%s692 + $0x2c] sm:$0xf]
  %v705 = vld [vmem:[%s692 + $0x30] sm:$0xf]
  %v706 = vld [vmem:[%s692 + $0x34] sm:$0xf]
  %v707 = vld [vmem:[%s692 + $0x38] sm:$0xf]
  %v708 = vld [vmem:[%s692 + $0x3c] sm:$0xf]
  %v725 = vunpack.c.l.b16 %v693
  %v726 = vunpack.c.l.b16 %v694
  %v727 = vunpack.c.l.b16 %v695
  %v728 = vunpack.c.l.b16 %v696
  %v729 = vunpack.c.l.b16 %v697
  %v730 = vunpack.c.l.b16 %v698
  %v731 = vunpack.c.l.b16 %v699
  %v732 = vunpack.c.l.b16 %v700
  %v733 = vunpack.c.l.b16 %v701
  %v734 = vunpack.c.l.b16 %v702
  %v735 = vunpack.c.l.b16 %v703
  %v736 = vunpack.c.l.b16 %v704
  %v737 = vunpack.c.l.b16 %v705
  %v738 = vunpack.c.l.b16 %v706
  %v739 = vunpack.c.l.b16 %v707
  %v740 = vunpack.c.l.b16 %v708
  %v741 = vpack.c.b16 %v726, %v725
  %v742 = vpack.c.b16 %v728, %v727
  %v743 = vpack.c.b16 %v730, %v729
  %v744 = vpack.c.b16 %v732, %v731
  %v745 = vpack.c.b16 %v734, %v733
  %v746 = vpack.c.b16 %v736, %v735
  %v747 = vpack.c.b16 %v738, %v737
  %v748 = vpack.c.b16 %v740, %v739
  %757 = vmatpush.bf16.msra.mxu0 %v748
  %758 = vmatpush.bf16.msra.mxu0 %v747
  %759 = vmatpush.bf16.msra.mxu0 %v746
  %760 = vmatpush.bf16.msra.mxu0 %v745
  %761 = vmatpush.bf16.msra.mxu0 %v744
  %762 = vmatpush.bf16.msra.mxu0 %v743
  %763 = vmatpush.bf16.msra.mxu0 %v742
  %764 = vmatpush.bf16.msra.mxu0 %v741
  %765 = vmatmul.bf16.gmra.mxu0 %v684
  %v766 = vpop.f32.mrf.mxu0
  %v767 = vadd.f32 0.0, %v766
  %v768 = vpop.f32.mrf.mxu0
  %v769 = vadd.f32 0.0, %v768
  %770 = vmatmul.bf16.gmra.mxu0 %v685
  %v771 = vpop.f32.mrf.mxu0
  %v772 = vadd.f32 0.0, %v771
  %v773 = vpop.f32.mrf.mxu0
  %v774 = vadd.f32 0.0, %v773
  %775 = vmatmul.bf16.gmra.mxu0 %v686
  %v776 = vpop.f32.mrf.mxu0
  %v777 = vadd.f32 0.0, %v776
  %v778 = vpop.f32.mrf.mxu0
  %v779 = vadd.f32 0.0, %v778
  %780 = vmatmul.bf16.gmra.mxu0 %v687
  %v781 = vpop.f32.mrf.mxu0
  %v782 = vadd.f32 0.0, %v781
  %v783 = vpop.f32.mrf.mxu0
  %v784 = vadd.f32 0.0, %v783
  %785 = vmatmul.bf16.gmra.mxu0 %v688
  %v786 = vpop.f32.mrf.mxu0
  %v787 = vadd.f32 0.0, %v786
  %v788 = vpop.f32.mrf.mxu0
  %v789 = vadd.f32 0.0, %v788
  %790 = vmatmul.bf16.gmra.mxu0 %v689
  %v791 = vpop.f32.mrf.mxu0
  %v792 = vadd.f32 0.0, %v791
  %v793 = vpop.f32.mrf.mxu0
  %v794 = vadd.f32 0.0, %v793
  %795 = vmatmul.bf16.gmra.mxu0 %v690
  %v796 = vpop.f32.mrf.mxu0
  %v797 = vadd.f32 0.0, %v796
  %v798 = vpop.f32.mrf.mxu0
  %v799 = vadd.f32 0.0, %v798
  %800 = vmatmul.bf16.gmra.mxu0 %v691
  %v801 = vpop.f32.mrf.mxu0
  %v802 = vadd.f32 0.0, %v801
  %v803 = vpop.f32.mrf.mxu0
  %v804 = vadd.f32 0.0, %v803
  %805 = vdwg.mxu0
  %v806 = vadd.f32 %v587, %v767
  %v807 = vadd.f32 %v588, %v769
  %v808 = vadd.f32 %v589, %v772
  %v809 = vadd.f32 %v590, %v774
  %v810 = vadd.f32 %v591, %v777
  %v811 = vadd.f32 %v592, %v779
  %v812 = vadd.f32 %v593, %v782
  %v813 = vadd.f32 %v594, %v784
  %v814 = vadd.f32 %v595, %v787
  %v815 = vadd.f32 %v596, %v789
  %v816 = vadd.f32 %v597, %v792
  %v817 = vadd.f32 %v598, %v794
  %v818 = vadd.f32 %v599, %v797
  %v819 = vadd.f32 %v600, %v799
  %v820 = vadd.f32 %v601, %v802
  %v821 = vadd.f32 %v602, %v804
  %v826 = vrot.slane %v191, 7
  %v827 = vrot.slane %v192, 7
  %v828 = vsel %vm263, %v826, %v827
  %v829 = vrot.slane %v221, 7
  %v830 = vrot.slane %v222, 7
  %v831 = vsel %vm263, %v829, %v830
  %v834 = vpack.c.bf16 %v272, %v269
  %v835 = vpack.c.bf16 %v278, %v275
  %v836 = vpack.c.bf16 %v284, %v281
  %v837 = vpack.c.bf16 %v828, %v287
  %v838 = vpack.c.bf16 %v296, %v293
  %v839 = vpack.c.bf16 %v302, %v299
  %v840 = vpack.c.bf16 %v308, %v305
  %v841 = vpack.c.bf16 %v831, %v311
  %s842 = scalar_lea.vmem %s1, 192
  %v843 = vld [vmem:[%s842] sm:$0xf]
  %v844 = vld [vmem:[%s842 + $0x4] sm:$0xf]
  %v845 = vld [vmem:[%s842 + $0x8] sm:$0xf]
  %v846 = vld [vmem:[%s842 + $0xc] sm:$0xf]
  %v847 = vld [vmem:[%s842 + $0x10] sm:$0xf]
  %v848 = vld [vmem:[%s842 + $0x14] sm:$0xf]
  %v849 = vld [vmem:[%s842 + $0x18] sm:$0xf]
  %v850 = vld [vmem:[%s842 + $0x1c] sm:$0xf]
  %v851 = vld [vmem:[%s842 + $0x20] sm:$0xf]
  %v852 = vld [vmem:[%s842 + $0x24] sm:$0xf]
  %v853 = vld [vmem:[%s842 + $0x28] sm:$0xf]
  %v854 = vld [vmem:[%s842 + $0x2c] sm:$0xf]
  %v855 = vld [vmem:[%s842 + $0x30] sm:$0xf]
  %v856 = vld [vmem:[%s842 + $0x34] sm:$0xf]
  %v857 = vld [vmem:[%s842 + $0x38] sm:$0xf]
  %v858 = vld [vmem:[%s842 + $0x3c] sm:$0xf]
  %v875 = vunpack.c.l.b16 %v843
  %v876 = vunpack.c.l.b16 %v844
  %v877 = vunpack.c.l.b16 %v845
  %v878 = vunpack.c.l.b16 %v846
  %v879 = vunpack.c.l.b16 %v847
  %v880 = vunpack.c.l.b16 %v848
  %v881 = vunpack.c.l.b16 %v849
  %v882 = vunpack.c.l.b16 %v850
  %v883 = vunpack.c.l.b16 %v851
  %v884 = vunpack.c.l.b16 %v852
  %v885 = vunpack.c.l.b16 %v853
  %v886 = vunpack.c.l.b16 %v854
  %v887 = vunpack.c.l.b16 %v855
  %v888 = vunpack.c.l.b16 %v856
  %v889 = vunpack.c.l.b16 %v857
  %v890 = vunpack.c.l.b16 %v858
  %v891 = vpack.c.b16 %v876, %v875
  %v892 = vpack.c.b16 %v878, %v877
  %v893 = vpack.c.b16 %v880, %v879
  %v894 = vpack.c.b16 %v882, %v881
  %v895 = vpack.c.b16 %v884, %v883
  %v896 = vpack.c.b16 %v886, %v885
  %v897 = vpack.c.b16 %v888, %v887
  %v898 = vpack.c.b16 %v890, %v889
  %907 = vmatpush.bf16.msra.mxu0 %v898
  %908 = vmatpush.bf16.msra.mxu0 %v897
  %909 = vmatpush.bf16.msra.mxu0 %v896
  %910 = vmatpush.bf16.msra.mxu0 %v895
  %911 = vmatpush.bf16.msra.mxu0 %v894
  %912 = vmatpush.bf16.msra.mxu0 %v893
  %913 = vmatpush.bf16.msra.mxu0 %v892
  %914 = vmatpush.bf16.msra.mxu0 %v891
  %915 = vmatmul.bf16.gmra.mxu0 %v834
  %v916 = vpop.f32.mrf.mxu0
  %v917 = vadd.f32 0.0, %v916
  %v918 = vpop.f32.mrf.mxu0
  %v919 = vadd.f32 0.0, %v918
  %920 = vmatmul.bf16.gmra.mxu0 %v835
  %v921 = vpop.f32.mrf.mxu0
  %v922 = vadd.f32 0.0, %v921
  %v923 = vpop.f32.mrf.mxu0
  %v924 = vadd.f32 0.0, %v923
  %925 = vmatmul.bf16.gmra.mxu0 %v836
  %v926 = vpop.f32.mrf.mxu0
  %v927 = vadd.f32 0.0, %v926
  %v928 = vpop.f32.mrf.mxu0
  %v929 = vadd.f32 0.0, %v928
  %930 = vmatmul.bf16.gmra.mxu0 %v837
  %v931 = vpop.f32.mrf.mxu0
  %v932 = vadd.f32 0.0, %v931
  %v933 = vpop.f32.mrf.mxu0
  %v934 = vadd.f32 0.0, %v933
  %935 = vmatmul.bf16.gmra.mxu0 %v838
  %v936 = vpop.f32.mrf.mxu0
  %v937 = vadd.f32 0.0, %v936
  %v938 = vpop.f32.mrf.mxu0
  %v939 = vadd.f32 0.0, %v938
  %940 = vmatmul.bf16.gmra.mxu0 %v839
  %v941 = vpop.f32.mrf.mxu0
  %v942 = vadd.f32 0.0, %v941
  %v943 = vpop.f32.mrf.mxu0
  %v944 = vadd.f32 0.0, %v943
  %945 = vmatmul.bf16.gmra.mxu0 %v840
  %v946 = vpop.f32.mrf.mxu0
  %v947 = vadd.f32 0.0, %v946
  %v948 = vpop.f32.mrf.mxu0
  %v949 = vadd.f32 0.0, %v948
  %950 = vmatmul.bf16.gmra.mxu0 %v841
  %v951 = vpop.f32.mrf.mxu0
  %v952 = vadd.f32 0.0, %v951
  %v953 = vpop.f32.mrf.mxu0
  %v954 = vadd.f32 0.0, %v953
  %955 = vdwg.mxu0
  %v956 = vadd.f32 %v806, %v917
  %v957 = vadd.f32 %v807, %v919
  %v958 = vadd.f32 %v808, %v922
  %v959 = vadd.f32 %v809, %v924
  %v960 = vadd.f32 %v810, %v927
  %v961 = vadd.f32 %v811, %v929
  %v962 = vadd.f32 %v812, %v932
  %v963 = vadd.f32 %v813, %v934
  %v964 = vadd.f32 %v814, %v937
  %v965 = vadd.f32 %v815, %v939
  %v966 = vadd.f32 %v816, %v942
  %v967 = vadd.f32 %v817, %v944
  %v968 = vadd.f32 %v818, %v947
  %v969 = vadd.f32 %v819, %v949
  %v970 = vadd.f32 %v820, %v952
  %v971 = vadd.f32 %v821, %v954
  %v972 = vpack.c.bf16 %v174, %v171
  %v973 = vpack.c.bf16 %v180, %v177
  %v974 = vpack.c.bf16 %v186, %v183
  %v975 = vpack.c.bf16 %v192, %v189
  %v976 = vpack.c.bf16 %v204, %v201
  %v977 = vpack.c.bf16 %v210, %v207
  %v978 = vpack.c.bf16 %v216, %v213
  %v979 = vpack.c.bf16 %v222, %v219
  %s980 = scalar_lea.vmem %s1, 256
  %v981 = vld [vmem:[%s980] sm:$0xf]
  %v982 = vld [vmem:[%s980 + $0x4] sm:$0xf]
  %v983 = vld [vmem:[%s980 + $0x8] sm:$0xf]
  %v984 = vld [vmem:[%s980 + $0xc] sm:$0xf]
  %v985 = vld [vmem:[%s980 + $0x10] sm:$0xf]
  %v986 = vld [vmem:[%s980 + $0x14] sm:$0xf]
  %v987 = vld [vmem:[%s980 + $0x18] sm:$0xf]
  %v988 = vld [vmem:[%s980 + $0x1c] sm:$0xf]
  %v989 = vld [vmem:[%s980 + $0x20] sm:$0xf]
  %v990 = vld [vmem:[%s980 + $0x24] sm:$0xf]
  %v991 = vld [vmem:[%s980 + $0x28] sm:$0xf]
  %v992 = vld [vmem:[%s980 + $0x2c] sm:$0xf]
  %v993 = vld [vmem:[%s980 + $0x30] sm:$0xf]
  %v994 = vld [vmem:[%s980 + $0x34] sm:$0xf]
  %v995 = vld [vmem:[%s980 + $0x38] sm:$0xf]
  %v996 = vld [vmem:[%s980 + $0x3c] sm:$0xf]
  %v1013 = vunpack.c.l.b16 %v981
  %v1014 = vunpack.c.l.b16 %v982
  %v1015 = vunpack.c.l.b16 %v983
  %v1016 = vunpack.c.l.b16 %v984
  %v1017 = vunpack.c.l.b16 %v985
  %v1018 = vunpack.c.l.b16 %v986
  %v1019 = vunpack.c.l.b16 %v987
  %v1020 = vunpack.c.l.b16 %v988
  %v1021 = vunpack.c.l.b16 %v989
  %v1022 = vunpack.c.l.b16 %v990
  %v1023 = vunpack.c.l.b16 %v991
  %v1024 = vunpack.c.l.b16 %v992
  %v1025 = vunpack.c.l.b16 %v993
  %v1026 = vunpack.c.l.b16 %v994
  %v1027 = vunpack.c.l.b16 %v995
  %v1028 = vunpack.c.l.b16 %v996
  %v1029 = vpack.c.b16 %v1014, %v1013
  %v1030 = vpack.c.b16 %v1016, %v1015
  %v1031 = vpack.c.b16 %v1018, %v1017
  %v1032 = vpack.c.b16 %v1020, %v1019
  %v1033 = vpack.c.b16 %v1022, %v1021
  %v1034 = vpack.c.b16 %v1024, %v1023
  %v1035 = vpack.c.b16 %v1026, %v1025
  %v1036 = vpack.c.b16 %v1028, %v1027
  %1045 = vmatpush.bf16.msra.mxu0 %v1036
  %1046 = vmatpush.bf16.msra.mxu0 %v1035
  %1047 = vmatpush.bf16.msra.mxu0 %v1034
  %1048 = vmatpush.bf16.msra.mxu0 %v1033
  %1049 = vmatpush.bf16.msra.mxu0 %v1032
  %1050 = vmatpush.bf16.msra.mxu0 %v1031
  %1051 = vmatpush.bf16.msra.mxu0 %v1030
  %1052 = vmatpush.bf16.msra.mxu0 %v1029
  %1053 = vmatmul.bf16.gmra.mxu0 %v972
  %v1054 = vpop.f32.mrf.mxu0
  %v1055 = vadd.f32 0.0, %v1054
  %v1056 = vpop.f32.mrf.mxu0
  %v1057 = vadd.f32 0.0, %v1056
  %1058 = vmatmul.bf16.gmra.mxu0 %v973
  %v1059 = vpop.f32.mrf.mxu0
  %v1060 = vadd.f32 0.0, %v1059
  %v1061 = vpop.f32.mrf.mxu0
  %v1062 = vadd.f32 0.0, %v1061
  %1063 = vmatmul.bf16.gmra.mxu0 %v974
  %v1064 = vpop.f32.mrf.mxu0
  %v1065 = vadd.f32 0.0, %v1064
  %v1066 = vpop.f32.mrf.mxu0
  %v1067 = vadd.f32 0.0, %v1066
  %1068 = vmatmul.bf16.gmra.mxu0 %v975
  %v1069 = vpop.f32.mrf.mxu0
  %v1070 = vadd.f32 0.0, %v1069
  %v1071 = vpop.f32.mrf.mxu0
  %v1072 = vadd.f32 0.0, %v1071
  %1073 = vmatmul.bf16.gmra.mxu0 %v976
  %v1074 = vpop.f32.mrf.mxu0
  %v1075 = vadd.f32 0.0, %v1074
  %v1076 = vpop.f32.mrf.mxu0
  %v1077 = vadd.f32 0.0, %v1076
  %1078 = vmatmul.bf16.gmra.mxu0 %v977
  %v1079 = vpop.f32.mrf.mxu0
  %v1080 = vadd.f32 0.0, %v1079
  %v1081 = vpop.f32.mrf.mxu0
  %v1082 = vadd.f32 0.0, %v1081
  %1083 = vmatmul.bf16.gmra.mxu0 %v978
  %v1084 = vpop.f32.mrf.mxu0
  %v1085 = vadd.f32 0.0, %v1084
  %v1086 = vpop.f32.mrf.mxu0
  %v1087 = vadd.f32 0.0, %v1086
  %1088 = vmatmul.bf16.gmra.mxu0 %v979
  %v1089 = vpop.f32.mrf.mxu0
  %v1090 = vadd.f32 0.0, %v1089
  %v1091 = vpop.f32.mrf.mxu0
  %v1092 = vadd.f32 0.0, %v1091
  %1093 = vdwg.mxu0
  %v1094 = vadd.f32 %v956, %v1055
  %v1095 = vadd.f32 %v957, %v1057
  %v1096 = vadd.f32 %v958, %v1060
  %v1097 = vadd.f32 %v959, %v1062
  %v1098 = vadd.f32 %v960, %v1065
  %v1099 = vadd.f32 %v961, %v1067
  %v1100 = vadd.f32 %v962, %v1070
  %v1101 = vadd.f32 %v963, %v1072
  %v1102 = vadd.f32 %v964, %v1075
  %v1103 = vadd.f32 %v965, %v1077
  %v1104 = vadd.f32 %v966, %v1080
  %v1105 = vadd.f32 %v967, %v1082
  %v1106 = vadd.f32 %v968, %v1085
  %v1107 = vadd.f32 %v969, %v1087
  %v1108 = vadd.f32 %v970, %v1090
  %v1109 = vadd.f32 %v971, %v1092
  %v1112 = vrot.slane %v192, 1
  %v1113 = vrot.slane %v193, 1
  %v1114 = vsel %vm619, %v1112, %v1113
  %v1115 = vrot.slane %v222, 1
  %v1116 = vrot.slane %v223, 1
  %v1117 = vsel %vm619, %v1115, %v1116
  %v1120 = vpack.c.bf16 %v628, %v625
  %v1121 = vpack.c.bf16 %v634, %v631
  %v1122 = vpack.c.bf16 %v640, %v637
  %v1123 = vpack.c.bf16 %v1114, %v643
  %v1124 = vpack.c.bf16 %v652, %v649
  %v1125 = vpack.c.bf16 %v658, %v655
  %v1126 = vpack.c.bf16 %v664, %v661
  %v1127 = vpack.c.bf16 %v1117, %v667
  %s1128 = scalar_lea.vmem %s1, 320
  %v1129 = vld [vmem:[%s1128] sm:$0xf]
  %v1130 = vld [vmem:[%s1128 + $0x4] sm:$0xf]
  %v1131 = vld [vmem:[%s1128 + $0x8] sm:$0xf]
  %v1132 = vld [vmem:[%s1128 + $0xc] sm:$0xf]
  %v1133 = vld [vmem:[%s1128 + $0x10] sm:$0xf]
  %v1134 = vld [vmem:[%s1128 + $0x14] sm:$0xf]
  %v1135 = vld [vmem:[%s1128 + $0x18] sm:$0xf]
  %v1136 = vld [vmem:[%s1128 + $0x1c] sm:$0xf]
  %v1137 = vld [vmem:[%s1128 + $0x20] sm:$0xf]
  %v1138 = vld [vmem:[%s1128 + $0x24] sm:$0xf]
  %v1139 = vld [vmem:[%s1128 + $0x28] sm:$0xf]
  %v1140 = vld [vmem:[%s1128 + $0x2c] sm:$0xf]
  %v1141 = vld [vmem:[%s1128 + $0x30] sm:$0xf]
  %v1142 = vld [vmem:[%s1128 + $0x34] sm:$0xf]
  %v1143 = vld [vmem:[%s1128 + $0x38] sm:$0xf]
  %v1144 = vld [vmem:[%s1128 + $0x3c] sm:$0xf]
  %v1161 = vunpack.c.l.b16 %v1129
  %v1162 = vunpack.c.l.b16 %v1130
  %v1163 = vunpack.c.l.b16 %v1131
  %v1164 = vunpack.c.l.b16 %v1132
  %v1165 = vunpack.c.l.b16 %v1133
  %v1166 = vunpack.c.l.b16 %v1134
  %v1167 = vunpack.c.l.b16 %v1135
  %v1168 = vunpack.c.l.b16 %v1136
  %v1169 = vunpack.c.l.b16 %v1137
  %v1170 = vunpack.c.l.b16 %v1138
  %v1171 = vunpack.c.l.b16 %v1139
  %v1172 = vunpack.c.l.b16 %v1140
  %v1173 = vunpack.c.l.b16 %v1141
  %v1174 = vunpack.c.l.b16 %v1142
  %v1175 = vunpack.c.l.b16 %v1143
  %v1176 = vunpack.c.l.b16 %v1144
  %v1177 = vpack.c.b16 %v1162, %v1161
  %v1178 = vpack.c.b16 %v1164, %v1163
  %v1179 = vpack.c.b16 %v1166, %v1165
  %v1180 = vpack.c.b16 %v1168, %v1167
  %v1181 = vpack.c.b16 %v1170, %v1169
  %v1182 = vpack.c.b16 %v1172, %v1171
  %v1183 = vpack.c.b16 %v1174, %v1173
  %v1184 = vpack.c.b16 %v1176, %v1175
  %1193 = vmatpush.bf16.msra.mxu0 %v1184
  %1194 = vmatpush.bf16.msra.mxu0 %v1183
  %1195 = vmatpush.bf16.msra.mxu0 %v1182
  %1196 = vmatpush.bf16.msra.mxu0 %v1181
  %1197 = vmatpush.bf16.msra.mxu0 %v1180
  %1198 = vmatpush.bf16.msra.mxu0 %v1179
  %1199 = vmatpush.bf16.msra.mxu0 %v1178
  %1200 = vmatpush.bf16.msra.mxu0 %v1177
  %1201 = vmatmul.bf16.gmra.mxu0 %v1120
  %v1202 = vpop.f32.mrf.mxu0
  %v1203 = vadd.f32 0.0, %v1202
  %v1204 = vpop.f32.mrf.mxu0
  %v1205 = vadd.f32 0.0, %v1204
  %1206 = vmatmul.bf16.gmra.mxu0 %v1121
  %v1207 = vpop.f32.mrf.mxu0
  %v1208 = vadd.f32 0.0, %v1207
  %v1209 = vpop.f32.mrf.mxu0
  %v1210 = vadd.f32 0.0, %v1209
  %1211 = vmatmul.bf16.gmra.mxu0 %v1122
  %v1212 = vpop.f32.mrf.mxu0
  %v1213 = vadd.f32 0.0, %v1212
  %v1214 = vpop.f32.mrf.mxu0
  %v1215 = vadd.f32 0.0, %v1214
  %1216 = vmatmul.bf16.gmra.mxu0 %v1123
  %v1217 = vpop.f32.mrf.mxu0
  %v1218 = vadd.f32 0.0, %v1217
  %v1219 = vpop.f32.mrf.mxu0
  %v1220 = vadd.f32 0.0, %v1219
  %1221 = vmatmul.bf16.gmra.mxu0 %v1124
  %v1222 = vpop.f32.mrf.mxu0
  %v1223 = vadd.f32 0.0, %v1222
  %v1224 = vpop.f32.mrf.mxu0
  %v1225 = vadd.f32 0.0, %v1224
  %1226 = vmatmul.bf16.gmra.mxu0 %v1125
  %v1227 = vpop.f32.mrf.mxu0
  %v1228 = vadd.f32 0.0, %v1227
  %v1229 = vpop.f32.mrf.mxu0
  %v1230 = vadd.f32 0.0, %v1229
  %1231 = vmatmul.bf16.gmra.mxu0 %v1126
  %v1232 = vpop.f32.mrf.mxu0
  %v1233 = vadd.f32 0.0, %v1232
  %v1234 = vpop.f32.mrf.mxu0
  %v1235 = vadd.f32 0.0, %v1234
  %1236 = vmatmul.bf16.gmra.mxu0 %v1127
  %v1237 = vpop.f32.mrf.mxu0
  %v1238 = vadd.f32 0.0, %v1237
  %v1239 = vpop.f32.mrf.mxu0
  %v1240 = vadd.f32 0.0, %v1239
  %1241 = vdwg.mxu0
  %v1242 = vadd.f32 %v1094, %v1203
  %v1243 = vadd.f32 %v1095, %v1205
  %v1244 = vadd.f32 %v1096, %v1208
  %v1245 = vadd.f32 %v1097, %v1210
  %v1246 = vadd.f32 %v1098, %v1213
  %v1247 = vadd.f32 %v1099, %v1215
  %v1248 = vadd.f32 %v1100, %v1218
  %v1249 = vadd.f32 %v1101, %v1220
  %v1250 = vadd.f32 %v1102, %v1223
  %v1251 = vadd.f32 %v1103, %v1225
  %v1252 = vadd.f32 %v1104, %v1228
  %v1253 = vadd.f32 %v1105, %v1230
  %v1254 = vadd.f32 %v1106, %v1233
  %v1255 = vadd.f32 %v1107, %v1235
  %v1256 = vadd.f32 %v1108, %v1238
  %v1257 = vadd.f32 %v1109, %v1240
  %v1262 = vrot.slane %v194, 7
  %v1263 = vrot.slane %v195, 7
  %v1264 = vsel %vm263, %v1262, %v1263
  %v1265 = vrot.slane %v224, 7
  %v1266 = vrot.slane %v225, 7
  %v1267 = vsel %vm263, %v1265, %v1266
  %v1270 = vpack.c.bf16 %v1264, %v828
  %v1271 = vpack.c.bf16 %v1267, %v831
  %s1272 = scalar_lea.vmem %s1, 384
  %v1273 = vld [vmem:[%s1272] sm:$0xf]
  %v1274 = vld [vmem:[%s1272 + $0x4] sm:$0xf]
  %v1275 = vld [vmem:[%s1272 + $0x8] sm:$0xf]
  %v1276 = vld [vmem:[%s1272 + $0xc] sm:$0xf]
  %v1277 = vld [vmem:[%s1272 + $0x10] sm:$0xf]
  %v1278 = vld [vmem:[%s1272 + $0x14] sm:$0xf]
  %v1279 = vld [vmem:[%s1272 + $0x18] sm:$0xf]
  %v1280 = vld [vmem:[%s1272 + $0x1c] sm:$0xf]
  %v1281 = vld [vmem:[%s1272 + $0x20] sm:$0xf]
  %v1282 = vld [vmem:[%s1272 + $0x24] sm:$0xf]
  %v1283 = vld [vmem:[%s1272 + $0x28] sm:$0xf]
  %v1284 = vld [vmem:[%s1272 + $0x2c] sm:$0xf]
  %v1285 = vld [vmem:[%s1272 + $0x30] sm:$0xf]
  %v1286 = vld [vmem:[%s1272 + $0x34] sm:$0xf]
  %v1287 = vld [vmem:[%s1272 + $0x38] sm:$0xf]
  %v1288 = vld [vmem:[%s1272 + $0x3c] sm:$0xf]
  %v1305 = vunpack.c.l.b16 %v1273
  %v1306 = vunpack.c.l.b16 %v1274
  %v1307 = vunpack.c.l.b16 %v1275
  %v1308 = vunpack.c.l.b16 %v1276
  %v1309 = vunpack.c.l.b16 %v1277
  %v1310 = vunpack.c.l.b16 %v1278
  %v1311 = vunpack.c.l.b16 %v1279
  %v1312 = vunpack.c.l.b16 %v1280
  %v1313 = vunpack.c.l.b16 %v1281
  %v1314 = vunpack.c.l.b16 %v1282
  %v1315 = vunpack.c.l.b16 %v1283
  %v1316 = vunpack.c.l.b16 %v1284
  %v1317 = vunpack.c.l.b16 %v1285
  %v1318 = vunpack.c.l.b16 %v1286
  %v1319 = vunpack.c.l.b16 %v1287
  %v1320 = vunpack.c.l.b16 %v1288
  %v1321 = vpack.c.b16 %v1306, %v1305
  %v1322 = vpack.c.b16 %v1308, %v1307
  %v1323 = vpack.c.b16 %v1310, %v1309
  %v1324 = vpack.c.b16 %v1312, %v1311
  %v1325 = vpack.c.b16 %v1314, %v1313
  %v1326 = vpack.c.b16 %v1316, %v1315
  %v1327 = vpack.c.b16 %v1318, %v1317
  %v1328 = vpack.c.b16 %v1320, %v1319
  %1337 = vmatpush.bf16.msra.mxu0 %v1328
  %1338 = vmatpush.bf16.msra.mxu0 %v1327
  %1339 = vmatpush.bf16.msra.mxu0 %v1326
  %1340 = vmatpush.bf16.msra.mxu0 %v1325
  %1341 = vmatpush.bf16.msra.mxu0 %v1324
  %1342 = vmatpush.bf16.msra.mxu0 %v1323
  %1343 = vmatpush.bf16.msra.mxu0 %v1322
  %1344 = vmatpush.bf16.msra.mxu0 %v1321
  %1345 = vmatmul.bf16.gmra.mxu0 %v329
  %v1346 = vpop.f32.mrf.mxu0
  %v1347 = vadd.f32 0.0, %v1346
  %v1348 = vpop.f32.mrf.mxu0
  %v1349 = vadd.f32 0.0, %v1348
  %1350 = vmatmul.bf16.gmra.mxu0 %v330
  %v1351 = vpop.f32.mrf.mxu0
  %v1352 = vadd.f32 0.0, %v1351
  %v1353 = vpop.f32.mrf.mxu0
  %v1354 = vadd.f32 0.0, %v1353
  %1355 = vmatmul.bf16.gmra.mxu0 %v331
  %v1356 = vpop.f32.mrf.mxu0
  %v1357 = vadd.f32 0.0, %v1356
  %v1358 = vpop.f32.mrf.mxu0
  %v1359 = vadd.f32 0.0, %v1358
  %1360 = vmatmul.bf16.gmra.mxu0 %v1270
  %v1361 = vpop.f32.mrf.mxu0
  %v1362 = vadd.f32 0.0, %v1361
  %v1363 = vpop.f32.mrf.mxu0
  %v1364 = vadd.f32 0.0, %v1363
  %1365 = vmatmul.bf16.gmra.mxu0 %v333
  %v1366 = vpop.f32.mrf.mxu0
  %v1367 = vadd.f32 0.0, %v1366
  %v1368 = vpop.f32.mrf.mxu0
  %v1369 = vadd.f32 0.0, %v1368
  %1370 = vmatmul.bf16.gmra.mxu0 %v334
  %v1371 = vpop.f32.mrf.mxu0
  %v1372 = vadd.f32 0.0, %v1371
  %v1373 = vpop.f32.mrf.mxu0
  %v1374 = vadd.f32 0.0, %v1373
  %1375 = vmatmul.bf16.gmra.mxu0 %v335
  %v1376 = vpop.f32.mrf.mxu0
  %v1377 = vadd.f32 0.0, %v1376
  %v1378 = vpop.f32.mrf.mxu0
  %v1379 = vadd.f32 0.0, %v1378
  %1380 = vmatmul.bf16.gmra.mxu0 %v1271
  %v1381 = vpop.f32.mrf.mxu0
  %v1382 = vadd.f32 0.0, %v1381
  %v1383 = vpop.f32.mrf.mxu0
  %v1384 = vadd.f32 0.0, %v1383
  %1385 = vdwg.mxu0
  %v1386 = vadd.f32 %v1242, %v1347
  %v1387 = vadd.f32 %v1243, %v1349
  %v1388 = vadd.f32 %v1244, %v1352
  %v1389 = vadd.f32 %v1245, %v1354
  %v1390 = vadd.f32 %v1246, %v1357
  %v1391 = vadd.f32 %v1247, %v1359
  %v1392 = vadd.f32 %v1248, %v1362
  %v1393 = vadd.f32 %v1249, %v1364
  %v1394 = vadd.f32 %v1250, %v1367
  %v1395 = vadd.f32 %v1251, %v1369
  %v1396 = vadd.f32 %v1252, %v1372
  %v1397 = vadd.f32 %v1253, %v1374
  %v1398 = vadd.f32 %v1254, %v1377
  %v1399 = vadd.f32 %v1255, %v1379
  %v1400 = vadd.f32 %v1256, %v1382
  %v1401 = vadd.f32 %v1257, %v1384
  %v1402 = vpack.c.bf16 %v195, %v192
  %v1403 = vpack.c.bf16 %v225, %v222
  %s1404 = scalar_lea.vmem %s1, 448
  %v1405 = vld [vmem:[%s1404] sm:$0xf]
  %v1406 = vld [vmem:[%s1404 + $0x4] sm:$0xf]
  %v1407 = vld [vmem:[%s1404 + $0x8] sm:$0xf]
  %v1408 = vld [vmem:[%s1404 + $0xc] sm:$0xf]
  %v1409 = vld [vmem:[%s1404 + $0x10] sm:$0xf]
  %v1410 = vld [vmem:[%s1404 + $0x14] sm:$0xf]
  %v1411 = vld [vmem:[%s1404 + $0x18] sm:$0xf]
  %v1412 = vld [vmem:[%s1404 + $0x1c] sm:$0xf]
  %v1413 = vld [vmem:[%s1404 + $0x20] sm:$0xf]
  %v1414 = vld [vmem:[%s1404 + $0x24] sm:$0xf]
  %v1415 = vld [vmem:[%s1404 + $0x28] sm:$0xf]
  %v1416 = vld [vmem:[%s1404 + $0x2c] sm:$0xf]
  %v1417 = vld [vmem:[%s1404 + $0x30] sm:$0xf]
  %v1418 = vld [vmem:[%s1404 + $0x34] sm:$0xf]
  %v1419 = vld [vmem:[%s1404 + $0x38] sm:$0xf]
  %v1420 = vld [vmem:[%s1404 + $0x3c] sm:$0xf]
  %v1437 = vunpack.c.l.b16 %v1405
  %v1438 = vunpack.c.l.b16 %v1406
  %v1439 = vunpack.c.l.b16 %v1407
  %v1440 = vunpack.c.l.b16 %v1408
  %v1441 = vunpack.c.l.b16 %v1409
  %v1442 = vunpack.c.l.b16 %v1410
  %v1443 = vunpack.c.l.b16 %v1411
  %v1444 = vunpack.c.l.b16 %v1412
  %v1445 = vunpack.c.l.b16 %v1413
  %v1446 = vunpack.c.l.b16 %v1414
  %v1447 = vunpack.c.l.b16 %v1415
  %v1448 = vunpack.c.l.b16 %v1416
  %v1449 = vunpack.c.l.b16 %v1417
  %v1450 = vunpack.c.l.b16 %v1418
  %v1451 = vunpack.c.l.b16 %v1419
  %v1452 = vunpack.c.l.b16 %v1420
  %v1453 = vpack.c.b16 %v1438, %v1437
  %v1454 = vpack.c.b16 %v1440, %v1439
  %v1455 = vpack.c.b16 %v1442, %v1441
  %v1456 = vpack.c.b16 %v1444, %v1443
  %v1457 = vpack.c.b16 %v1446, %v1445
  %v1458 = vpack.c.b16 %v1448, %v1447
  %v1459 = vpack.c.b16 %v1450, %v1449
  %v1460 = vpack.c.b16 %v1452, %v1451
  %1469 = vmatpush.bf16.msra.mxu0 %v1460
  %1470 = vmatpush.bf16.msra.mxu0 %v1459
  %1471 = vmatpush.bf16.msra.mxu0 %v1458
  %1472 = vmatpush.bf16.msra.mxu0 %v1457
  %1473 = vmatpush.bf16.msra.mxu0 %v1456
  %1474 = vmatpush.bf16.msra.mxu0 %v1455
  %1475 = vmatpush.bf16.msra.mxu0 %v1454
  %1476 = vmatpush.bf16.msra.mxu0 %v1453
  %1477 = vmatmul.bf16.gmra.mxu0 %v466
  %v1478 = vpop.f32.mrf.mxu0
  %v1479 = vadd.f32 0.0, %v1478
  %v1480 = vpop.f32.mrf.mxu0
  %v1481 = vadd.f32 0.0, %v1480
  %1482 = vmatmul.bf16.gmra.mxu0 %v467
  %v1483 = vpop.f32.mrf.mxu0
  %v1484 = vadd.f32 0.0, %v1483
  %v1485 = vpop.f32.mrf.mxu0
  %v1486 = vadd.f32 0.0, %v1485
  %1487 = vmatmul.bf16.gmra.mxu0 %v468
  %v1488 = vpop.f32.mrf.mxu0
  %v1489 = vadd.f32 0.0, %v1488
  %v1490 = vpop.f32.mrf.mxu0
  %v1491 = vadd.f32 0.0, %v1490
  %1492 = vmatmul.bf16.gmra.mxu0 %v1402
  %v1493 = vpop.f32.mrf.mxu0
  %v1494 = vadd.f32 0.0, %v1493
  %v1495 = vpop.f32.mrf.mxu0
  %v1496 = vadd.f32 0.0, %v1495
  %1497 = vmatmul.bf16.gmra.mxu0 %v470
  %v1498 = vpop.f32.mrf.mxu0
  %v1499 = vadd.f32 0.0, %v1498
  %v1500 = vpop.f32.mrf.mxu0
  %v1501 = vadd.f32 0.0, %v1500
  %1502 = vmatmul.bf16.gmra.mxu0 %v471
  %v1503 = vpop.f32.mrf.mxu0
  %v1504 = vadd.f32 0.0, %v1503
  %v1505 = vpop.f32.mrf.mxu0
  %v1506 = vadd.f32 0.0, %v1505
  %1507 = vmatmul.bf16.gmra.mxu0 %v472
  %v1508 = vpop.f32.mrf.mxu0
  %v1509 = vadd.f32 0.0, %v1508
  %v1510 = vpop.f32.mrf.mxu0
  %v1511 = vadd.f32 0.0, %v1510
  %1512 = vmatmul.bf16.gmra.mxu0 %v1403
  %v1513 = vpop.f32.mrf.mxu0
  %v1514 = vadd.f32 0.0, %v1513
  %v1515 = vpop.f32.mrf.mxu0
  %v1516 = vadd.f32 0.0, %v1515
  %1517 = vdwg.mxu0
  %v1518 = vadd.f32 %v1386, %v1479
  %v1519 = vadd.f32 %v1387, %v1481
  %v1520 = vadd.f32 %v1388, %v1484
  %v1521 = vadd.f32 %v1389, %v1486
  %v1522 = vadd.f32 %v1390, %v1489
  %v1523 = vadd.f32 %v1391, %v1491
  %v1524 = vadd.f32 %v1392, %v1494
  %v1525 = vadd.f32 %v1393, %v1496
  %v1526 = vadd.f32 %v1394, %v1499
  %v1527 = vadd.f32 %v1395, %v1501
  %v1528 = vadd.f32 %v1396, %v1504
  %v1529 = vadd.f32 %v1397, %v1506
  %v1530 = vadd.f32 %v1398, %v1509
  %v1531 = vadd.f32 %v1399, %v1511
  %v1532 = vadd.f32 %v1400, %v1514
  %v1533 = vadd.f32 %v1401, %v1516
  %v1536 = vrot.slane %v195, 1
  %v1537 = vrot.slane %v196, 1
  %v1538 = vsel %vm619, %v1536, %v1537
  %v1539 = vrot.slane %v225, 1
  %v1540 = vrot.slane %v226, 1
  %v1541 = vsel %vm619, %v1539, %v1540
  %v1544 = vpack.c.bf16 %v1538, %v1114
  %v1545 = vpack.c.bf16 %v1541, %v1117
  %s1546 = scalar_lea.vmem %s1, 512
  %v1547 = vld [vmem:[%s1546] sm:$0xf]
  %v1548 = vld [vmem:[%s1546 + $0x4] sm:$0xf]
  %v1549 = vld [vmem:[%s1546 + $0x8] sm:$0xf]
  %v1550 = vld [vmem:[%s1546 + $0xc] sm:$0xf]
  %v1551 = vld [vmem:[%s1546 + $0x10] sm:$0xf]
  %v1552 = vld [vmem:[%s1546 + $0x14] sm:$0xf]
  %v1553 = vld [vmem:[%s1546 + $0x18] sm:$0xf]
  %v1554 = vld [vmem:[%s1546 + $0x1c] sm:$0xf]
  %v1555 = vld [vmem:[%s1546 + $0x20] sm:$0xf]
  %v1556 = vld [vmem:[%s1546 + $0x24] sm:$0xf]
  %v1557 = vld [vmem:[%s1546 + $0x28] sm:$0xf]
  %v1558 = vld [vmem:[%s1546 + $0x2c] sm:$0xf]
  %v1559 = vld [vmem:[%s1546 + $0x30] sm:$0xf]
  %v1560 = vld [vmem:[%s1546 + $0x34] sm:$0xf]
  %v1561 = vld [vmem:[%s1546 + $0x38] sm:$0xf]
  %v1562 = vld [vmem:[%s1546 + $0x3c] sm:$0xf]
  %v1579 = vunpack.c.l.b16 %v1547
  %v1580 = vunpack.c.l.b16 %v1548
  %v1581 = vunpack.c.l.b16 %v1549
  %v1582 = vunpack.c.l.b16 %v1550
  %v1583 = vunpack.c.l.b16 %v1551
  %v1584 = vunpack.c.l.b16 %v1552
  %v1585 = vunpack.c.l.b16 %v1553
  %v1586 = vunpack.c.l.b16 %v1554
  %v1587 = vunpack.c.l.b16 %v1555
  %v1588 = vunpack.c.l.b16 %v1556
  %v1589 = vunpack.c.l.b16 %v1557
  %v1590 = vunpack.c.l.b16 %v1558
  %v1591 = vunpack.c.l.b16 %v1559
  %v1592 = vunpack.c.l.b16 %v1560
  %v1593 = vunpack.c.l.b16 %v1561
  %v1594 = vunpack.c.l.b16 %v1562
  %v1595 = vpack.c.b16 %v1580, %v1579
  %v1596 = vpack.c.b16 %v1582, %v1581
  %v1597 = vpack.c.b16 %v1584, %v1583
  %v1598 = vpack.c.b16 %v1586, %v1585
  %v1599 = vpack.c.b16 %v1588, %v1587
  %v1600 = vpack.c.b16 %v1590, %v1589
  %v1601 = vpack.c.b16 %v1592, %v1591
  %v1602 = vpack.c.b16 %v1594, %v1593
  %1611 = vmatpush.bf16.msra.mxu0 %v1602
  %1612 = vmatpush.bf16.msra.mxu0 %v1601
  %1613 = vmatpush.bf16.msra.mxu0 %v1600
  %1614 = vmatpush.bf16.msra.mxu0 %v1599
  %1615 = vmatpush.bf16.msra.mxu0 %v1598
  %1616 = vmatpush.bf16.msra.mxu0 %v1597
  %1617 = vmatpush.bf16.msra.mxu0 %v1596
  %1618 = vmatpush.bf16.msra.mxu0 %v1595
  %1619 = vmatmul.bf16.gmra.mxu0 %v685
  %v1620 = vpop.f32.mrf.mxu0
  %v1621 = vadd.f32 0.0, %v1620
  %v1622 = vpop.f32.mrf.mxu0
  %v1623 = vadd.f32 0.0, %v1622
  %1624 = vmatmul.bf16.gmra.mxu0 %v686
  %v1625 = vpop.f32.mrf.mxu0
  %v1626 = vadd.f32 0.0, %v1625
  %v1627 = vpop.f32.mrf.mxu0
  %v1628 = vadd.f32 0.0, %v1627
  %1629 = vmatmul.bf16.gmra.mxu0 %v687
  %v1630 = vpop.f32.mrf.mxu0
  %v1631 = vadd.f32 0.0, %v1630
  %v1632 = vpop.f32.mrf.mxu0
  %v1633 = vadd.f32 0.0, %v1632
  %1634 = vmatmul.bf16.gmra.mxu0 %v1544
  %v1635 = vpop.f32.mrf.mxu0
  %v1636 = vadd.f32 0.0, %v1635
  %v1637 = vpop.f32.mrf.mxu0
  %v1638 = vadd.f32 0.0, %v1637
  %1639 = vmatmul.bf16.gmra.mxu0 %v689
  %v1640 = vpop.f32.mrf.mxu0
  %v1641 = vadd.f32 0.0, %v1640
  %v1642 = vpop.f32.mrf.mxu0
  %v1643 = vadd.f32 0.0, %v1642
  %1644 = vmatmul.bf16.gmra.mxu0 %v690
  %v1645 = vpop.f32.mrf.mxu0
  %v1646 = vadd.f32 0.0, %v1645
  %v1647 = vpop.f32.mrf.mxu0
  %v1648 = vadd.f32 0.0, %v1647
  %1649 = vmatmul.bf16.gmra.mxu0 %v691
  %v1650 = vpop.f32.mrf.mxu0
  %v1651 = vadd.f32 0.0, %v1650
  %v1652 = vpop.f32.mrf.mxu0
  %v1653 = vadd.f32 0.0, %v1652
  %1654 = vmatmul.bf16.gmra.mxu0 %v1545
  %v1655 = vpop.f32.mrf.mxu0
  %v1656 = vadd.f32 0.0, %v1655
  %v1657 = vpop.f32.mrf.mxu0
  %v1658 = vadd.f32 0.0, %v1657
  %1659 = vdwg.mxu0
  %v1660 = vadd.f32 %v1518, %v1621
  %v1661 = vadd.f32 %v1519, %v1623
  %v1662 = vadd.f32 %v1520, %v1626
  %v1663 = vadd.f32 %v1521, %v1628
  %v1664 = vadd.f32 %v1522, %v1631
  %v1665 = vadd.f32 %v1523, %v1633
  %v1666 = vadd.f32 %v1524, %v1636
  %v1667 = vadd.f32 %v1525, %v1638
  %v1668 = vadd.f32 %v1526, %v1641
  %v1669 = vadd.f32 %v1527, %v1643
  %v1670 = vadd.f32 %v1528, %v1646
  %v1671 = vadd.f32 %v1529, %v1648
  %v1672 = vadd.f32 %v1530, %v1651
  %v1673 = vadd.f32 %v1531, %v1653
  %v1674 = vadd.f32 %v1532, %v1656
  %v1675 = vadd.f32 %v1533, %v1658
  %v1676 = vmax.f32 %v1660, 0.0
  %v1677 = vmax.f32 %v1661, 0.0
  %v1678 = vmax.f32 %v1662, 0.0
  %v1679 = vmax.f32 %v1663, 0.0
  %v1680 = vmax.f32 %v1664, 0.0
  %v1681 = vmax.f32 %v1665, 0.0
  %v1682 = vmax.f32 %v1666, 0.0
  %v1683 = vmax.f32 %v1667, 0.0
  %v1684 = vmax.f32 %v1668, 0.0
  %v1685 = vmax.f32 %v1669, 0.0
  %v1686 = vmax.f32 %v1670, 0.0
  %v1687 = vmax.f32 %v1671, 0.0
  %v1688 = vmax.f32 %v1672, 0.0
  %v1689 = vmax.f32 %v1673, 0.0
  %v1690 = vmax.f32 %v1674, 0.0
  %v1691 = vmax.f32 %v1675, 0.0
  %s1692 = scalar_lea.vmem [#allocation3], 24
  %1693 = vst [vmem:[%s1692 + $0x8] sm:$0xff] %v1676
  %1694 = vst [vmem:[%s1692 + $0x20] sm:$0xff] %v1677
  %1695 = vst [vmem:[%s1692 + $0x38] sm:$0xff] %v1678
  %1696 = vst [vmem:[%s1692 + $0x50] sm:$0xff] %v1679
  %1697 = vst [vmem:[%s1692 + $0x68] sm:$0xff] %v1680
  %1698 = vst [vmem:[%s1692 + $0x80] sm:$0xff] %v1681
  %1699 = vst [vmem:[%s1692 + $0x98] sm:$0xff] %v1682
  %1700 = vst [vmem:[%s1692 + $0xb0] sm:$0xff] %v1683
  %1701 = vst [vmem:[%s1692 + $0xf8] sm:$0xff] %v1684
  %1702 = vst [vmem:[%s1692 + $0x110] sm:$0xff] %v1685
  %1703 = vst [vmem:[%s1692 + $0x128] sm:$0xff] %v1686
  %1704 = vst [vmem:[%s1692 + $0x140] sm:$0xff] %v1687
  %1705 = vst [vmem:[%s1692 + $0x158] sm:$0xff] %v1688
  %1706 = vst [vmem:[%s1692 + $0x170] sm:$0xff] %v1689
  %1707 = vst [vmem:[%s1692 + $0x188] sm:$0xff] %v1690
  %1708 = vst [vmem:[%s1692 + $0x1a0] sm:$0xff] %v1691
  %v1709 = vld [vmem:[#allocation3] sm:$0xff]
  %v1710 = vld [vmem:[#allocation3 + $0x8] sm:$0xff]
  %v1711 = vld [vmem:[#allocation3 + $0x10] sm:$0xff]
  %v1712 = vld [vmem:[#allocation3 + $0x18] sm:$0xff]
  %v1713 = vld [vmem:[#allocation3 + $0x20] sm:$0xff]
  %v1714 = vld [vmem:[#allocation3 + $0x28] sm:$0xff]
  %v1715 = vld [vmem:[#allocation3 + $0x30] sm:$0xff]
  %v1716 = vld [vmem:[#allocation3 + $0x38] sm:$0xff]
  %v1717 = vld [vmem:[#allocation3 + $0x40] sm:$0xff]
  %v1718 = vld [vmem:[#allocation3 + $0x48] sm:$0xff]
  %v1719 = vld [vmem:[#allocation3 + $0x50] sm:$0xff]
  %v1720 = vld [vmem:[#allocation3 + $0x58] sm:$0xff]
  %v1721 = vld [vmem:[#allocation3 + $0x60] sm:$0xff]
  %v1722 = vld [vmem:[#allocation3 + $0x68] sm:$0xff]
  %v1723 = vld [vmem:[#allocation3 + $0x70] sm:$0xff]
  %v1724 = vld [vmem:[#allocation3 + $0x78] sm:$0xff]
  %v1725 = vld [vmem:[#allocation3 + $0x80] sm:$0xff]
  %v1726 = vld [vmem:[#allocation3 + $0x88] sm:$0xff]
  %v1727 = vld [vmem:[#allocation3 + $0x90] sm:$0xff]
  %v1728 = vld [vmem:[#allocation3 + $0x98] sm:$0xff]
  %v1729 = vld [vmem:[#allocation3 + $0xa0] sm:$0xff]
  %v1730 = vld [vmem:[#allocation3 + $0xa8] sm:$0xff]
  %v1731 = vld [vmem:[#allocation3 + $0xb0] sm:$0xff]
  %v1732 = vld [vmem:[#allocation3 + $0xb8] sm:$0xff]
  %v1733 = vld [vmem:[#allocation3 + $0xc0] sm:$0xff]
  %v1734 = vld [vmem:[#allocation3 + $0xc8] sm:$0xff]
  %v1735 = vld [vmem:[#allocation3 + $0xd0] sm:$0xff]
  %v1736 = vld [vmem:[#allocation3 + $0xd8] sm:$0xff]
  %v1737 = vld [vmem:[#allocation3 + $0xe0] sm:$0xff]
  %v1738 = vld [vmem:[#allocation3 + $0xe8] sm:$0xff]
  %v1739 = vld [vmem:[#allocation3 + $0xf0] sm:$0xff]
  %v1740 = vld [vmem:[#allocation3 + $0xf8] sm:$0xff]
  %v1741 = vld [vmem:[#allocation3 + $0x100] sm:$0xff]
  %v1742 = vld [vmem:[#allocation3 + $0x108] sm:$0xff]
  %v1743 = vld [vmem:[#allocation3 + $0x110] sm:$0xff]
  %v1744 = vld [vmem:[#allocation3 + $0x118] sm:$0xff]
  %v1745 = vld [vmem:[#allocation3 + $0x120] sm:$0xff]
  %v1746 = vld [vmem:[#allocation3 + $0x128] sm:$0xff]
  %v1747 = vld [vmem:[#allocation3 + $0x130] sm:$0xff]
  %v1748 = vld [vmem:[#allocation3 + $0x138] sm:$0xff]
  %v1749 = vld [vmem:[#allocation3 + $0x140] sm:$0xff]
  %v1750 = vld [vmem:[#allocation3 + $0x148] sm:$0xff]
  %v1751 = vld [vmem:[#allocation3 + $0x150] sm:$0xff]
  %v1752 = vld [vmem:[#allocation3 + $0x158] sm:$0xff]
  %v1753 = vld [vmem:[#allocation3 + $0x160] sm:$0xff]
  %v1754 = vld [vmem:[#allocation3 + $0x168] sm:$0xff]
  %v1755 = vld [vmem:[#allocation3 + $0x170] sm:$0xff]
  %v1756 = vld [vmem:[#allocation3 + $0x178] sm:$0xff]
  %v1757 = vld [vmem:[#allocation3 + $0x180] sm:$0xff]
  %v1758 = vld [vmem:[#allocation3 + $0x188] sm:$0xff]
  %v1759 = vld [vmem:[#allocation3 + $0x190] sm:$0xff]
  %v1760 = vld [vmem:[#allocation3 + $0x198] sm:$0xff]
  %v1761 = vld [vmem:[#allocation3 + $0x1a0] sm:$0xff]
  %v1762 = vld [vmem:[#allocation3 + $0x1a8] sm:$0xff]
  %v1763 = vld [vmem:[#allocation3 + $0x1b0] sm:$0xff]
  %v1764 = vld [vmem:[#allocation3 + $0x1b8] sm:$0xff]
  %v1765 = vld [vmem:[#allocation3 + $0x1c0] sm:$0xff]
  %v1766 = vld [vmem:[#allocation3 + $0x1c8] sm:$0xff]
  %v1767 = vld [vmem:[#allocation3 + $0x1d0] sm:$0xff]
  %v1768 = vld [vmem:[#allocation3 + $0x1d8] sm:$0xff]
  %s1769 = scalar_lea.vmem %s2, 1
  %v1770 = vld [vmem:[%s1769] sm:$0x1]
  %v1772 = vperm.slane %v1770, 0
  %v1806 = vrot.slane %v1709, 7
  %v1807 = vrot.slane %v1710, 7
  %v1808 = vsel %vm263, %v1806, %v1807
  %v1809 = vrot.slane %v1712, 7
  %v1810 = vrot.slane %v1713, 7
  %v1811 = vsel %vm263, %v1809, %v1810
  %v1812 = vrot.slane %v1715, 7
  %v1813 = vrot.slane %v1716, 7
  %v1814 = vsel %vm263, %v1812, %v1813
  %v1815 = vrot.slane %v1718, 7
  %v1816 = vrot.slane %v1719, 7
  %v1817 = vsel %vm263, %v1815, %v1816
  %v1818 = vrot.slane %v1721, 7
  %v1819 = vrot.slane %v1722, 7
  %v1820 = vsel %vm263, %v1818, %v1819
  %v1821 = vrot.slane %v1724, 7
  %v1822 = vrot.slane %v1725, 7
  %v1823 = vsel %vm263, %v1821, %v1822
  %v1824 = vrot.slane %v1727, 7
  %v1825 = vrot.slane %v1728, 7
  %v1826 = vsel %vm263, %v1824, %v1825
  %v1827 = vrot.slane %v1730, 7
  %v1828 = vrot.slane %v1731, 7
  %v1829 = vsel %vm263, %v1827, %v1828
  %v1830 = vrot.slane %v1739, 7
  %v1831 = vrot.slane %v1740, 7
  %v1832 = vsel %vm263, %v1830, %v1831
  %v1833 = vrot.slane %v1742, 7
  %v1834 = vrot.slane %v1743, 7
  %v1835 = vsel %vm263, %v1833, %v1834
  %v1836 = vrot.slane %v1745, 7
  %v1837 = vrot.slane %v1746, 7
  %v1838 = vsel %vm263, %v1836, %v1837
  %v1839 = vrot.slane %v1748, 7
  %v1840 = vrot.slane %v1749, 7
  %v1841 = vsel %vm263, %v1839, %v1840
  %v1842 = vrot.slane %v1751, 7
  %v1843 = vrot.slane %v1752, 7
  %v1844 = vsel %vm263, %v1842, %v1843
  %v1845 = vrot.slane %v1754, 7
  %v1846 = vrot.slane %v1755, 7
  %v1847 = vsel %vm263, %v1845, %v1846
  %v1848 = vrot.slane %v1757, 7
  %v1849 = vrot.slane %v1758, 7
  %v1850 = vsel %vm263, %v1848, %v1849
  %v1851 = vrot.slane %v1760, 7
  %v1852 = vrot.slane %v1761, 7
  %v1853 = vsel %vm263, %v1851, %v1852
  %v1870 = vpack.c.bf16 %v1811, %v1808
  %v1871 = vpack.c.bf16 %v1817, %v1814
  %v1872 = vpack.c.bf16 %v1823, %v1820
  %v1873 = vpack.c.bf16 %v1829, %v1826
  %v1874 = vpack.c.bf16 %v1835, %v1832
  %v1875 = vpack.c.bf16 %v1841, %v1838
  %v1876 = vpack.c.bf16 %v1847, %v1844
  %v1877 = vpack.c.bf16 %v1853, %v1850
  %s1878 = scalar_lea.vmem %s1, 576
  %v1879 = vld [vmem:[%s1878] sm:$0xf]
  %v1880 = vld [vmem:[%s1878 + $0x4] sm:$0xf]
  %v1881 = vld [vmem:[%s1878 + $0x8] sm:$0xf]
  %v1882 = vld [vmem:[%s1878 + $0xc] sm:$0xf]
  %v1883 = vld [vmem:[%s1878 + $0x10] sm:$0xf]
  %v1884 = vld [vmem:[%s1878 + $0x14] sm:$0xf]
  %v1885 = vld [vmem:[%s1878 + $0x18] sm:$0xf]
  %v1886 = vld [vmem:[%s1878 + $0x1c] sm:$0xf]
  %v1887 = vld [vmem:[%s1878 + $0x20] sm:$0xf]
  %v1888 = vld [vmem:[%s1878 + $0x24] sm:$0xf]
  %v1889 = vld [vmem:[%s1878 + $0x28] sm:$0xf]
  %v1890 = vld [vmem:[%s1878 + $0x2c] sm:$0xf]
  %v1891 = vld [vmem:[%s1878 + $0x30] sm:$0xf]
  %v1892 = vld [vmem:[%s1878 + $0x34] sm:$0xf]
  %v1893 = vld [vmem:[%s1878 + $0x38] sm:$0xf]
  %v1894 = vld [vmem:[%s1878 + $0x3c] sm:$0xf]
  %v1911 = vunpack.c.l.b16 %v1879
  %v1912 = vunpack.c.l.b16 %v1880
  %v1913 = vunpack.c.l.b16 %v1881
  %v1914 = vunpack.c.l.b16 %v1882
  %v1915 = vunpack.c.l.b16 %v1883
  %v1916 = vunpack.c.l.b16 %v1884
  %v1917 = vunpack.c.l.b16 %v1885
  %v1918 = vunpack.c.l.b16 %v1886
  %v1919 = vunpack.c.l.b16 %v1887
  %v1920 = vunpack.c.l.b16 %v1888
  %v1921 = vunpack.c.l.b16 %v1889
  %v1922 = vunpack.c.l.b16 %v1890
  %v1923 = vunpack.c.l.b16 %v1891
  %v1924 = vunpack.c.l.b16 %v1892
  %v1925 = vunpack.c.l.b16 %v1893
  %v1926 = vunpack.c.l.b16 %v1894
  %v1927 = vpack.c.b16 %v1912, %v1911
  %v1928 = vpack.c.b16 %v1914, %v1913
  %v1929 = vpack.c.b16 %v1916, %v1915
  %v1930 = vpack.c.b16 %v1918, %v1917
  %v1931 = vpack.c.b16 %v1920, %v1919
  %v1932 = vpack.c.b16 %v1922, %v1921
  %v1933 = vpack.c.b16 %v1924, %v1923
  %v1934 = vpack.c.b16 %v1926, %v1925
  %1943 = vmatpush.bf16.msra.mxu0 %v1934
  %1944 = vmatpush.bf16.msra.mxu0 %v1933
  %1945 = vmatpush.bf16.msra.mxu0 %v1932
  %1946 = vmatpush.bf16.msra.mxu0 %v1931
  %1947 = vmatpush.bf16.msra.mxu0 %v1930
  %1948 = vmatpush.bf16.msra.mxu0 %v1929
  %1949 = vmatpush.bf16.msra.mxu0 %v1928
  %1950 = vmatpush.bf16.msra.mxu0 %v1927
  %1951 = vmatmul.bf16.gmra.mxu0 %v1870
  %v1952 = vpop.f32.mrf.mxu0
  %v1953 = vadd.f32 0.0, %v1952
  %v1954 = vpop.f32.mrf.mxu0
  %v1955 = vadd.f32 0.0, %v1954
  %1956 = vmatmul.bf16.gmra.mxu0 %v1871
  %v1957 = vpop.f32.mrf.mxu0
  %v1958 = vadd.f32 0.0, %v1957
  %v1959 = vpop.f32.mrf.mxu0
  %v1960 = vadd.f32 0.0, %v1959
  %1961 = vmatmul.bf16.gmra.mxu0 %v1872
  %v1962 = vpop.f32.mrf.mxu0
  %v1963 = vadd.f32 0.0, %v1962
  %v1964 = vpop.f32.mrf.mxu0
  %v1965 = vadd.f32 0.0, %v1964
  %1966 = vmatmul.bf16.gmra.mxu0 %v1873
  %v1967 = vpop.f32.mrf.mxu0
  %v1968 = vadd.f32 0.0, %v1967
  %v1969 = vpop.f32.mrf.mxu0
  %v1970 = vadd.f32 0.0, %v1969
  %1971 = vmatmul.bf16.gmra.mxu0 %v1874
  %v1972 = vpop.f32.mrf.mxu0
  %v1973 = vadd.f32 0.0, %v1972
  %v1974 = vpop.f32.mrf.mxu0
  %v1975 = vadd.f32 0.0, %v1974
  %1976 = vmatmul.bf16.gmra.mxu0 %v1875
  %v1977 = vpop.f32.mrf.mxu0
  %v1978 = vadd.f32 0.0, %v1977
  %v1979 = vpop.f32.mrf.mxu0
  %v1980 = vadd.f32 0.0, %v1979
  %1981 = vmatmul.bf16.gmra.mxu0 %v1876
  %v1982 = vpop.f32.mrf.mxu0
  %v1983 = vadd.f32 0.0, %v1982
  %v1984 = vpop.f32.mrf.mxu0
  %v1985 = vadd.f32 0.0, %v1984
  %1986 = vmatmul.bf16.gmra.mxu0 %v1877
  %v1987 = vpop.f32.mrf.mxu0
  %v1988 = vadd.f32 0.0, %v1987
  %v1989 = vpop.f32.mrf.mxu0
  %v1990 = vadd.f32 0.0, %v1989
  %1991 = vdwg.mxu0
  %v1992 = vadd.f32 %v1772, %v1953
  %v1993 = vadd.f32 %v1772, %v1955
  %v1994 = vadd.f32 %v1772, %v1958
  %v1995 = vadd.f32 %v1772, %v1960
  %v1996 = vadd.f32 %v1772, %v1963
  %v1997 = vadd.f32 %v1772, %v1965
  %v1998 = vadd.f32 %v1772, %v1968
  %v1999 = vadd.f32 %v1772, %v1970
  %v2000 = vadd.f32 %v1772, %v1973
  %v2001 = vadd.f32 %v1772, %v1975
  %v2002 = vadd.f32 %v1772, %v1978
  %v2003 = vadd.f32 %v1772, %v1980
  %v2004 = vadd.f32 %v1772, %v1983
  %v2005 = vadd.f32 %v1772, %v1985
  %v2006 = vadd.f32 %v1772, %v1988
  %v2007 = vadd.f32 %v1772, %v1990
  %v2008 = vpack.c.bf16 %v1713, %v1710
  %v2009 = vpack.c.bf16 %v1719, %v1716
  %v2010 = vpack.c.bf16 %v1725, %v1722
  %v2011 = vpack.c.bf16 %v1731, %v1728
  %v2012 = vpack.c.bf16 %v1743, %v1740
  %v2013 = vpack.c.bf16 %v1749, %v1746
  %v2014 = vpack.c.bf16 %v1755, %v1752
  %v2015 = vpack.c.bf16 %v1761, %v1758
  %s2016 = scalar_lea.vmem %s1, 640
  %v2017 = vld [vmem:[%s2016] sm:$0xf]
  %v2018 = vld [vmem:[%s2016 + $0x4] sm:$0xf]
  %v2019 = vld [vmem:[%s2016 + $0x8] sm:$0xf]
  %v2020 = vld [vmem:[%s2016 + $0xc] sm:$0xf]
  %v2021 = vld [vmem:[%s2016 + $0x10] sm:$0xf]
  %v2022 = vld [vmem:[%s2016 + $0x14] sm:$0xf]
  %v2023 = vld [vmem:[%s2016 + $0x18] sm:$0xf]
  %v2024 = vld [vmem:[%s2016 + $0x1c] sm:$0xf]
  %v2025 = vld [vmem:[%s2016 + $0x20] sm:$0xf]
  %v2026 = vld [vmem:[%s2016 + $0x24] sm:$0xf]
  %v2027 = vld [vmem:[%s2016 + $0x28] sm:$0xf]
  %v2028 = vld [vmem:[%s2016 + $0x2c] sm:$0xf]
  %v2029 = vld [vmem:[%s2016 + $0x30] sm:$0xf]
  %v2030 = vld [vmem:[%s2016 + $0x34] sm:$0xf]
  %v2031 = vld [vmem:[%s2016 + $0x38] sm:$0xf]
  %v2032 = vld [vmem:[%s2016 + $0x3c] sm:$0xf]
  %v2049 = vunpack.c.l.b16 %v2017
  %v2050 = vunpack.c.l.b16 %v2018
  %v2051 = vunpack.c.l.b16 %v2019
  %v2052 = vunpack.c.l.b16 %v2020
  %v2053 = vunpack.c.l.b16 %v2021
  %v2054 = vunpack.c.l.b16 %v2022
  %v2055 = vunpack.c.l.b16 %v2023
  %v2056 = vunpack.c.l.b16 %v2024
  %v2057 = vunpack.c.l.b16 %v2025
  %v2058 = vunpack.c.l.b16 %v2026
  %v2059 = vunpack.c.l.b16 %v2027
  %v2060 = vunpack.c.l.b16 %v2028
  %v2061 = vunpack.c.l.b16 %v2029
  %v2062 = vunpack.c.l.b16 %v2030
  %v2063 = vunpack.c.l.b16 %v2031
  %v2064 = vunpack.c.l.b16 %v2032
  %v2065 = vpack.c.b16 %v2050, %v2049
  %v2066 = vpack.c.b16 %v2052, %v2051
  %v2067 = vpack.c.b16 %v2054, %v2053
  %v2068 = vpack.c.b16 %v2056, %v2055
  %v2069 = vpack.c.b16 %v2058, %v2057
  %v2070 = vpack.c.b16 %v2060, %v2059
  %v2071 = vpack.c.b16 %v2062, %v2061
  %v2072 = vpack.c.b16 %v2064, %v2063
  %2081 = vmatpush.bf16.msra.mxu0 %v2072
  %2082 = vmatpush.bf16.msra.mxu0 %v2071
  %2083 = vmatpush.bf16.msra.mxu0 %v2070
  %2084 = vmatpush.bf16.msra.mxu0 %v2069
  %2085 = vmatpush.bf16.msra.mxu0 %v2068
  %2086 = vmatpush.bf16.msra.mxu0 %v2067
  %2087 = vmatpush.bf16.msra.mxu0 %v2066
  %2088 = vmatpush.bf16.msra.mxu0 %v2065
  %2089 = vmatmul.bf16.gmra.mxu0 %v2008
  %v2090 = vpop.f32.mrf.mxu0
  %v2091 = vadd.f32 0.0, %v2090
  %v2092 = vpop.f32.mrf.mxu0
  %v2093 = vadd.f32 0.0, %v2092
  %2094 = vmatmul.bf16.gmra.mxu0 %v2009
  %v2095 = vpop.f32.mrf.mxu0
  %v2096 = vadd.f32 0.0, %v2095
  %v2097 = vpop.f32.mrf.mxu0
  %v2098 = vadd.f32 0.0, %v2097
  %2099 = vmatmul.bf16.gmra.mxu0 %v2010
  %v2100 = vpop.f32.mrf.mxu0
  %v2101 = vadd.f32 0.0, %v2100
  %v2102 = vpop.f32.mrf.mxu0
  %v2103 = vadd.f32 0.0, %v2102
  %2104 = vmatmul.bf16.gmra.mxu0 %v2011
  %v2105 = vpop.f32.mrf.mxu0
  %v2106 = vadd.f32 0.0, %v2105
  %v2107 = vpop.f32.mrf.mxu0
  %v2108 = vadd.f32 0.0, %v2107
  %2109 = vmatmul.bf16.gmra.mxu0 %v2012
  %v2110 = vpop.f32.mrf.mxu0
  %v2111 = vadd.f32 0.0, %v2110
  %v2112 = vpop.f32.mrf.mxu0
  %v2113 = vadd.f32 0.0, %v2112
  %2114 = vmatmul.bf16.gmra.mxu0 %v2013
  %v2115 = vpop.f32.mrf.mxu0
  %v2116 = vadd.f32 0.0, %v2115
  %v2117 = vpop.f32.mrf.mxu0
  %v2118 = vadd.f32 0.0, %v2117
  %2119 = vmatmul.bf16.gmra.mxu0 %v2014
  %v2120 = vpop.f32.mrf.mxu0
  %v2121 = vadd.f32 0.0, %v2120
  %v2122 = vpop.f32.mrf.mxu0
  %v2123 = vadd.f32 0.0, %v2122
  %2124 = vmatmul.bf16.gmra.mxu0 %v2015
  %v2125 = vpop.f32.mrf.mxu0
  %v2126 = vadd.f32 0.0, %v2125
  %v2127 = vpop.f32.mrf.mxu0
  %v2128 = vadd.f32 0.0, %v2127
  %2129 = vdwg.mxu0
  %v2130 = vadd.f32 %v1992, %v2091
  %v2131 = vadd.f32 %v1993, %v2093
  %v2132 = vadd.f32 %v1994, %v2096
  %v2133 = vadd.f32 %v1995, %v2098
  %v2134 = vadd.f32 %v1996, %v2101
  %v2135 = vadd.f32 %v1997, %v2103
  %v2136 = vadd.f32 %v1998, %v2106
  %v2137 = vadd.f32 %v1999, %v2108
  %v2138 = vadd.f32 %v2000, %v2111
  %v2139 = vadd.f32 %v2001, %v2113
  %v2140 = vadd.f32 %v2002, %v2116
  %v2141 = vadd.f32 %v2003, %v2118
  %v2142 = vadd.f32 %v2004, %v2121
  %v2143 = vadd.f32 %v2005, %v2123
  %v2144 = vadd.f32 %v2006, %v2126
  %v2145 = vadd.f32 %v2007, %v2128
  %v2162 = vrot.slane %v1710, 1
  %v2163 = vrot.slane %v1711, 1
  %v2164 = vsel %vm619, %v2162, %v2163
  %v2165 = vrot.slane %v1713, 1
  %v2166 = vrot.slane %v1714, 1
  %v2167 = vsel %vm619, %v2165, %v2166
  %v2168 = vrot.slane %v1716, 1
  %v2169 = vrot.slane %v1717, 1
  %v2170 = vsel %vm619, %v2168, %v2169
  %v2171 = vrot.slane %v1719, 1
  %v2172 = vrot.slane %v1720, 1
  %v2173 = vsel %vm619, %v2171, %v2172
  %v2174 = vrot.slane %v1722, 1
  %v2175 = vrot.slane %v1723, 1
  %v2176 = vsel %vm619, %v2174, %v2175
  %v2177 = vrot.slane %v1725, 1
  %v2178 = vrot.slane %v1726, 1
  %v2179 = vsel %vm619, %v2177, %v2178
  %v2180 = vrot.slane %v1728, 1
  %v2181 = vrot.slane %v1729, 1
  %v2182 = vsel %vm619, %v2180, %v2181
  %v2183 = vrot.slane %v1731, 1
  %v2184 = vrot.slane %v1732, 1
  %v2185 = vsel %vm619, %v2183, %v2184
  %v2186 = vrot.slane %v1740, 1
  %v2187 = vrot.slane %v1741, 1
  %v2188 = vsel %vm619, %v2186, %v2187
  %v2189 = vrot.slane %v1743, 1
  %v2190 = vrot.slane %v1744, 1
  %v2191 = vsel %vm619, %v2189, %v2190
  %v2192 = vrot.slane %v1746, 1
  %v2193 = vrot.slane %v1747, 1
  %v2194 = vsel %vm619, %v2192, %v2193
  %v2195 = vrot.slane %v1749, 1
  %v2196 = vrot.slane %v1750, 1
  %v2197 = vsel %vm619, %v2195, %v2196
  %v2198 = vrot.slane %v1752, 1
  %v2199 = vrot.slane %v1753, 1
  %v2200 = vsel %vm619, %v2198, %v2199
  %v2201 = vrot.slane %v1755, 1
  %v2202 = vrot.slane %v1756, 1
  %v2203 = vsel %vm619, %v2201, %v2202
  %v2204 = vrot.slane %v1758, 1
  %v2205 = vrot.slane %v1759, 1
  %v2206 = vsel %vm619, %v2204, %v2205
  %v2207 = vrot.slane %v1761, 1
  %v2208 = vrot.slane %v1762, 1
  %v2209 = vsel %vm619, %v2207, %v2208
  %v2226 = vpack.c.bf16 %v2167, %v2164
  %v2227 = vpack.c.bf16 %v2173, %v2170
  %v2228 = vpack.c.bf16 %v2179, %v2176
  %v2229 = vpack.c.bf16 %v2185, %v2182
  %v2230 = vpack.c.bf16 %v2191, %v2188
  %v2231 = vpack.c.bf16 %v2197, %v2194
  %v2232 = vpack.c.bf16 %v2203, %v2200
  %v2233 = vpack.c.bf16 %v2209, %v2206
  %s2234 = scalar_lea.vmem %s1, 704
  %v2235 = vld [vmem:[%s2234] sm:$0xf]
  %v2236 = vld [vmem:[%s2234 + $0x4] sm:$0xf]
  %v2237 = vld [vmem:[%s2234 + $0x8] sm:$0xf]
  %v2238 = vld [vmem:[%s2234 + $0xc] sm:$0xf]
  %v2239 = vld [vmem:[%s2234 + $0x10] sm:$0xf]
  %v2240 = vld [vmem:[%s2234 + $0x14] sm:$0xf]
  %v2241 = vld [vmem:[%s2234 + $0x18] sm:$0xf]
  %v2242 = vld [vmem:[%s2234 + $0x1c] sm:$0xf]
  %v2243 = vld [vmem:[%s2234 + $0x20] sm:$0xf]
  %v2244 = vld [vmem:[%s2234 + $0x24] sm:$0xf]
  %v2245 = vld [vmem:[%s2234 + $0x28] sm:$0xf]
  %v2246 = vld [vmem:[%s2234 + $0x2c] sm:$0xf]
  %v2247 = vld [vmem:[%s2234 + $0x30] sm:$0xf]
  %v2248 = vld [vmem:[%s2234 + $0x34] sm:$0xf]
  %v2249 = vld [vmem:[%s2234 + $0x38] sm:$0xf]
  %v2250 = vld [vmem:[%s2234 + $0x3c] sm:$0xf]
  %v2267 = vunpack.c.l.b16 %v2235
  %v2268 = vunpack.c.l.b16 %v2236
  %v2269 = vunpack.c.l.b16 %v2237
  %v2270 = vunpack.c.l.b16 %v2238
  %v2271 = vunpack.c.l.b16 %v2239
  %v2272 = vunpack.c.l.b16 %v2240
  %v2273 = vunpack.c.l.b16 %v2241
  %v2274 = vunpack.c.l.b16 %v2242
  %v2275 = vunpack.c.l.b16 %v2243
  %v2276 = vunpack.c.l.b16 %v2244
  %v2277 = vunpack.c.l.b16 %v2245
  %v2278 = vunpack.c.l.b16 %v2246
  %v2279 = vunpack.c.l.b16 %v2247
  %v2280 = vunpack.c.l.b16 %v2248
  %v2281 = vunpack.c.l.b16 %v2249
  %v2282 = vunpack.c.l.b16 %v2250
  %v2283 = vpack.c.b16 %v2268, %v2267
  %v2284 = vpack.c.b16 %v2270, %v2269
  %v2285 = vpack.c.b16 %v2272, %v2271
  %v2286 = vpack.c.b16 %v2274, %v2273
  %v2287 = vpack.c.b16 %v2276, %v2275
  %v2288 = vpack.c.b16 %v2278, %v2277
  %v2289 = vpack.c.b16 %v2280, %v2279
  %v2290 = vpack.c.b16 %v2282, %v2281
  %2299 = vmatpush.bf16.msra.mxu0 %v2290
  %2300 = vmatpush.bf16.msra.mxu0 %v2289
  %2301 = vmatpush.bf16.msra.mxu0 %v2288
  %2302 = vmatpush.bf16.msra.mxu0 %v2287
  %2303 = vmatpush.bf16.msra.mxu0 %v2286
  %2304 = vmatpush.bf16.msra.mxu0 %v2285
  %2305 = vmatpush.bf16.msra.mxu0 %v2284
  %2306 = vmatpush.bf16.msra.mxu0 %v2283
  %2307 = vmatmul.bf16.gmra.mxu0 %v2226
  %v2308 = vpop.f32.mrf.mxu0
  %v2309 = vadd.f32 0.0, %v2308
  %v2310 = vpop.f32.mrf.mxu0
  %v2311 = vadd.f32 0.0, %v2310
  %2312 = vmatmul.bf16.gmra.mxu0 %v2227
  %v2313 = vpop.f32.mrf.mxu0
  %v2314 = vadd.f32 0.0, %v2313
  %v2315 = vpop.f32.mrf.mxu0
  %v2316 = vadd.f32 0.0, %v2315
  %2317 = vmatmul.bf16.gmra.mxu0 %v2228
  %v2318 = vpop.f32.mrf.mxu0
  %v2319 = vadd.f32 0.0, %v2318
  %v2320 = vpop.f32.mrf.mxu0
  %v2321 = vadd.f32 0.0, %v2320
  %2322 = vmatmul.bf16.gmra.mxu0 %v2229
  %v2323 = vpop.f32.mrf.mxu0
  %v2324 = vadd.f32 0.0, %v2323
  %v2325 = vpop.f32.mrf.mxu0
  %v2326 = vadd.f32 0.0, %v2325
  %2327 = vmatmul.bf16.gmra.mxu0 %v2230
  %v2328 = vpop.f32.mrf.mxu0
  %v2329 = vadd.f32 0.0, %v2328
  %v2330 = vpop.f32.mrf.mxu0
  %v2331 = vadd.f32 0.0, %v2330
  %2332 = vmatmul.bf16.gmra.mxu0 %v2231
  %v2333 = vpop.f32.mrf.mxu0
  %v2334 = vadd.f32 0.0, %v2333
  %v2335 = vpop.f32.mrf.mxu0
  %v2336 = vadd.f32 0.0, %v2335
  %2337 = vmatmul.bf16.gmra.mxu0 %v2232
  %v2338 = vpop.f32.mrf.mxu0
  %v2339 = vadd.f32 0.0, %v2338
  %v2340 = vpop.f32.mrf.mxu0
  %v2341 = vadd.f32 0.0, %v2340
  %2342 = vmatmul.bf16.gmra.mxu0 %v2233
  %v2343 = vpop.f32.mrf.mxu0
  %v2344 = vadd.f32 0.0, %v2343
  %v2345 = vpop.f32.mrf.mxu0
  %v2346 = vadd.f32 0.0, %v2345
  %2347 = vdwg.mxu0
  %v2348 = vadd.f32 %v2130, %v2309
  %v2349 = vadd.f32 %v2131, %v2311
  %v2350 = vadd.f32 %v2132, %v2314
  %v2351 = vadd.f32 %v2133, %v2316
  %v2352 = vadd.f32 %v2134, %v2319
  %v2353 = vadd.f32 %v2135, %v2321
  %v2354 = vadd.f32 %v2136, %v2324
  %v2355 = vadd.f32 %v2137, %v2326
  %v2356 = vadd.f32 %v2138, %v2329
  %v2357 = vadd.f32 %v2139, %v2331
  %v2358 = vadd.f32 %v2140, %v2334
  %v2359 = vadd.f32 %v2141, %v2336
  %v2360 = vadd.f32 %v2142, %v2339
  %v2361 = vadd.f32 %v2143, %v2341
  %v2362 = vadd.f32 %v2144, %v2344
  %v2363 = vadd.f32 %v2145, %v2346
  %v2368 = vrot.slane %v1733, 7
  %v2369 = vrot.slane %v1734, 7
  %v2370 = vsel %vm263, %v2368, %v2369
  %v2371 = vrot.slane %v1763, 7
  %v2372 = vrot.slane %v1764, 7
  %v2373 = vsel %vm263, %v2371, %v2372
  %v2376 = vpack.c.bf16 %v1814, %v1811
  %v2377 = vpack.c.bf16 %v1820, %v1817
  %v2378 = vpack.c.bf16 %v1826, %v1823
  %v2379 = vpack.c.bf16 %v2370, %v1829
  %v2380 = vpack.c.bf16 %v1838, %v1835
  %v2381 = vpack.c.bf16 %v1844, %v1841
  %v2382 = vpack.c.bf16 %v1850, %v1847
  %v2383 = vpack.c.bf16 %v2373, %v1853
  %s2384 = scalar_lea.vmem %s1, 768
  %v2385 = vld [vmem:[%s2384] sm:$0xf]
  %v2386 = vld [vmem:[%s2384 + $0x4] sm:$0xf]
  %v2387 = vld [vmem:[%s2384 + $0x8] sm:$0xf]
  %v2388 = vld [vmem:[%s2384 + $0xc] sm:$0xf]
  %v2389 = vld [vmem:[%s2384 + $0x10] sm:$0xf]
  %v2390 = vld [vmem:[%s2384 + $0x14] sm:$0xf]
  %v2391 = vld [vmem:[%s2384 + $0x18] sm:$0xf]
  %v2392 = vld [vmem:[%s2384 + $0x1c] sm:$0xf]
  %v2393 = vld [vmem:[%s2384 + $0x20] sm:$0xf]
  %v2394 = vld [vmem:[%s2384 + $0x24] sm:$0xf]
  %v2395 = vld [vmem:[%s2384 + $0x28] sm:$0xf]
  %v2396 = vld [vmem:[%s2384 + $0x2c] sm:$0xf]
  %v2397 = vld [vmem:[%s2384 + $0x30] sm:$0xf]
  %v2398 = vld [vmem:[%s2384 + $0x34] sm:$0xf]
  %v2399 = vld [vmem:[%s2384 + $0x38] sm:$0xf]
  %v2400 = vld [vmem:[%s2384 + $0x3c] sm:$0xf]
  %v2417 = vunpack.c.l.b16 %v2385
  %v2418 = vunpack.c.l.b16 %v2386
  %v2419 = vunpack.c.l.b16 %v2387
  %v2420 = vunpack.c.l.b16 %v2388
  %v2421 = vunpack.c.l.b16 %v2389
  %v2422 = vunpack.c.l.b16 %v2390
  %v2423 = vunpack.c.l.b16 %v2391
  %v2424 = vunpack.c.l.b16 %v2392
  %v2425 = vunpack.c.l.b16 %v2393
  %v2426 = vunpack.c.l.b16 %v2394
  %v2427 = vunpack.c.l.b16 %v2395
  %v2428 = vunpack.c.l.b16 %v2396
  %v2429 = vunpack.c.l.b16 %v2397
  %v2430 = vunpack.c.l.b16 %v2398
  %v2431 = vunpack.c.l.b16 %v2399
  %v2432 = vunpack.c.l.b16 %v2400
  %v2433 = vpack.c.b16 %v2418, %v2417
  %v2434 = vpack.c.b16 %v2420, %v2419
  %v2435 = vpack.c.b16 %v2422, %v2421
  %v2436 = vpack.c.b16 %v2424, %v2423
  %v2437 = vpack.c.b16 %v2426, %v2425
  %v2438 = vpack.c.b16 %v2428, %v2427
  %v2439 = vpack.c.b16 %v2430, %v2429
  %v2440 = vpack.c.b16 %v2432, %v2431
  %2449 = vmatpush.bf16.msra.mxu0 %v2440
  %2450 = vmatpush.bf16.msra.mxu0 %v2439
  %2451 = vmatpush.bf16.msra.mxu0 %v2438
  %2452 = vmatpush.bf16.msra.mxu0 %v2437
  %2453 = vmatpush.bf16.msra.mxu0 %v2436
  %2454 = vmatpush.bf16.msra.mxu0 %v2435
  %2455 = vmatpush.bf16.msra.mxu0 %v2434
  %2456 = vmatpush.bf16.msra.mxu0 %v2433
  %2457 = vmatmul.bf16.gmra.mxu0 %v2376
  %v2458 = vpop.f32.mrf.mxu0
  %v2459 = vadd.f32 0.0, %v2458
  %v2460 = vpop.f32.mrf.mxu0
  %v2461 = vadd.f32 0.0, %v2460
  %2462 = vmatmul.bf16.gmra.mxu0 %v2377
  %v2463 = vpop.f32.mrf.mxu0
  %v2464 = vadd.f32 0.0, %v2463
  %v2465 = vpop.f32.mrf.mxu0
  %v2466 = vadd.f32 0.0, %v2465
  %2467 = vmatmul.bf16.gmra.mxu0 %v2378
  %v2468 = vpop.f32.mrf.mxu0
  %v2469 = vadd.f32 0.0, %v2468
  %v2470 = vpop.f32.mrf.mxu0
  %v2471 = vadd.f32 0.0, %v2470
  %2472 = vmatmul.bf16.gmra.mxu0 %v2379
  %v2473 = vpop.f32.mrf.mxu0
  %v2474 = vadd.f32 0.0, %v2473
  %v2475 = vpop.f32.mrf.mxu0
  %v2476 = vadd.f32 0.0, %v2475
  %2477 = vmatmul.bf16.gmra.mxu0 %v2380
  %v2478 = vpop.f32.mrf.mxu0
  %v2479 = vadd.f32 0.0, %v2478
  %v2480 = vpop.f32.mrf.mxu0
  %v2481 = vadd.f32 0.0, %v2480
  %2482 = vmatmul.bf16.gmra.mxu0 %v2381
  %v2483 = vpop.f32.mrf.mxu0
  %v2484 = vadd.f32 0.0, %v2483
  %v2485 = vpop.f32.mrf.mxu0
  %v2486 = vadd.f32 0.0, %v2485
  %2487 = vmatmul.bf16.gmra.mxu0 %v2382
  %v2488 = vpop.f32.mrf.mxu0
  %v2489 = vadd.f32 0.0, %v2488
  %v2490 = vpop.f32.mrf.mxu0
  %v2491 = vadd.f32 0.0, %v2490
  %2492 = vmatmul.bf16.gmra.mxu0 %v2383
  %v2493 = vpop.f32.mrf.mxu0
  %v2494 = vadd.f32 0.0, %v2493
  %v2495 = vpop.f32.mrf.mxu0
  %v2496 = vadd.f32 0.0, %v2495
  %2497 = vdwg.mxu0
  %v2498 = vadd.f32 %v2348, %v2459
  %v2499 = vadd.f32 %v2349, %v2461
  %v2500 = vadd.f32 %v2350, %v2464
  %v2501 = vadd.f32 %v2351, %v2466
  %v2502 = vadd.f32 %v2352, %v2469
  %v2503 = vadd.f32 %v2353, %v2471
  %v2504 = vadd.f32 %v2354, %v2474
  %v2505 = vadd.f32 %v2355, %v2476
  %v2506 = vadd.f32 %v2356, %v2479
  %v2507 = vadd.f32 %v2357, %v2481
  %v2508 = vadd.f32 %v2358, %v2484
  %v2509 = vadd.f32 %v2359, %v2486
  %v2510 = vadd.f32 %v2360, %v2489
  %v2511 = vadd.f32 %v2361, %v2491
  %v2512 = vadd.f32 %v2362, %v2494
  %v2513 = vadd.f32 %v2363, %v2496
  %v2514 = vpack.c.bf16 %v1716, %v1713
  %v2515 = vpack.c.bf16 %v1722, %v1719
  %v2516 = vpack.c.bf16 %v1728, %v1725
  %v2517 = vpack.c.bf16 %v1734, %v1731
  %v2518 = vpack.c.bf16 %v1746, %v1743
  %v2519 = vpack.c.bf16 %v1752, %v1749
  %v2520 = vpack.c.bf16 %v1758, %v1755
  %v2521 = vpack.c.bf16 %v1764, %v1761
  %s2522 = scalar_lea.vmem %s1, 832
  %v2523 = vld [vmem:[%s2522] sm:$0xf]
  %v2524 = vld [vmem:[%s2522 + $0x4] sm:$0xf]
  %v2525 = vld [vmem:[%s2522 + $0x8] sm:$0xf]
  %v2526 = vld [vmem:[%s2522 + $0xc] sm:$0xf]
  %v2527 = vld [vmem:[%s2522 + $0x10] sm:$0xf]
  %v2528 = vld [vmem:[%s2522 + $0x14] sm:$0xf]
  %v2529 = vld [vmem:[%s2522 + $0x18] sm:$0xf]
  %v2530 = vld [vmem:[%s2522 + $0x1c] sm:$0xf]
  %v2531 = vld [vmem:[%s2522 + $0x20] sm:$0xf]
  %v2532 = vld [vmem:[%s2522 + $0x24] sm:$0xf]
  %v2533 = vld [vmem:[%s2522 + $0x28] sm:$0xf]
  %v2534 = vld [vmem:[%s2522 + $0x2c] sm:$0xf]
  %v2535 = vld [vmem:[%s2522 + $0x30] sm:$0xf]
  %v2536 = vld [vmem:[%s2522 + $0x34] sm:$0xf]
  %v2537 = vld [vmem:[%s2522 + $0x38] sm:$0xf]
  %v2538 = vld [vmem:[%s2522 + $0x3c] sm:$0xf]
  %v2555 = vunpack.c.l.b16 %v2523
  %v2556 = vunpack.c.l.b16 %v2524
  %v2557 = vunpack.c.l.b16 %v2525
  %v2558 = vunpack.c.l.b16 %v2526
  %v2559 = vunpack.c.l.b16 %v2527
  %v2560 = vunpack.c.l.b16 %v2528
  %v2561 = vunpack.c.l.b16 %v2529
  %v2562 = vunpack.c.l.b16 %v2530
  %v2563 = vunpack.c.l.b16 %v2531
  %v2564 = vunpack.c.l.b16 %v2532
  %v2565 = vunpack.c.l.b16 %v2533
  %v2566 = vunpack.c.l.b16 %v2534
  %v2567 = vunpack.c.l.b16 %v2535
  %v2568 = vunpack.c.l.b16 %v2536
  %v2569 = vunpack.c.l.b16 %v2537
  %v2570 = vunpack.c.l.b16 %v2538
  %v2571 = vpack.c.b16 %v2556, %v2555
  %v2572 = vpack.c.b16 %v2558, %v2557
  %v2573 = vpack.c.b16 %v2560, %v2559
  %v2574 = vpack.c.b16 %v2562, %v2561
  %v2575 = vpack.c.b16 %v2564, %v2563
  %v2576 = vpack.c.b16 %v2566, %v2565
  %v2577 = vpack.c.b16 %v2568, %v2567
  %v2578 = vpack.c.b16 %v2570, %v2569
  %2587 = vmatpush.bf16.msra.mxu0 %v2578
  %2588 = vmatpush.bf16.msra.mxu0 %v2577
  %2589 = vmatpush.bf16.msra.mxu0 %v2576
  %2590 = vmatpush.bf16.msra.mxu0 %v2575
  %2591 = vmatpush.bf16.msra.mxu0 %v2574
  %2592 = vmatpush.bf16.msra.mxu0 %v2573
  %2593 = vmatpush.bf16.msra.mxu0 %v2572
  %2594 = vmatpush.bf16.msra.mxu0 %v2571
  %2595 = vmatmul.bf16.gmra.mxu0 %v2514
  %v2596 = vpop.f32.mrf.mxu0
  %v2597 = vadd.f32 0.0, %v2596
  %v2598 = vpop.f32.mrf.mxu0
  %v2599 = vadd.f32 0.0, %v2598
  %2600 = vmatmul.bf16.gmra.mxu0 %v2515
  %v2601 = vpop.f32.mrf.mxu0
  %v2602 = vadd.f32 0.0, %v2601
  %v2603 = vpop.f32.mrf.mxu0
  %v2604 = vadd.f32 0.0, %v2603
  %2605 = vmatmul.bf16.gmra.mxu0 %v2516
  %v2606 = vpop.f32.mrf.mxu0
  %v2607 = vadd.f32 0.0, %v2606
  %v2608 = vpop.f32.mrf.mxu0
  %v2609 = vadd.f32 0.0, %v2608
  %2610 = vmatmul.bf16.gmra.mxu0 %v2517
  %v2611 = vpop.f32.mrf.mxu0
  %v2612 = vadd.f32 0.0, %v2611
  %v2613 = vpop.f32.mrf.mxu0
  %v2614 = vadd.f32 0.0, %v2613
  %2615 = vmatmul.bf16.gmra.mxu0 %v2518
  %v2616 = vpop.f32.mrf.mxu0
  %v2617 = vadd.f32 0.0, %v2616
  %v2618 = vpop.f32.mrf.mxu0
  %v2619 = vadd.f32 0.0, %v2618
  %2620 = vmatmul.bf16.gmra.mxu0 %v2519
  %v2621 = vpop.f32.mrf.mxu0
  %v2622 = vadd.f32 0.0, %v2621
  %v2623 = vpop.f32.mrf.mxu0
  %v2624 = vadd.f32 0.0, %v2623
  %2625 = vmatmul.bf16.gmra.mxu0 %v2520
  %v2626 = vpop.f32.mrf.mxu0
  %v2627 = vadd.f32 0.0, %v2626
  %v2628 = vpop.f32.mrf.mxu0
  %v2629 = vadd.f32 0.0, %v2628
  %2630 = vmatmul.bf16.gmra.mxu0 %v2521
  %v2631 = vpop.f32.mrf.mxu0
  %v2632 = vadd.f32 0.0, %v2631
  %v2633 = vpop.f32.mrf.mxu0
  %v2634 = vadd.f32 0.0, %v2633
  %2635 = vdwg.mxu0
  %v2636 = vadd.f32 %v2498, %v2597
  %v2637 = vadd.f32 %v2499, %v2599
  %v2638 = vadd.f32 %v2500, %v2602
  %v2639 = vadd.f32 %v2501, %v2604
  %v2640 = vadd.f32 %v2502, %v2607
  %v2641 = vadd.f32 %v2503, %v2609
  %v2642 = vadd.f32 %v2504, %v2612
  %v2643 = vadd.f32 %v2505, %v2614
  %v2644 = vadd.f32 %v2506, %v2617
  %v2645 = vadd.f32 %v2507, %v2619
  %v2646 = vadd.f32 %v2508, %v2622
  %v2647 = vadd.f32 %v2509, %v2624
  %v2648 = vadd.f32 %v2510, %v2627
  %v2649 = vadd.f32 %v2511, %v2629
  %v2650 = vadd.f32 %v2512, %v2632
  %v2651 = vadd.f32 %v2513, %v2634
  %v2654 = vrot.slane %v1734, 1
  %v2655 = vrot.slane %v1735, 1
  %v2656 = vsel %vm619, %v2654, %v2655
  %v2657 = vrot.slane %v1764, 1
  %v2658 = vrot.slane %v1765, 1
  %v2659 = vsel %vm619, %v2657, %v2658
  %v2662 = vpack.c.bf16 %v2170, %v2167
  %v2663 = vpack.c.bf16 %v2176, %v2173
  %v2664 = vpack.c.bf16 %v2182, %v2179
  %v2665 = vpack.c.bf16 %v2656, %v2185
  %v2666 = vpack.c.bf16 %v2194, %v2191
  %v2667 = vpack.c.bf16 %v2200, %v2197
  %v2668 = vpack.c.bf16 %v2206, %v2203
  %v2669 = vpack.c.bf16 %v2659, %v2209
  %s2670 = scalar_lea.vmem %s1, 896
  %v2671 = vld [vmem:[%s2670] sm:$0xf]
  %v2672 = vld [vmem:[%s2670 + $0x4] sm:$0xf]
  %v2673 = vld [vmem:[%s2670 + $0x8] sm:$0xf]
  %v2674 = vld [vmem:[%s2670 + $0xc] sm:$0xf]
  %v2675 = vld [vmem:[%s2670 + $0x10] sm:$0xf]
  %v2676 = vld [vmem:[%s2670 + $0x14] sm:$0xf]
  %v2677 = vld [vmem:[%s2670 + $0x18] sm:$0xf]
  %v2678 = vld [vmem:[%s2670 + $0x1c] sm:$0xf]
  %v2679 = vld [vmem:[%s2670 + $0x20] sm:$0xf]
  %v2680 = vld [vmem:[%s2670 + $0x24] sm:$0xf]
  %v2681 = vld [vmem:[%s2670 + $0x28] sm:$0xf]
  %v2682 = vld [vmem:[%s2670 + $0x2c] sm:$0xf]
  %v2683 = vld [vmem:[%s2670 + $0x30] sm:$0xf]
  %v2684 = vld [vmem:[%s2670 + $0x34] sm:$0xf]
  %v2685 = vld [vmem:[%s2670 + $0x38] sm:$0xf]
  %v2686 = vld [vmem:[%s2670 + $0x3c] sm:$0xf]
  %v2703 = vunpack.c.l.b16 %v2671
  %v2704 = vunpack.c.l.b16 %v2672
  %v2705 = vunpack.c.l.b16 %v2673
  %v2706 = vunpack.c.l.b16 %v2674
  %v2707 = vunpack.c.l.b16 %v2675
  %v2708 = vunpack.c.l.b16 %v2676
  %v2709 = vunpack.c.l.b16 %v2677
  %v2710 = vunpack.c.l.b16 %v2678
  %v2711 = vunpack.c.l.b16 %v2679
  %v2712 = vunpack.c.l.b16 %v2680
  %v2713 = vunpack.c.l.b16 %v2681
  %v2714 = vunpack.c.l.b16 %v2682
  %v2715 = vunpack.c.l.b16 %v2683
  %v2716 = vunpack.c.l.b16 %v2684
  %v2717 = vunpack.c.l.b16 %v2685
  %v2718 = vunpack.c.l.b16 %v2686
  %v2719 = vpack.c.b16 %v2704, %v2703
  %v2720 = vpack.c.b16 %v2706, %v2705
  %v2721 = vpack.c.b16 %v2708, %v2707
  %v2722 = vpack.c.b16 %v2710, %v2709
  %v2723 = vpack.c.b16 %v2712, %v2711
  %v2724 = vpack.c.b16 %v2714, %v2713
  %v2725 = vpack.c.b16 %v2716, %v2715
  %v2726 = vpack.c.b16 %v2718, %v2717
  %2735 = vmatpush.bf16.msra.mxu0 %v2726
  %2736 = vmatpush.bf16.msra.mxu0 %v2725
  %2737 = vmatpush.bf16.msra.mxu0 %v2724
  %2738 = vmatpush.bf16.msra.mxu0 %v2723
  %2739 = vmatpush.bf16.msra.mxu0 %v2722
  %2740 = vmatpush.bf16.msra.mxu0 %v2721
  %2741 = vmatpush.bf16.msra.mxu0 %v2720
  %2742 = vmatpush.bf16.msra.mxu0 %v2719
  %2743 = vmatmul.bf16.gmra.mxu0 %v2662
  %v2744 = vpop.f32.mrf.mxu0
  %v2745 = vadd.f32 0.0, %v2744
  %v2746 = vpop.f32.mrf.mxu0
  %v2747 = vadd.f32 0.0, %v2746
  %2748 = vmatmul.bf16.gmra.mxu0 %v2663
  %v2749 = vpop.f32.mrf.mxu0
  %v2750 = vadd.f32 0.0, %v2749
  %v2751 = vpop.f32.mrf.mxu0
  %v2752 = vadd.f32 0.0, %v2751
  %2753 = vmatmul.bf16.gmra.mxu0 %v2664
  %v2754 = vpop.f32.mrf.mxu0
  %v2755 = vadd.f32 0.0, %v2754
  %v2756 = vpop.f32.mrf.mxu0
  %v2757 = vadd.f32 0.0, %v2756
  %2758 = vmatmul.bf16.gmra.mxu0 %v2665
  %v2759 = vpop.f32.mrf.mxu0
  %v2760 = vadd.f32 0.0, %v2759
  %v2761 = vpop.f32.mrf.mxu0
  %v2762 = vadd.f32 0.0, %v2761
  %2763 = vmatmul.bf16.gmra.mxu0 %v2666
  %v2764 = vpop.f32.mrf.mxu0
  %v2765 = vadd.f32 0.0, %v2764
  %v2766 = vpop.f32.mrf.mxu0
  %v2767 = vadd.f32 0.0, %v2766
  %2768 = vmatmul.bf16.gmra.mxu0 %v2667
  %v2769 = vpop.f32.mrf.mxu0
  %v2770 = vadd.f32 0.0, %v2769
  %v2771 = vpop.f32.mrf.mxu0
  %v2772 = vadd.f32 0.0, %v2771
  %2773 = vmatmul.bf16.gmra.mxu0 %v2668
  %v2774 = vpop.f32.mrf.mxu0
  %v2775 = vadd.f32 0.0, %v2774
  %v2776 = vpop.f32.mrf.mxu0
  %v2777 = vadd.f32 0.0, %v2776
  %2778 = vmatmul.bf16.gmra.mxu0 %v2669
  %v2779 = vpop.f32.mrf.mxu0
  %v2780 = vadd.f32 0.0, %v2779
  %v2781 = vpop.f32.mrf.mxu0
  %v2782 = vadd.f32 0.0, %v2781
  %2783 = vdwg.mxu0
  %v2784 = vadd.f32 %v2636, %v2745
  %v2785 = vadd.f32 %v2637, %v2747
  %v2786 = vadd.f32 %v2638, %v2750
  %v2787 = vadd.f32 %v2639, %v2752
  %v2788 = vadd.f32 %v2640, %v2755
  %v2789 = vadd.f32 %v2641, %v2757
  %v2790 = vadd.f32 %v2642, %v2760
  %v2791 = vadd.f32 %v2643, %v2762
  %v2792 = vadd.f32 %v2644, %v2765
  %v2793 = vadd.f32 %v2645, %v2767
  %v2794 = vadd.f32 %v2646, %v2770
  %v2795 = vadd.f32 %v2647, %v2772
  %v2796 = vadd.f32 %v2648, %v2775
  %v2797 = vadd.f32 %v2649, %v2777
  %v2798 = vadd.f32 %v2650, %v2780
  %v2799 = vadd.f32 %v2651, %v2782
  %v2804 = vrot.slane %v1736, 7
  %v2805 = vrot.slane %v1737, 7
  %v2806 = vsel %vm263, %v2804, %v2805
  %v2807 = vrot.slane %v1766, 7
  %v2808 = vrot.slane %v1767, 7
  %v2809 = vsel %vm263, %v2807, %v2808
  %v2812 = vpack.c.bf16 %v2806, %v2370
  %v2813 = vpack.c.bf16 %v2809, %v2373
  %s2814 = scalar_lea.vmem %s1, 960
  %v2815 = vld [vmem:[%s2814] sm:$0xf]
  %v2816 = vld [vmem:[%s2814 + $0x4] sm:$0xf]
  %v2817 = vld [vmem:[%s2814 + $0x8] sm:$0xf]
  %v2818 = vld [vmem:[%s2814 + $0xc] sm:$0xf]
  %v2819 = vld [vmem:[%s2814 + $0x10] sm:$0xf]
  %v2820 = vld [vmem:[%s2814 + $0x14] sm:$0xf]
  %v2821 = vld [vmem:[%s2814 + $0x18] sm:$0xf]
  %v2822 = vld [vmem:[%s2814 + $0x1c] sm:$0xf]
  %v2823 = vld [vmem:[%s2814 + $0x20] sm:$0xf]
  %v2824 = vld [vmem:[%s2814 + $0x24] sm:$0xf]
  %v2825 = vld [vmem:[%s2814 + $0x28] sm:$0xf]
  %v2826 = vld [vmem:[%s2814 + $0x2c] sm:$0xf]
  %v2827 = vld [vmem:[%s2814 + $0x30] sm:$0xf]
  %v2828 = vld [vmem:[%s2814 + $0x34] sm:$0xf]
  %v2829 = vld [vmem:[%s2814 + $0x38] sm:$0xf]
  %v2830 = vld [vmem:[%s2814 + $0x3c] sm:$0xf]
  %v2847 = vunpack.c.l.b16 %v2815
  %v2848 = vunpack.c.l.b16 %v2816
  %v2849 = vunpack.c.l.b16 %v2817
  %v2850 = vunpack.c.l.b16 %v2818
  %v2851 = vunpack.c.l.b16 %v2819
  %v2852 = vunpack.c.l.b16 %v2820
  %v2853 = vunpack.c.l.b16 %v2821
  %v2854 = vunpack.c.l.b16 %v2822
  %v2855 = vunpack.c.l.b16 %v2823
  %v2856 = vunpack.c.l.b16 %v2824
  %v2857 = vunpack.c.l.b16 %v2825
  %v2858 = vunpack.c.l.b16 %v2826
  %v2859 = vunpack.c.l.b16 %v2827
  %v2860 = vunpack.c.l.b16 %v2828
  %v2861 = vunpack.c.l.b16 %v2829
  %v2862 = vunpack.c.l.b16 %v2830
  %v2863 = vpack.c.b16 %v2848, %v2847
  %v2864 = vpack.c.b16 %v2850, %v2849
  %v2865 = vpack.c.b16 %v2852, %v2851
  %v2866 = vpack.c.b16 %v2854, %v2853
  %v2867 = vpack.c.b16 %v2856, %v2855
  %v2868 = vpack.c.b16 %v2858, %v2857
  %v2869 = vpack.c.b16 %v2860, %v2859
  %v2870 = vpack.c.b16 %v2862, %v2861
  %2879 = vmatpush.bf16.msra.mxu0 %v2870
  %2880 = vmatpush.bf16.msra.mxu0 %v2869
  %2881 = vmatpush.bf16.msra.mxu0 %v2868
  %2882 = vmatpush.bf16.msra.mxu0 %v2867
  %2883 = vmatpush.bf16.msra.mxu0 %v2866
  %2884 = vmatpush.bf16.msra.mxu0 %v2865
  %2885 = vmatpush.bf16.msra.mxu0 %v2864
  %2886 = vmatpush.bf16.msra.mxu0 %v2863
  %2887 = vmatmul.bf16.gmra.mxu0 %v1871
  %v2888 = vpop.f32.mrf.mxu0
  %v2889 = vadd.f32 0.0, %v2888
  %v2890 = vpop.f32.mrf.mxu0
  %v2891 = vadd.f32 0.0, %v2890
  %2892 = vmatmul.bf16.gmra.mxu0 %v1872
  %v2893 = vpop.f32.mrf.mxu0
  %v2894 = vadd.f32 0.0, %v2893
  %v2895 = vpop.f32.mrf.mxu0
  %v2896 = vadd.f32 0.0, %v2895
  %2897 = vmatmul.bf16.gmra.mxu0 %v1873
  %v2898 = vpop.f32.mrf.mxu0
  %v2899 = vadd.f32 0.0, %v2898
  %v2900 = vpop.f32.mrf.mxu0
  %v2901 = vadd.f32 0.0, %v2900
  %2902 = vmatmul.bf16.gmra.mxu0 %v2812
  %v2903 = vpop.f32.mrf.mxu0
  %v2904 = vadd.f32 0.0, %v2903
  %v2905 = vpop.f32.mrf.mxu0
  %v2906 = vadd.f32 0.0, %v2905
  %2907 = vmatmul.bf16.gmra.mxu0 %v1875
  %v2908 = vpop.f32.mrf.mxu0
  %v2909 = vadd.f32 0.0, %v2908
  %v2910 = vpop.f32.mrf.mxu0
  %v2911 = vadd.f32 0.0, %v2910
  %2912 = vmatmul.bf16.gmra.mxu0 %v1876
  %v2913 = vpop.f32.mrf.mxu0
  %v2914 = vadd.f32 0.0, %v2913
  %v2915 = vpop.f32.mrf.mxu0
  %v2916 = vadd.f32 0.0, %v2915
  %2917 = vmatmul.bf16.gmra.mxu0 %v1877
  %v2918 = vpop.f32.mrf.mxu0
  %v2919 = vadd.f32 0.0, %v2918
  %v2920 = vpop.f32.mrf.mxu0
  %v2921 = vadd.f32 0.0, %v2920
  %2922 = vmatmul.bf16.gmra.mxu0 %v2813
  %v2923 = vpop.f32.mrf.mxu0
  %v2924 = vadd.f32 0.0, %v2923
  %v2925 = vpop.f32.mrf.mxu0
  %v2926 = vadd.f32 0.0, %v2925
  %2927 = vdwg.mxu0
  %v2928 = vadd.f32 %v2784, %v2889
  %v2929 = vadd.f32 %v2785, %v2891
  %v2930 = vadd.f32 %v2786, %v2894
  %v2931 = vadd.f32 %v2787, %v2896
  %v2932 = vadd.f32 %v2788, %v2899
  %v2933 = vadd.f32 %v2789, %v2901
  %v2934 = vadd.f32 %v2790, %v2904
  %v2935 = vadd.f32 %v2791, %v2906
  %v2936 = vadd.f32 %v2792, %v2909
  %v2937 = vadd.f32 %v2793, %v2911
  %v2938 = vadd.f32 %v2794, %v2914
  %v2939 = vadd.f32 %v2795, %v2916
  %v2940 = vadd.f32 %v2796, %v2919
  %v2941 = vadd.f32 %v2797, %v2921
  %v2942 = vadd.f32 %v2798, %v2924
  %v2943 = vadd.f32 %v2799, %v2926
  %v2944 = vpack.c.bf16 %v1737, %v1734
  %v2945 = vpack.c.bf16 %v1767, %v1764
  %s2946 = scalar_lea.vmem %s1, 1024
  %v2947 = vld [vmem:[%s2946] sm:$0xf]
  %v2948 = vld [vmem:[%s2946 + $0x4] sm:$0xf]
  %v2949 = vld [vmem:[%s2946 + $0x8] sm:$0xf]
  %v2950 = vld [vmem:[%s2946 + $0xc] sm:$0xf]
  %v2951 = vld [vmem:[%s2946 + $0x10] sm:$0xf]
  %v2952 = vld [vmem:[%s2946 + $0x14] sm:$0xf]
  %v2953 = vld [vmem:[%s2946 + $0x18] sm:$0xf]
  %v2954 = vld [vmem:[%s2946 + $0x1c] sm:$0xf]
  %v2955 = vld [vmem:[%s2946 + $0x20] sm:$0xf]
  %v2956 = vld [vmem:[%s2946 + $0x24] sm:$0xf]
  %v2957 = vld [vmem:[%s2946 + $0x28] sm:$0xf]
  %v2958 = vld [vmem:[%s2946 + $0x2c] sm:$0xf]
  %v2959 = vld [vmem:[%s2946 + $0x30] sm:$0xf]
  %v2960 = vld [vmem:[%s2946 + $0x34] sm:$0xf]
  %v2961 = vld [vmem:[%s2946 + $0x38] sm:$0xf]
  %v2962 = vld [vmem:[%s2946 + $0x3c] sm:$0xf]
  %v2979 = vunpack.c.l.b16 %v2947
  %v2980 = vunpack.c.l.b16 %v2948
  %v2981 = vunpack.c.l.b16 %v2949
  %v2982 = vunpack.c.l.b16 %v2950
  %v2983 = vunpack.c.l.b16 %v2951
  %v2984 = vunpack.c.l.b16 %v2952
  %v2985 = vunpack.c.l.b16 %v2953
  %v2986 = vunpack.c.l.b16 %v2954
  %v2987 = vunpack.c.l.b16 %v2955
  %v2988 = vunpack.c.l.b16 %v2956
  %v2989 = vunpack.c.l.b16 %v2957
  %v2990 = vunpack.c.l.b16 %v2958
  %v2991 = vunpack.c.l.b16 %v2959
  %v2992 = vunpack.c.l.b16 %v2960
  %v2993 = vunpack.c.l.b16 %v2961
  %v2994 = vunpack.c.l.b16 %v2962
  %v2995 = vpack.c.b16 %v2980, %v2979
  %v2996 = vpack.c.b16 %v2982, %v2981
  %v2997 = vpack.c.b16 %v2984, %v2983
  %v2998 = vpack.c.b16 %v2986, %v2985
  %v2999 = vpack.c.b16 %v2988, %v2987
  %v3000 = vpack.c.b16 %v2990, %v2989
  %v3001 = vpack.c.b16 %v2992, %v2991
  %v3002 = vpack.c.b16 %v2994, %v2993
  %3011 = vmatpush.bf16.msra.mxu0 %v3002
  %3012 = vmatpush.bf16.msra.mxu0 %v3001
  %3013 = vmatpush.bf16.msra.mxu0 %v3000
  %3014 = vmatpush.bf16.msra.mxu0 %v2999
  %3015 = vmatpush.bf16.msra.mxu0 %v2998
  %3016 = vmatpush.bf16.msra.mxu0 %v2997
  %3017 = vmatpush.bf16.msra.mxu0 %v2996
  %3018 = vmatpush.bf16.msra.mxu0 %v2995
  %3019 = vmatmul.bf16.gmra.mxu0 %v2009
  %v3020 = vpop.f32.mrf.mxu0
  %v3021 = vadd.f32 0.0, %v3020
  %v3022 = vpop.f32.mrf.mxu0
  %v3023 = vadd.f32 0.0, %v3022
  %3024 = vmatmul.bf16.gmra.mxu0 %v2010
  %v3025 = vpop.f32.mrf.mxu0
  %v3026 = vadd.f32 0.0, %v3025
  %v3027 = vpop.f32.mrf.mxu0
  %v3028 = vadd.f32 0.0, %v3027
  %3029 = vmatmul.bf16.gmra.mxu0 %v2011
  %v3030 = vpop.f32.mrf.mxu0
  %v3031 = vadd.f32 0.0, %v3030
  %v3032 = vpop.f32.mrf.mxu0
  %v3033 = vadd.f32 0.0, %v3032
  %3034 = vmatmul.bf16.gmra.mxu0 %v2944
  %v3035 = vpop.f32.mrf.mxu0
  %v3036 = vadd.f32 0.0, %v3035
  %v3037 = vpop.f32.mrf.mxu0
  %v3038 = vadd.f32 0.0, %v3037
  %3039 = vmatmul.bf16.gmra.mxu0 %v2013
  %v3040 = vpop.f32.mrf.mxu0
  %v3041 = vadd.f32 0.0, %v3040
  %v3042 = vpop.f32.mrf.mxu0
  %v3043 = vadd.f32 0.0, %v3042
  %3044 = vmatmul.bf16.gmra.mxu0 %v2014
  %v3045 = vpop.f32.mrf.mxu0
  %v3046 = vadd.f32 0.0, %v3045
  %v3047 = vpop.f32.mrf.mxu0
  %v3048 = vadd.f32 0.0, %v3047
  %3049 = vmatmul.bf16.gmra.mxu0 %v2015
  %v3050 = vpop.f32.mrf.mxu0
  %v3051 = vadd.f32 0.0, %v3050
  %v3052 = vpop.f32.mrf.mxu0
  %v3053 = vadd.f32 0.0, %v3052
  %3054 = vmatmul.bf16.gmra.mxu0 %v2945
  %v3055 = vpop.f32.mrf.mxu0
  %v3056 = vadd.f32 0.0, %v3055
  %v3057 = vpop.f32.mrf.mxu0
  %v3058 = vadd.f32 0.0, %v3057
  %3059 = vdwg.mxu0
  %v3060 = vadd.f32 %v2928, %v3021
  %v3061 = vadd.f32 %v2929, %v3023
  %v3062 = vadd.f32 %v2930, %v3026
  %v3063 = vadd.f32 %v2931, %v3028
  %v3064 = vadd.f32 %v2932, %v3031
  %v3065 = vadd.f32 %v2933, %v3033
  %v3066 = vadd.f32 %v2934, %v3036
  %v3067 = vadd.f32 %v2935, %v3038
  %v3068 = vadd.f32 %v2936, %v3041
  %v3069 = vadd.f32 %v2937, %v3043
  %v3070 = vadd.f32 %v2938, %v3046
  %v3071 = vadd.f32 %v2939, %v3048
  %v3072 = vadd.f32 %v2940, %v3051
  %v3073 = vadd.f32 %v2941, %v3053
  %v3074 = vadd.f32 %v2942, %v3056
  %v3075 = vadd.f32 %v2943, %v3058
  %v3078 = vrot.slane %v1737, 1
  %v3079 = vrot.slane %v1738, 1
  %v3080 = vsel %vm619, %v3078, %v3079
  %v3081 = vrot.slane %v1767, 1
  %v3082 = vrot.slane %v1768, 1
  %v3083 = vsel %vm619, %v3081, %v3082
  %v3086 = vpack.c.bf16 %v3080, %v2656
  %v3087 = vpack.c.bf16 %v3083, %v2659
  %s3088 = scalar_lea.vmem %s1, 1088
  %v3089 = vld [vmem:[%s3088] sm:$0xf]
  %v3090 = vld [vmem:[%s3088 + $0x4] sm:$0xf]
  %v3091 = vld [vmem:[%s3088 + $0x8] sm:$0xf]
  %v3092 = vld [vmem:[%s3088 + $0xc] sm:$0xf]
  %v3093 = vld [vmem:[%s3088 + $0x10] sm:$0xf]
  %v3094 = vld [vmem:[%s3088 + $0x14] sm:$0xf]
  %v3095 = vld [vmem:[%s3088 + $0x18] sm:$0xf]
  %v3096 = vld [vmem:[%s3088 + $0x1c] sm:$0xf]
  %v3097 = vld [vmem:[%s3088 + $0x20] sm:$0xf]
  %v3098 = vld [vmem:[%s3088 + $0x24] sm:$0xf]
  %v3099 = vld [vmem:[%s3088 + $0x28] sm:$0xf]
  %v3100 = vld [vmem:[%s3088 + $0x2c] sm:$0xf]
  %v3101 = vld [vmem:[%s3088 + $0x30] sm:$0xf]
  %v3102 = vld [vmem:[%s3088 + $0x34] sm:$0xf]
  %v3103 = vld [vmem:[%s3088 + $0x38] sm:$0xf]
  %v3104 = vld [vmem:[%s3088 + $0x3c] sm:$0xf]
  %v3121 = vunpack.c.l.b16 %v3089
  %v3122 = vunpack.c.l.b16 %v3090
  %v3123 = vunpack.c.l.b16 %v3091
  %v3124 = vunpack.c.l.b16 %v3092
  %v3125 = vunpack.c.l.b16 %v3093
  %v3126 = vunpack.c.l.b16 %v3094
  %v3127 = vunpack.c.l.b16 %v3095
  %v3128 = vunpack.c.l.b16 %v3096
  %v3129 = vunpack.c.l.b16 %v3097
  %v3130 = vunpack.c.l.b16 %v3098
  %v3131 = vunpack.c.l.b16 %v3099
  %v3132 = vunpack.c.l.b16 %v3100
  %v3133 = vunpack.c.l.b16 %v3101
  %v3134 = vunpack.c.l.b16 %v3102
  %v3135 = vunpack.c.l.b16 %v3103
  %v3136 = vunpack.c.l.b16 %v3104
  %v3137 = vpack.c.b16 %v3122, %v3121
  %v3138 = vpack.c.b16 %v3124, %v3123
  %v3139 = vpack.c.b16 %v3126, %v3125
  %v3140 = vpack.c.b16 %v3128, %v3127
  %v3141 = vpack.c.b16 %v3130, %v3129
  %v3142 = vpack.c.b16 %v3132, %v3131
  %v3143 = vpack.c.b16 %v3134, %v3133
  %v3144 = vpack.c.b16 %v3136, %v3135
  %3153 = vmatpush.bf16.msra.mxu0 %v3144
  %3154 = vmatpush.bf16.msra.mxu0 %v3143
  %3155 = vmatpush.bf16.msra.mxu0 %v3142
  %3156 = vmatpush.bf16.msra.mxu0 %v3141
  %3157 = vmatpush.bf16.msra.mxu0 %v3140
  %3158 = vmatpush.bf16.msra.mxu0 %v3139
  %3159 = vmatpush.bf16.msra.mxu0 %v3138
  %3160 = vmatpush.bf16.msra.mxu0 %v3137
  %3161 = vmatmul.bf16.gmra.mxu0 %v2227
  %v3162 = vpop.f32.mrf.mxu0
  %v3163 = vadd.f32 0.0, %v3162
  %v3164 = vpop.f32.mrf.mxu0
  %v3165 = vadd.f32 0.0, %v3164
  %3166 = vmatmul.bf16.gmra.mxu0 %v2228
  %v3167 = vpop.f32.mrf.mxu0
  %v3168 = vadd.f32 0.0, %v3167
  %v3169 = vpop.f32.mrf.mxu0
  %v3170 = vadd.f32 0.0, %v3169
  %3171 = vmatmul.bf16.gmra.mxu0 %v2229
  %v3172 = vpop.f32.mrf.mxu0
  %v3173 = vadd.f32 0.0, %v3172
  %v3174 = vpop.f32.mrf.mxu0
  %v3175 = vadd.f32 0.0, %v3174
  %3176 = vmatmul.bf16.gmra.mxu0 %v3086
  %v3177 = vpop.f32.mrf.mxu0
  %v3178 = vadd.f32 0.0, %v3177
  %v3179 = vpop.f32.mrf.mxu0
  %v3180 = vadd.f32 0.0, %v3179
  %3181 = vmatmul.bf16.gmra.mxu0 %v2231
  %v3182 = vpop.f32.mrf.mxu0
  %v3183 = vadd.f32 0.0, %v3182
  %v3184 = vpop.f32.mrf.mxu0
  %v3185 = vadd.f32 0.0, %v3184
  %3186 = vmatmul.bf16.gmra.mxu0 %v2232
  %v3187 = vpop.f32.mrf.mxu0
  %v3188 = vadd.f32 0.0, %v3187
  %v3189 = vpop.f32.mrf.mxu0
  %v3190 = vadd.f32 0.0, %v3189
  %3191 = vmatmul.bf16.gmra.mxu0 %v2233
  %v3192 = vpop.f32.mrf.mxu0
  %v3193 = vadd.f32 0.0, %v3192
  %v3194 = vpop.f32.mrf.mxu0
  %v3195 = vadd.f32 0.0, %v3194
  %3196 = vmatmul.bf16.gmra.mxu0 %v3087
  %v3197 = vpop.f32.mrf.mxu0
  %v3198 = vadd.f32 0.0, %v3197
  %v3199 = vpop.f32.mrf.mxu0
  %v3200 = vadd.f32 0.0, %v3199
  %3201 = vdwg.mxu0
  %v3202 = vadd.f32 %v3060, %v3163
  %v3203 = vadd.f32 %v3061, %v3165
  %v3204 = vadd.f32 %v3062, %v3168
  %v3205 = vadd.f32 %v3063, %v3170
  %v3206 = vadd.f32 %v3064, %v3173
  %v3207 = vadd.f32 %v3065, %v3175
  %v3208 = vadd.f32 %v3066, %v3178
  %v3209 = vadd.f32 %v3067, %v3180
  %v3210 = vadd.f32 %v3068, %v3183
  %v3211 = vadd.f32 %v3069, %v3185
  %v3212 = vadd.f32 %v3070, %v3188
  %v3213 = vadd.f32 %v3071, %v3190
  %v3214 = vadd.f32 %v3072, %v3193
  %v3215 = vadd.f32 %v3073, %v3195
  %v3216 = vadd.f32 %v3074, %v3198
  %v3217 = vadd.f32 %v3075, %v3200
  %v3218 = vmax.f32 %v3202, 0.0
  %v3219 = vmax.f32 %v3203, 0.0
  %v3220 = vmax.f32 %v3204, 0.0
  %v3221 = vmax.f32 %v3205, 0.0
  %v3222 = vmax.f32 %v3206, 0.0
  %v3223 = vmax.f32 %v3207, 0.0
  %v3224 = vmax.f32 %v3208, 0.0
  %v3225 = vmax.f32 %v3209, 0.0
  %v3226 = vmax.f32 %v3210, 0.0
  %v3227 = vmax.f32 %v3211, 0.0
  %v3228 = vmax.f32 %v3212, 0.0
  %v3229 = vmax.f32 %v3213, 0.0
  %v3230 = vmax.f32 %v3214, 0.0
  %v3231 = vmax.f32 %v3215, 0.0
  %v3232 = vmax.f32 %v3216, 0.0
  %v3233 = vmax.f32 %v3217, 0.0
  %3234 = vst [vmem:[%s3] sm:$0xff] %v3218
  %3235 = vst [vmem:[%s3 + $0x8] sm:$0xff] %v3219
  %3236 = vst [vmem:[%s3 + $0x10] sm:$0xff] %v3220
  %3237 = vst [vmem:[%s3 + $0x18] sm:$0xff] %v3221
  %3238 = vst [vmem:[%s3 + $0x20] sm:$0xff] %v3222
  %3239 = vst [vmem:[%s3 + $0x28] sm:$0xff] %v3223
  %3240 = vst [vmem:[%s3 + $0x30] sm:$0xff] %v3224
  %3241 = vst [vmem:[%s3 + $0x38] sm:$0xff] %v3225
  %3242 = vst [vmem:[%s3 + $0x40] sm:$0xff] %v3226
  %3243 = vst [vmem:[%s3 + $0x48] sm:$0xff] %v3227
  %3244 = vst [vmem:[%s3 + $0x50] sm:$0xff] %v3228
  %3245 = vst [vmem:[%s3 + $0x58] sm:$0xff] %v3229
  %3246 = vst [vmem:[%s3 + $0x60] sm:$0xff] %v3230
  %3247 = vst [vmem:[%s3 + $0x68] sm:$0xff] %v3231
  %3248 = vst [vmem:[%s3 + $0x70] sm:$0xff] %v3232
  %3249 = vst [vmem:[%s3 + $0x78] sm:$0xff] %v3233
  // Predicated region
  $region14: #{decoder_arch_net_forward.4} parent=0 // pred_check
    _
  $region15: #{decoder_arch_net_forward.4} parent=0 // pred_check_branch
    %3251 = sbr.rel (0) target = $region17
  $region16: #{decoder_arch_net_forward.4} parent=0 // pred_region
    _
  $region17: #{decoder_arch_net_forward.4} parent=0 // pred_fallthru
    _
  // Predicated region
  $region18: #{decoder_arch_net_forward.4} parent=0 // pred_check
    _
  $region19: #{decoder_arch_net_forward.4} parent=0 // pred_check_branch
    %3253 = sbr.rel (0) target = $region21
  $region20: #{decoder_arch_net_forward.4} parent=0 // pred_region
    _
  $region21: #{decoder_arch_net_forward.4} parent=0 // pred_fallthru
    _

</llo_original>
